<compile_context>
chip_gen: v7x
topology: tpu7x:2x2x1
jax: 0.10.0
libtpu: 0.0.40
codegen_flags: <defaults>
</compile_context>

<pallas_src>
import numpy as np

import jax
import jax.numpy as jnp
from jax.experimental import pallas as pl
from jax.experimental.pallas import tpu as pltpu


# ---------------------------------------------------------------------------
# Geometry (hard-wired by the PyTorch module: 28x28 inputs, view(-1, 80)).
# ---------------------------------------------------------------------------
_H0 = 28                     # input H = W
_K = 5                       # conv kernel size
_H1 = _H0 - _K + 1           # 24  conv1 output H/W
_P1 = _H1 // 2               # 12  pool1 output H/W
_H2 = _P1 - _K + 1           # 8   conv2 output H/W
_P2 = _H2 // 2               # 4   pool2 output H/W
_C1, _C2 = 5, 5              # real channel counts
_C1P, _C2P = 8, 8            # channels padded in the lane dimension
_L1 = _H1 * _C1P             # 192 lanes of conv1 matmul output, (j, c)
_L1P = (_H1 - 1) * _C1P      # 184 lanes after stride-1 W-pool
_L2 = _H2 * _C2P             # 64  lanes of conv2 matmul output, (v, c)
_L2P = (_H2 - 1) * _C2P      # 56  lanes after stride-1 W-pool
_FEAT = _P2 * _L2P           # 224 lanes of the fc1 input gather, (h, v, c)
_FC_PAD = 128                # fc1/fc2 outputs padded to a full lane tile


# ---------------------------------------------------------------------------
# Fused kernel: one batch tile per grid step, everything stays in VMEM.
# ---------------------------------------------------------------------------
def _mlp_fused_kernel(x_ref, w1_ref, b1_ref, w2_ref, b2_ref,
                      w3_ref, b3_ref, w4_ref, b4_ref, o_ref, z2_scr):
    tb = x_ref.shape[0]                                   # batch tile

    # ---- conv1: in-kernel im2col along H (5 shifted row windows), W taps
    #      Toeplitz-folded into the packed weight -> ONE MXU matmul.
    #      rows = (n, i), lanes = (j, c_pad).
    x = x_ref[...]                                        # [tb, 28, 28]
    xmat = jnp.concatenate(
        [x[:, kh:kh + _H1, :].reshape(tb * _H1, _H0) for kh in range(_K)],
        axis=-1)                                          # [tb*24, 140]
    y1 = jnp.dot(xmat, w1_ref[...], preferred_element_type=jnp.float32)
    y1 = y1 + b1_ref[...]                                 # [tb*24, 192]

    # ---- maxpool1 (2x2), stride-1 form: max over (j, j+1) lane blocks and
    #      (i, i+1) row pairs; the /2 subsampling is deferred into w2t.
    mw1 = jnp.maximum(y1[:, :_L1P], y1[:, _C1P:])         # [tb*24, 184]
    mw1s = jnp.concatenate([mw1[1:, :], mw1[tb * _H1 - 1:, :]], axis=0)
    z1 = jnp.maximum(mw1, mw1s)                           # [tb*24, 184]

    # ---- conv2: 5 contiguous 16-row windows (one per kh) concatenated along
    #      lanes -> one MXU matmul.  rows = (n, 2u [odd rows are unused]),
    #      lanes = (v, c_pad).
    z1v = z1.reshape(tb, _H1, _L1P)
    x2 = jnp.concatenate(
        [z1v[:, 2 * kh: 2 * kh + 2 * _H2, :].reshape(tb * 2 * _H2, _L1P)
         for kh in range(_K)],
        axis=-1)                                          # [tb*16, 920]
    y2 = jnp.dot(x2, w2_ref[...], preferred_element_type=jnp.float32)
    y2 = y2 + b2_ref[...]                                 # [tb*16, 64]

    # ---- maxpool2 (2x2), stride-1 form (row pairs are 2 apart here).
    mw2 = jnp.maximum(y2[:, :_L2P], y2[:, _C2P:])         # [tb*16, 56]
    mw2s = jnp.concatenate([mw2[2:, :], mw2[tb * 2 * _H2 - 2:, :]], axis=0)
    z2 = jnp.maximum(mw2, mw2s)                           # [tb*16, 56]

    # ---- gather the 4 pooled H-rows of every sample into lanes via strided
    #      VMEM reads -> lane-dense [tb, 224] fc1 input (layout (h, v, c);
    #      only even v / real c are picked up by the packed fc1 weight).
    z2_scr[...] = z2
    feat = jnp.concatenate(
        [z2_scr[pl.ds(4 * h, tb, stride=2 * _H2), :] for h in range(_P2)],
        axis=-1)                                          # [tb, 224]

    # ---- fc1 (+ fused tanh) and fc2, both padded to 128 output lanes.
    h1 = jnp.tanh(jnp.dot(feat, w3_ref[...],
                          preferred_element_type=jnp.float32) + b3_ref[...])
    out = jnp.dot(h1, w4_ref[...],
                  preferred_element_type=jnp.float32) + b4_ref[...]
    o_ref[...] = out.astype(o_ref.dtype)                  # [tb, 128]


# ---------------------------------------------------------------------------
# Wrapper: pad the batch to the tile size, launch the fused kernel, slice.
# ---------------------------------------------------------------------------
def mlp_forward_pallas(x, packed, *, block_batch=8):
    """x: [N, 1, 28, 28] float32 (NCHW, as in PyTorch).  Returns [N, 10]."""
    n = x.shape[0]
    x3 = x.reshape(n, _H0, _H0).astype(jnp.float32)
    n_pad = ((n + block_batch - 1) // block_batch) * block_batch
    if n_pad != n:
        x3 = jnp.pad(x3, ((0, n_pad - n), (0, 0), (0, 0)))

    flops = 2 * n_pad * (_H1 * _H1 * 25 * _C1 + _H2 * _H2 * 125 * _C2
                         + 80 * 40 + 40 * 10)
    bytes_accessed = 4 * (n_pad * _H0 * _H0 + n_pad * _FC_PAD) + 4 * sum(
        int(np.prod(v.shape)) for v in packed.values())

    out = pl.pallas_call(
        _mlp_fused_kernel,
        out_shape=jax.ShapeDtypeStruct((n_pad, _FC_PAD), jnp.float32),
        grid=(n_pad // block_batch,),
        in_specs=[
            pl.BlockSpec((block_batch, _H0, _H0), lambda b: (b, 0, 0)),
            pl.BlockSpec((_K * _H0, _L1), lambda b: (0, 0)),      # w1t
            pl.BlockSpec((1, _L1), lambda b: (0, 0)),             # b1t
            pl.BlockSpec((_K * _L1P, _L2), lambda b: (0, 0)),     # w2t
            pl.BlockSpec((1, _L2), lambda b: (0, 0)),             # b2t
            pl.BlockSpec((_FEAT, _FC_PAD), lambda b: (0, 0)),     # w3t
            pl.BlockSpec((1, _FC_PAD), lambda b: (0, 0)),         # b3t
            pl.BlockSpec((_FC_PAD, _FC_PAD), lambda b: (0, 0)),   # w4t
            pl.BlockSpec((1, _FC_PAD), lambda b: (0, 0)),         # b4t
        ],
        out_specs=pl.BlockSpec((block_batch, _FC_PAD), lambda b: (b, 0)),
        scratch_shapes=[pltpu.VMEM((block_batch * 2 * _H2, _L2P), jnp.float32)],
        compiler_params=pltpu.CompilerParams(
            dimension_semantics=("parallel",),
            vmem_limit_bytes=32 * 1024 * 1024,
        ),
        cost_estimate=pl.CostEstimate(
            flops=flops, transcendentals=40 * n_pad,
            bytes_accessed=bytes_accessed),
    )(x3, packed["w1t"], packed["b1t"], packed["w2t"], packed["b2t"],
      packed["w3t"], packed["b3t"], packed["w4t"], packed["b4t"])
    return out[:n, :10]


@jax.jit
def mlp_forward(x, packed):
    return mlp_forward_pallas(x, packed)


# ---------------------------------------------------------------------------
# Parameters: PyTorch-layout init + repacking into the kernel's matmul layout.
# ---------------------------------------------------------------------------
def init_params(key):
    """PyTorch-layout parameters, U(-1/sqrt(fan_in), 1/sqrt(fan_in)) init."""
    def uniform(k, shape, fan_in):
        bound = 1.0 / float(np.sqrt(fan_in))
        return jax.random.uniform(k, shape, jnp.float32, -bound, bound)

    ks = jax.random.split(key, 8)
    return {
        "conv1_w": uniform(ks[0], (5, 1, 5, 5), 25),   # Conv2d(1, 5, (5, 5))
        "conv1_b": uniform(ks[1], (5,), 25),
        # TODO(synk): debug.Conv2d_dump's debug-dump hooks have no Pallas
        # equivalent; it is implemented as a plain Conv2d(5, 5, (5, 5)).
        "conv2_w": uniform(ks[2], (5, 5, 5, 5), 125),
        "conv2_b": uniform(ks[3], (5,), 125),
        "ip1_w": uniform(ks[4], (40, 80), 80),         # Linear(80, 40), [out, in]
        "ip1_b": uniform(ks[5], (40,), 80),
        "ip2_w": uniform(ks[6], (10, 40), 40),         # Linear(40, 10), [out, in]
        "ip2_b": uniform(ks[7], (10,), 40),
    }


def pack_params(params):
    """Repack PyTorch-layout params into the fused kernel's matmul layout."""
    w1 = np.asarray(params["conv1_w"], np.float32)     # [5, 1, 5, 5]
    b1 = np.asarray(params["conv1_b"], np.float32)
    w2 = np.asarray(params["conv2_w"], np.float32)     # [5, 5, 5, 5]
    b2 = np.asarray(params["conv2_b"], np.float32)
    w3 = np.asarray(params["ip1_w"], np.float32)       # [40, 80]
    b3 = np.asarray(params["ip1_b"], np.float32)
    w4 = np.asarray(params["ip2_w"], np.float32)       # [10, 40]
    b4 = np.asarray(params["ip2_b"], np.float32)

    # conv1 (Toeplitz expansion):  y1[n*24+i, j*8+c] = conv1(x)[n, c, i, j]
    w1t = np.zeros((_K * _H0, _L1), np.float32)        # [140, 192]
    b1t = np.zeros((1, _L1), np.float32)
    for kh in range(_K):
        for kw in range(_K):
            for j in range(_H1):
                w1t[kh * _H0 + j + kw, j * _C1P:j * _C1P + _C1] = w1[:, 0, kh, kw]
    for j in range(_H1):
        b1t[0, j * _C1P:j * _C1P + _C1] = b1

    # conv2 acts on the stride-1 pooled map z1 (lanes = (j, c); only even j
    # and the first 5 channels are real pooled values) -- the zero rows here
    # implement the 2x pool subsampling.
    #   y2[n*16+2u, v*8+c] = conv2(pool1)[n, c, u, v]
    w2t = np.zeros((_K * _L1P, _L2), np.float32)       # [920, 64]
    b2t = np.zeros((1, _L2), np.float32)
    for kh in range(_K):
        for kw in range(_K):
            for v in range(_H2):
                for ci in range(_C1):
                    w2t[kh * _L1P + 2 * (v + kw) * _C1P + ci,
                        v * _C2P:v * _C2P + _C2] = w2[:, ci, kh, kw]
    for v in range(_H2):
        b2t[0, v * _C2P:v * _C2P + _C2] = b2

    # fc1 consumes feat[n, h*56 + v*8 + c] = pool2[n, c, h, v//2] (even v);
    # torch's view(-1, 80) flattens in (c, h, w) order.
    w3t = np.zeros((_FEAT, _FC_PAD), np.float32)       # [224, 128]
    b3t = np.zeros((1, _FC_PAD), np.float32)
    for h in range(_P2):
        for w in range(_P2):
            for c in range(_C2):
                w3t[h * _L2P + 2 * w * _C2P + c, :40] = w3[:, c * 16 + h * 4 + w]
    b3t[0, :40] = b3

    # fc2 (padded to 128x128).
    w4t = np.zeros((_FC_PAD, _FC_PAD), np.float32)
    b4t = np.zeros((1, _FC_PAD), np.float32)
    w4t[:40, :10] = w4.T
    b4t[0, :10] = b4

    packed = dict(w1t=w1t, b1t=b1t, w2t=w2t, b2t=b2t,
                  w3t=w3t, b3t=b3t, w4t=w4t, b4t=b4t)
    return {k: jnp.asarray(v) for k, v in packed.items()}


if __name__ == "__main__":
    key = jax.random.PRNGKey(0)
    k_x, k_p = jax.random.split(key)

    # The chain hard-codes MNIST geometry (view(-1, 80) implies 28x28 inputs).
    batch = 2
    x = jax.random.normal(k_x, (batch, 1, 28, 28), jnp.float32)
    params = init_params(k_p)
    packed = pack_params(params)

    out = mlp_forward(x, packed)
    out = jax.block_until_ready(out)
    assert out.shape == (batch, 10), out.shape
    assert out.dtype == jnp.float32, out.dtype
    print("KERNEL_OK")
</pallas_src>

<mosaic_0001>
module attributes {stable_mosaic.version = 11 : i64} {
  func.func @_mlp_fused_kernel(%arg0: i32, %arg1: memref<8x28x28xf32, #tpu.memory_space<vmem>>, %arg2: memref<140x192xf32, #tpu.memory_space<vmem>>, %arg3: memref<1x192xf32, #tpu.memory_space<vmem>>, %arg4: memref<920x64xf32, #tpu.memory_space<vmem>>, %arg5: memref<1x64xf32, #tpu.memory_space<vmem>>, %arg6: memref<224x128xf32, #tpu.memory_space<vmem>>, %arg7: memref<1x128xf32, #tpu.memory_space<vmem>>, %arg8: memref<128x128xf32, #tpu.memory_space<vmem>>, %arg9: memref<1x128xf32, #tpu.memory_space<vmem>>, %arg10: memref<8x128xf32, #tpu.memory_space<vmem>>, %arg11: memref<128x56xf32, #tpu.memory_space<vmem>>) attributes {dimension_semantics = [#tpu.dimension_semantics<parallel>], iteration_bounds = array<i64: 1>, scalar_prefetch = 0 : i64, scratch_operands = 1 : i64, tpu.core_type = #tpu.core_type<tc>, window_params = [{transform_indices = @transform_0, window_bounds = array<i64: 8, 28, 28>}, {pipeline_mode = #tpu.pipeline_mode<synchronous>, transform_indices = @transform_1, window_bounds = array<i64: 140, 192>}, {pipeline_mode = #tpu.pipeline_mode<synchronous>, transform_indices = @transform_2, window_bounds = array<i64: 1, 192>}, {pipeline_mode = #tpu.pipeline_mode<synchronous>, transform_indices = @transform_3, window_bounds = array<i64: 920, 64>}, {pipeline_mode = #tpu.pipeline_mode<synchronous>, transform_indices = @transform_4, window_bounds = array<i64: 1, 64>}, {pipeline_mode = #tpu.pipeline_mode<synchronous>, transform_indices = @transform_5, window_bounds = array<i64: 224, 128>}, {pipeline_mode = #tpu.pipeline_mode<synchronous>, transform_indices = @transform_6, window_bounds = array<i64: 1, 128>}, {pipeline_mode = #tpu.pipeline_mode<synchronous>, transform_indices = @transform_7, window_bounds = array<i64: 128, 128>}, {pipeline_mode = #tpu.pipeline_mode<synchronous>, transform_indices = @transform_8, window_bounds = array<i64: 1, 128>}, {transform_indices = @transform_9, window_bounds = array<i64: 8, 128>}]} {
    %c0 = arith.constant 0 : index
    %c0_0 = arith.constant 0 : index
    %c0_1 = arith.constant 0 : index
    %0 = vector.load %arg1[%c0, %c0_0, %c0_1] : memref<8x28x28xf32, #tpu.memory_space<vmem>>, vector<8x28x28xf32>
    %1 = vector.extract_strided_slice %0 {offsets = [0, 0, 0], sizes = [8, 24, 28], strides = [1, 1, 1]} : vector<8x28x28xf32> to vector<8x24x28xf32>
    %2 = vector.shape_cast %1 : vector<8x24x28xf32> to vector<192x28xf32>
    %3 = vector.extract_strided_slice %0 {offsets = [0, 1, 0], sizes = [8, 24, 28], strides = [1, 1, 1]} : vector<8x28x28xf32> to vector<8x24x28xf32>
    %4 = vector.shape_cast %3 : vector<8x24x28xf32> to vector<192x28xf32>
    %5 = vector.extract_strided_slice %0 {offsets = [0, 2, 0], sizes = [8, 24, 28], strides = [1, 1, 1]} : vector<8x28x28xf32> to vector<8x24x28xf32>
    %6 = vector.shape_cast %5 : vector<8x24x28xf32> to vector<192x28xf32>
    %7 = vector.extract_strided_slice %0 {offsets = [0, 3, 0], sizes = [8, 24, 28], strides = [1, 1, 1]} : vector<8x28x28xf32> to vector<8x24x28xf32>
    %8 = vector.shape_cast %7 : vector<8x24x28xf32> to vector<192x28xf32>
    %9 = vector.extract_strided_slice %0 {offsets = [0, 4, 0], sizes = [8, 24, 28], strides = [1, 1, 1]} : vector<8x28x28xf32> to vector<8x24x28xf32>
    %10 = vector.shape_cast %9 : vector<8x24x28xf32> to vector<192x28xf32>
    %11 = tpu.concatenate %2, %4, %6, %8, %10 in 1 : vector<192x28xf32>, vector<192x28xf32>, vector<192x28xf32>, vector<192x28xf32>, vector<192x28xf32> -> vector<192x140xf32>
    %c0_2 = arith.constant 0 : index
    %c0_3 = arith.constant 0 : index
    %12 = vector.load %arg2[%c0_2, %c0_3] : memref<140x192xf32, #tpu.memory_space<vmem>>, vector<140x192xf32>
    %cst = arith.constant dense<0.000000e+00> : vector<192x192xf32>
    %13 = tpu.matmul %11, %12, %cst {dimension_numbers = #tpu.dot_dimension_numbers<[1], [0], [0], [1], [0, 0, 1, 1], [], []>} : vector<192x140xf32>, vector<140x192xf32>, vector<192x192xf32> -> vector<192x192xf32>
    %c0_4 = arith.constant 0 : index
    %c0_5 = arith.constant 0 : index
    %14 = vector.load %arg3[%c0_4, %c0_5] : memref<1x192xf32, #tpu.memory_space<vmem>>, vector<1x192xf32>
    %15 = vector.broadcast %14 : vector<1x192xf32> to vector<192x192xf32>
    %16 = arith.addf %13, %15 : vector<192x192xf32>
    %17 = vector.extract_strided_slice %16 {offsets = [0, 0], sizes = [192, 184], strides = [1, 1]} : vector<192x192xf32> to vector<192x184xf32>
    %18 = vector.extract_strided_slice %16 {offsets = [0, 8], sizes = [192, 184], strides = [1, 1]} : vector<192x192xf32> to vector<192x184xf32>
    %19 = arith.maximumf %17, %18 : vector<192x184xf32>
    %20 = vector.extract_strided_slice %19 {offsets = [1, 0], sizes = [191, 184], strides = [1, 1]} : vector<192x184xf32> to vector<191x184xf32>
    %21 = vector.extract_strided_slice %19 {offsets = [191, 0], sizes = [1, 184], strides = [1, 1]} : vector<192x184xf32> to vector<1x184xf32>
    %22 = tpu.concatenate %20, %21 in 0 : vector<191x184xf32>, vector<1x184xf32> -> vector<192x184xf32>
    %23 = arith.maximumf %19, %22 : vector<192x184xf32>
    %24 = vector.shape_cast %23 : vector<192x184xf32> to vector<8x24x184xf32>
    %25 = vector.extract_strided_slice %24 {offsets = [0, 0, 0], sizes = [8, 16, 184], strides = [1, 1, 1]} : vector<8x24x184xf32> to vector<8x16x184xf32>
    %26 = vector.shape_cast %25 : vector<8x16x184xf32> to vector<128x184xf32>
    %27 = vector.extract_strided_slice %24 {offsets = [0, 2, 0], sizes = [8, 16, 184], strides = [1, 1, 1]} : vector<8x24x184xf32> to vector<8x16x184xf32>
    %28 = vector.shape_cast %27 : vector<8x16x184xf32> to vector<128x184xf32>
    %29 = vector.extract_strided_slice %24 {offsets = [0, 4, 0], sizes = [8, 16, 184], strides = [1, 1, 1]} : vector<8x24x184xf32> to vector<8x16x184xf32>
    %30 = vector.shape_cast %29 : vector<8x16x184xf32> to vector<128x184xf32>
    %31 = vector.extract_strided_slice %24 {offsets = [0, 6, 0], sizes = [8, 16, 184], strides = [1, 1, 1]} : vector<8x24x184xf32> to vector<8x16x184xf32>
    %32 = vector.shape_cast %31 : vector<8x16x184xf32> to vector<128x184xf32>
    %33 = vector.extract_strided_slice %24 {offsets = [0, 8, 0], sizes = [8, 16, 184], strides = [1, 1, 1]} : vector<8x24x184xf32> to vector<8x16x184xf32>
    %34 = vector.shape_cast %33 : vector<8x16x184xf32> to vector<128x184xf32>
    %35 = tpu.concatenate %26, %28, %30, %32, %34 in 1 : vector<128x184xf32>, vector<128x184xf32>, vector<128x184xf32>, vector<128x184xf32>, vector<128x184xf32> -> vector<128x920xf32>
    %c0_6 = arith.constant 0 : index
    %c0_7 = arith.constant 0 : index
    %36 = vector.load %arg4[%c0_6, %c0_7] : memref<920x64xf32, #tpu.memory_space<vmem>>, vector<920x64xf32>
    %cst_8 = arith.constant dense<0.000000e+00> : vector<128x64xf32>
    %37 = tpu.matmul %35, %36, %cst_8 {dimension_numbers = #tpu.dot_dimension_numbers<[1], [0], [0], [1], [0, 0, 1, 1], [], []>} : vector<128x920xf32>, vector<920x64xf32>, vector<128x64xf32> -> vector<128x64xf32>
    %c0_9 = arith.constant 0 : index
    %c0_10 = arith.constant 0 : index
    %38 = vector.load %arg5[%c0_9, %c0_10] : memref<1x64xf32, #tpu.memory_space<vmem>>, vector<1x64xf32>
    %39 = vector.broadcast %38 : vector<1x64xf32> to vector<128x64xf32>
    %40 = arith.addf %37, %39 : vector<128x64xf32>
    %41 = vector.extract_strided_slice %40 {offsets = [0, 0], sizes = [128, 56], strides = [1, 1]} : vector<128x64xf32> to vector<128x56xf32>
    %42 = vector.extract_strided_slice %40 {offsets = [0, 8], sizes = [128, 56], strides = [1, 1]} : vector<128x64xf32> to vector<128x56xf32>
    %43 = arith.maximumf %41, %42 : vector<128x56xf32>
    %44 = vector.extract_strided_slice %43 {offsets = [2, 0], sizes = [126, 56], strides = [1, 1]} : vector<128x56xf32> to vector<126x56xf32>
    %45 = vector.extract_strided_slice %43 {offsets = [126, 0], sizes = [2, 56], strides = [1, 1]} : vector<128x56xf32> to vector<2x56xf32>
    %46 = tpu.concatenate %44, %45 in 0 : vector<126x56xf32>, vector<2x56xf32> -> vector<128x56xf32>
    %47 = arith.maximumf %43, %46 : vector<128x56xf32>
    %c0_11 = arith.constant 0 : index
    %c0_12 = arith.constant 0 : index
    %48 = vector.load %arg11[%c0_11, %c0_12] : memref<128x56xf32, #tpu.memory_space<vmem>>, vector<128x56xf32>
    tpu.vector_store %arg11[%c0_11, %c0_12], %47 {strides = array<i32>} : memref<128x56xf32, #tpu.memory_space<vmem>>, vector<128x56xf32>,
    %c0_13 = arith.constant 0 : index
    %c0_14 = arith.constant 0 : index
    %49 = tpu.strided_load %arg11[%c0_13, %c0_14] {strides = array<i32: 16, 1>} : memref<128x56xf32, #tpu.memory_space<vmem>>, vector<8x56xf32>
    %c4 = arith.constant 4 : index
    %c0_15 = arith.constant 0 : index
    %50 = tpu.strided_load %arg11[%c4, %c0_15] {strides = array<i32: 16, 1>} : memref<128x56xf32, #tpu.memory_space<vmem>>, vector<8x56xf32>
    %c8 = arith.constant 8 : index
    %c0_16 = arith.constant 0 : index
    %51 = tpu.strided_load %arg11[%c8, %c0_16] {strides = array<i32: 16, 1>} : memref<128x56xf32, #tpu.memory_space<vmem>>, vector<8x56xf32>
    %c12 = arith.constant 12 : index
    %c0_17 = arith.constant 0 : index
    %52 = tpu.strided_load %arg11[%c12, %c0_17] {strides = array<i32: 16, 1>} : memref<128x56xf32, #tpu.memory_space<vmem>>, vector<8x56xf32>
    %53 = tpu.concatenate %49, %50, %51, %52 in 1 : vector<8x56xf32>, vector<8x56xf32>, vector<8x56xf32>, vector<8x56xf32> -> vector<8x224xf32>
    %c0_18 = arith.constant 0 : index
    %c0_19 = arith.constant 0 : index
    %54 = vector.load %arg6[%c0_18, %c0_19] : memref<224x128xf32, #tpu.memory_space<vmem>>, vector<224x128xf32>
    %cst_20 = arith.constant dense<0.000000e+00> : vector<8x128xf32>
    %55 = tpu.matmul %53, %54, %cst_20 {dimension_numbers = #tpu.dot_dimension_numbers<[1], [0], [0], [1], [0, 0, 1, 1], [], []>} : vector<8x224xf32>, vector<224x128xf32>, vector<8x128xf32> -> vector<8x128xf32>
    %c0_21 = arith.constant 0 : index
    %c0_22 = arith.constant 0 : index
    %56 = vector.load %arg7[%c0_21, %c0_22] : memref<1x128xf32, #tpu.memory_space<vmem>>, vector<1x128xf32>
    %57 = vector.broadcast %56 : vector<1x128xf32> to vector<8x128xf32>
    %58 = arith.addf %55, %57 : vector<8x128xf32>
    %59 = math.tanh %58 : vector<8x128xf32>
    %c0_23 = arith.constant 0 : index
    %c0_24 = arith.constant 0 : index
    %60 = vector.load %arg8[%c0_23, %c0_24] : memref<128x128xf32, #tpu.memory_space<vmem>>, vector<128x128xf32>
    %cst_25 = arith.constant dense<0.000000e+00> : vector<8x128xf32>
    %61 = tpu.matmul %59, %60, %cst_25 {dimension_numbers = #tpu.dot_dimension_numbers<[1], [0], [0], [1], [0, 0, 1, 1], [], []>} : vector<8x128xf32>, vector<128x128xf32>, vector<8x128xf32> -> vector<8x128xf32>
    %c0_26 = arith.constant 0 : index
    %c0_27 = arith.constant 0 : index
    %62 = vector.load %arg9[%c0_26, %c0_27] : memref<1x128xf32, #tpu.memory_space<vmem>>, vector<1x128xf32>
    %63 = vector.broadcast %62 : vector<1x128xf32> to vector<8x128xf32>
    %64 = arith.addf %61, %63 : vector<8x128xf32>
    %c0_28 = arith.constant 0 : index
    %c0_29 = arith.constant 0 : index
    %65 = vector.load %arg10[%c0_28, %c0_29] : memref<8x128xf32, #tpu.memory_space<vmem>>, vector<8x128xf32>
    tpu.vector_store %arg10[%c0_28, %c0_29], %64 {strides = array<i32>} : memref<8x128xf32, #tpu.memory_space<vmem>>, vector<8x128xf32>,
    return
  }
  func.func @transform_0(%arg0: i32) -> (i32, i32, i32) {
    %c0_i32 = arith.constant 0 : i32
    %c0_i32_0 = arith.constant 0 : i32
    %c0_i32_1 = arith.constant 0 : i32
    return %arg0, %c0_i32, %c0_i32_0 : i32, i32, i32
  }
  func.func @transform_1(%arg0: i32) -> (i32, i32) {
    %c0_i32 = arith.constant 0 : i32
    %c0_i32_0 = arith.constant 0 : i32
    %c0_i32_1 = arith.constant 0 : i32
    return %c0_i32, %c0_i32_0 : i32, i32
  }
  func.func @transform_2(%arg0: i32) -> (i32, i32) {
    %c0_i32 = arith.constant 0 : i32
    %c0_i32_0 = arith.constant 0 : i32
    %c0_i32_1 = arith.constant 0 : i32
    return %c0_i32, %c0_i32_0 : i32, i32
  }
  func.func @transform_3(%arg0: i32) -> (i32, i32) {
    %c0_i32 = arith.constant 0 : i32
    %c0_i32_0 = arith.constant 0 : i32
    %c0_i32_1 = arith.constant 0 : i32
    return %c0_i32, %c0_i32_0 : i32, i32
  }
  func.func @transform_4(%arg0: i32) -> (i32, i32) {
    %c0_i32 = arith.constant 0 : i32
    %c0_i32_0 = arith.constant 0 : i32
    %c0_i32_1 = arith.constant 0 : i32
    return %c0_i32, %c0_i32_0 : i32, i32
  }
  func.func @transform_5(%arg0: i32) -> (i32, i32) {
    %c0_i32 = arith.constant 0 : i32
    %c0_i32_0 = arith.constant 0 : i32
    %c0_i32_1 = arith.constant 0 : i32
    return %c0_i32, %c0_i32_0 : i32, i32
  }
  func.func @transform_6(%arg0: i32) -> (i32, i32) {
    %c0_i32 = arith.constant 0 : i32
    %c0_i32_0 = arith.constant 0 : i32
    %c0_i32_1 = arith.constant 0 : i32
    return %c0_i32, %c0_i32_0 : i32, i32
  }
  func.func @transform_7(%arg0: i32) -> (i32, i32) {
    %c0_i32 = arith.constant 0 : i32
    %c0_i32_0 = arith.constant 0 : i32
    %c0_i32_1 = arith.constant 0 : i32
    return %c0_i32, %c0_i32_0 : i32, i32
  }
  func.func @transform_8(%arg0: i32) -> (i32, i32) {
    %c0_i32 = arith.constant 0 : i32
    %c0_i32_0 = arith.constant 0 : i32
    %c0_i32_1 = arith.constant 0 : i32
    return %c0_i32, %c0_i32_0 : i32, i32
  }
  func.func @transform_9(%arg0: i32) -> (i32, i32) {
    %c0_i32 = arith.constant 0 : i32
    %c0_i32_0 = arith.constant 0 : i32
    return %arg0, %c0_i32 : i32, i32
  }
}

</mosaic_0001>

<llo_original>
// kernel: mlp_forward.1
$region0: #{mlp_forward.1}
  #allocation0 [shape = 'u32[]', space=smem, size = 0x4, offset = 0x4, fixed_abs, tag = 'smem constant byte address 0x4 - core index']
  #allocation1 [shape = 'u32[144,128]{1,0:T(1,128)}', space=vmem, size = 0x12000, scoped, tag = 'internal scratch']
  #allocation2 [shape = 'f32[128,56]{1,0:T(8,128)}', space=vmem, size = 0x10000, scoped, tag = 'scratch operand']
  %s0 = inlined_call_operand.vmem [shape: f32[8,28,28], index: 0, kind: input, shape index: {}]
  %s1 = inlined_call_operand.vmem [shape: f32[140,192], index: 1, kind: input, shape index: {}]
  %s2 = inlined_call_operand.vmem [shape: f32[1,192], index: 2, kind: input, shape index: {}]
  %s3 = inlined_call_operand.vmem [shape: f32[920,64], index: 3, kind: input, shape index: {}]
  %s4 = inlined_call_operand.vmem [shape: f32[1,64], index: 4, kind: input, shape index: {}]
  %s5 = inlined_call_operand.vmem [shape: f32[224,128], index: 5, kind: input, shape index: {}]
  %s6 = inlined_call_operand.vmem [shape: f32[1,128], index: 6, kind: input, shape index: {}]
  %s7 = inlined_call_operand.vmem [shape: f32[128,128], index: 7, kind: input, shape index: {}]
  %s8 = inlined_call_operand.vmem [shape: f32[1,128], index: 8, kind: input, shape index: {}]
  %s9 = inlined_call_operand.vmem [shape: f32[8,128], index: 9, kind: output, shape index: {}]
  %s10 = sld [smem:[#allocation0]]
  $region46: #{mlp_forward.1} parent=0
    _
  %s12 = ssub.s32 1, %s10
  %s13 = scalar_select 0, %s12, %s10
  // Predicated region
  $region2: #{mlp_forward.1} parent=0 // pred_check
    _
  $region3: #{mlp_forward.1} parent=0 // pred_check_branch
    %15 = sbr.rel (0) target = $region5
  $region4: #{mlp_forward.1} parent=0 // pred_region
    _
  $region5: #{mlp_forward.1} parent=0 // pred_fallthru
    _
  // Predicated region
  $region6: #{mlp_forward.1} parent=0 // pred_check
    _
  $region7: #{mlp_forward.1} parent=0 // pred_check_branch
    %17 = sbr.rel (0) target = $region9
  $region8: #{mlp_forward.1} parent=0 // pred_region
    _
  $region9: #{mlp_forward.1} parent=0 // pred_fallthru
    _
  // Predicated region
  $region10: #{mlp_forward.1} parent=0 // pred_check
    _
  $region11: #{mlp_forward.1} parent=0 // pred_check_branch
    %19 = sbr.rel (0) target = $region13
  $region12: #{mlp_forward.1} parent=0 // pred_region
    _
  $region13: #{mlp_forward.1} parent=0 // pred_fallthru
    _
  // Predicated region
  $region14: #{mlp_forward.1} parent=0 // pred_check
    _
  $region15: #{mlp_forward.1} parent=0 // pred_check_branch
    %21 = sbr.rel (0) target = $region17
  $region16: #{mlp_forward.1} parent=0 // pred_region
    _
  $region17: #{mlp_forward.1} parent=0 // pred_fallthru
    _
  // Predicated region
  $region18: #{mlp_forward.1} parent=0 // pred_check
    _
  $region19: #{mlp_forward.1} parent=0 // pred_check_branch
    %23 = sbr.rel (0) target = $region21
  $region20: #{mlp_forward.1} parent=0 // pred_region
    _
  $region21: #{mlp_forward.1} parent=0 // pred_fallthru
    _
  // Predicated region
  $region22: #{mlp_forward.1} parent=0 // pred_check
    _
  $region23: #{mlp_forward.1} parent=0 // pred_check_branch
    %25 = sbr.rel (0) target = $region25
  $region24: #{mlp_forward.1} parent=0 // pred_region
    _
  $region25: #{mlp_forward.1} parent=0 // pred_fallthru
    _
  // Predicated region
  $region26: #{mlp_forward.1} parent=0 // pred_check
    _
  $region27: #{mlp_forward.1} parent=0 // pred_check_branch
    %27 = sbr.rel (0) target = $region29
  $region28: #{mlp_forward.1} parent=0 // pred_region
    _
  $region29: #{mlp_forward.1} parent=0 // pred_fallthru
    _
  // Predicated region
  $region30: #{mlp_forward.1} parent=0 // pred_check
    _
  $region31: #{mlp_forward.1} parent=0 // pred_check_branch
    %29 = sbr.rel (0) target = $region33
  $region32: #{mlp_forward.1} parent=0 // pred_region
    _
  $region33: #{mlp_forward.1} parent=0 // pred_fallthru
    _
  // Predicated region
  $region34: #{mlp_forward.1} parent=0 // pred_check
    _
  $region35: #{mlp_forward.1} parent=0 // pred_check_branch
    %31 = sbr.rel (0) target = $region37
  $region36: #{mlp_forward.1} parent=0 // pred_region
    _
  $region37: #{mlp_forward.1} parent=0 // pred_fallthru
    _
  %v32 = vld [vmem:[%s0] sm:$0xff]
  %v33 = vld [vmem:[%s0 + $0x8] sm:$0xff]
  %v34 = vld [vmem:[%s0 + $0x10] sm:$0xff]
  %v35 = vld [vmem:[%s0 + $0x18] sm:$0xf]
  %v36 = vld [vmem:[%s0 + $0x20] sm:$0xff]
  %v37 = vld [vmem:[%s0 + $0x28] sm:$0xff]
  %v38 = vld [vmem:[%s0 + $0x30] sm:$0xff]
  %v39 = vld [vmem:[%s0 + $0x38] sm:$0xf]
  %v40 = vld [vmem:[%s0 + $0x40] sm:$0xff]
  %v41 = vld [vmem:[%s0 + $0x48] sm:$0xff]
  %v42 = vld [vmem:[%s0 + $0x50] sm:$0xff]
  %v43 = vld [vmem:[%s0 + $0x58] sm:$0xf]
  %v44 = vld [vmem:[%s0 + $0x60] sm:$0xff]
  %v45 = vld [vmem:[%s0 + $0x68] sm:$0xff]
  %v46 = vld [vmem:[%s0 + $0x70] sm:$0xff]
  %v47 = vld [vmem:[%s0 + $0x78] sm:$0xf]
  %v48 = vld [vmem:[%s0 + $0x80] sm:$0xff]
  %v49 = vld [vmem:[%s0 + $0x88] sm:$0xff]
  %v50 = vld [vmem:[%s0 + $0x90] sm:$0xff]
  %v51 = vld [vmem:[%s0 + $0x98] sm:$0xf]
  %v52 = vld [vmem:[%s0 + $0xa0] sm:$0xff]
  %v53 = vld [vmem:[%s0 + $0xa8] sm:$0xff]
  %v54 = vld [vmem:[%s0 + $0xb0] sm:$0xff]
  %v55 = vld [vmem:[%s0 + $0xb8] sm:$0xf]
  %v56 = vld [vmem:[%s0 + $0xc0] sm:$0xff]
  %v57 = vld [vmem:[%s0 + $0xc8] sm:$0xff]
  %v58 = vld [vmem:[%s0 + $0xd0] sm:$0xff]
  %v59 = vld [vmem:[%s0 + $0xd8] sm:$0xf]
  %v60 = vld [vmem:[%s0 + $0xe0] sm:$0xff]
  %v61 = vld [vmem:[%s0 + $0xe8] sm:$0xff]
  %v62 = vld [vmem:[%s0 + $0xf0] sm:$0xff]
  %v63 = vld [vmem:[%s0 + $0xf8] sm:$0xf]
  %vm96 = vcmask 1046528
  %v97 = vrot.slane %v32, 1
  %v98 = vrot.slane %v33, 1
  %v99 = vsel %vm96, %v97, %v98
  %v100 = vrot.slane %v34, 1
  %v101 = vsel %vm96, %v98, %v100
  %v102 = vrot.slane %v35, 1
  %v103 = vsel %vm96, %v100, %v102
  %v104 = vrot.slane %v36, 1
  %v105 = vrot.slane %v37, 1
  %v106 = vsel %vm96, %v104, %v105
  %v107 = vrot.slane %v38, 1
  %v108 = vsel %vm96, %v105, %v107
  %v109 = vrot.slane %v39, 1
  %v110 = vsel %vm96, %v107, %v109
  %v111 = vrot.slane %v40, 1
  %v112 = vrot.slane %v41, 1
  %v113 = vsel %vm96, %v111, %v112
  %v114 = vrot.slane %v42, 1
  %v115 = vsel %vm96, %v112, %v114
  %v116 = vrot.slane %v43, 1
  %v117 = vsel %vm96, %v114, %v116
  %v118 = vrot.slane %v44, 1
  %v119 = vrot.slane %v45, 1
  %v120 = vsel %vm96, %v118, %v119
  %v121 = vrot.slane %v46, 1
  %v122 = vsel %vm96, %v119, %v121
  %v123 = vrot.slane %v47, 1
  %v124 = vsel %vm96, %v121, %v123
  %v125 = vrot.slane %v48, 1
  %v126 = vrot.slane %v49, 1
  %v127 = vsel %vm96, %v125, %v126
  %v128 = vrot.slane %v50, 1
  %v129 = vsel %vm96, %v126, %v128
  %v130 = vrot.slane %v51, 1
  %v131 = vsel %vm96, %v128, %v130
  %v132 = vrot.slane %v52, 1
  %v133 = vrot.slane %v53, 1
  %v134 = vsel %vm96, %v132, %v133
  %v135 = vrot.slane %v54, 1
  %v136 = vsel %vm96, %v133, %v135
  %v137 = vrot.slane %v55, 1
  %v138 = vsel %vm96, %v135, %v137
  %v139 = vrot.slane %v56, 1
  %v140 = vrot.slane %v57, 1
  %v141 = vsel %vm96, %v139, %v140
  %v142 = vrot.slane %v58, 1
  %v143 = vsel %vm96, %v140, %v142
  %v144 = vrot.slane %v59, 1
  %v145 = vsel %vm96, %v142, %v144
  %v146 = vrot.slane %v60, 1
  %v147 = vrot.slane %v61, 1
  %v148 = vsel %vm96, %v146, %v147
  %v149 = vrot.slane %v62, 1
  %v150 = vsel %vm96, %v147, %v149
  %v151 = vrot.slane %v63, 1
  %v152 = vsel %vm96, %v149, %v151
  %vm153 = vcmask 1045504
  %v154 = vrot.slane %v32, 2
  %v155 = vrot.slane %v33, 2
  %v156 = vsel %vm153, %v154, %v155
  %v157 = vrot.slane %v34, 2
  %v158 = vsel %vm153, %v155, %v157
  %v159 = vrot.slane %v35, 2
  %v160 = vsel %vm153, %v157, %v159
  %v161 = vrot.slane %v36, 2
  %v162 = vrot.slane %v37, 2
  %v163 = vsel %vm153, %v161, %v162
  %v164 = vrot.slane %v38, 2
  %v165 = vsel %vm153, %v162, %v164
  %v166 = vrot.slane %v39, 2
  %v167 = vsel %vm153, %v164, %v166
  %v168 = vrot.slane %v40, 2
  %v169 = vrot.slane %v41, 2
  %v170 = vsel %vm153, %v168, %v169
  %v171 = vrot.slane %v42, 2
  %v172 = vsel %vm153, %v169, %v171
  %v173 = vrot.slane %v43, 2
  %v174 = vsel %vm153, %v171, %v173
  %v175 = vrot.slane %v44, 2
  %v176 = vrot.slane %v45, 2
  %v177 = vsel %vm153, %v175, %v176
  %v178 = vrot.slane %v46, 2
  %v179 = vsel %vm153, %v176, %v178
  %v180 = vrot.slane %v47, 2
  %v181 = vsel %vm153, %v178, %v180
  %v182 = vrot.slane %v48, 2
  %v183 = vrot.slane %v49, 2
  %v184 = vsel %vm153, %v182, %v183
  %v185 = vrot.slane %v50, 2
  %v186 = vsel %vm153, %v183, %v185
  %v187 = vrot.slane %v51, 2
  %v188 = vsel %vm153, %v185, %v187
  %v189 = vrot.slane %v52, 2
  %v190 = vrot.slane %v53, 2
  %v191 = vsel %vm153, %v189, %v190
  %v192 = vrot.slane %v54, 2
  %v193 = vsel %vm153, %v190, %v192
  %v194 = vrot.slane %v55, 2
  %v195 = vsel %vm153, %v192, %v194
  %v196 = vrot.slane %v56, 2
  %v197 = vrot.slane %v57, 2
  %v198 = vsel %vm153, %v196, %v197
  %v199 = vrot.slane %v58, 2
  %v200 = vsel %vm153, %v197, %v199
  %v201 = vrot.slane %v59, 2
  %v202 = vsel %vm153, %v199, %v201
  %v203 = vrot.slane %v60, 2
  %v204 = vrot.slane %v61, 2
  %v205 = vsel %vm153, %v203, %v204
  %v206 = vrot.slane %v62, 2
  %v207 = vsel %vm153, %v204, %v206
  %v208 = vrot.slane %v63, 2
  %v209 = vsel %vm153, %v206, %v208
  %vm210 = vcmask 1044480
  %v211 = vrot.slane %v32, 3
  %v212 = vrot.slane %v33, 3
  %v213 = vsel %vm210, %v211, %v212
  %v214 = vrot.slane %v34, 3
  %v215 = vsel %vm210, %v212, %v214
  %v216 = vrot.slane %v35, 3
  %v217 = vsel %vm210, %v214, %v216
  %v218 = vrot.slane %v36, 3
  %v219 = vrot.slane %v37, 3
  %v220 = vsel %vm210, %v218, %v219
  %v221 = vrot.slane %v38, 3
  %v222 = vsel %vm210, %v219, %v221
  %v223 = vrot.slane %v39, 3
  %v224 = vsel %vm210, %v221, %v223
  %v225 = vrot.slane %v40, 3
  %v226 = vrot.slane %v41, 3
  %v227 = vsel %vm210, %v225, %v226
  %v228 = vrot.slane %v42, 3
  %v229 = vsel %vm210, %v226, %v228
  %v230 = vrot.slane %v43, 3
  %v231 = vsel %vm210, %v228, %v230
  %v232 = vrot.slane %v44, 3
  %v233 = vrot.slane %v45, 3
  %v234 = vsel %vm210, %v232, %v233
  %v235 = vrot.slane %v46, 3
  %v236 = vsel %vm210, %v233, %v235
  %v237 = vrot.slane %v47, 3
  %v238 = vsel %vm210, %v235, %v237
  %v239 = vrot.slane %v48, 3
  %v240 = vrot.slane %v49, 3
  %v241 = vsel %vm210, %v239, %v240
  %v242 = vrot.slane %v50, 3
  %v243 = vsel %vm210, %v240, %v242
  %v244 = vrot.slane %v51, 3
  %v245 = vsel %vm210, %v242, %v244
  %v246 = vrot.slane %v52, 3
  %v247 = vrot.slane %v53, 3
  %v248 = vsel %vm210, %v246, %v247
  %v249 = vrot.slane %v54, 3
  %v250 = vsel %vm210, %v247, %v249
  %v251 = vrot.slane %v55, 3
  %v252 = vsel %vm210, %v249, %v251
  %v253 = vrot.slane %v56, 3
  %v254 = vrot.slane %v57, 3
  %v255 = vsel %vm210, %v253, %v254
  %v256 = vrot.slane %v58, 3
  %v257 = vsel %vm210, %v254, %v256
  %v258 = vrot.slane %v59, 3
  %v259 = vsel %vm210, %v256, %v258
  %v260 = vrot.slane %v60, 3
  %v261 = vrot.slane %v61, 3
  %v262 = vsel %vm210, %v260, %v261
  %v263 = vrot.slane %v62, 3
  %v264 = vsel %vm210, %v261, %v263
  %v265 = vrot.slane %v63, 3
  %v266 = vsel %vm210, %v263, %v265
  %vm267 = vcmask 1043456
  %v268 = vrot.slane %v32, 4
  %v269 = vrot.slane %v33, 4
  %v270 = vsel %vm267, %v268, %v269
  %v271 = vrot.slane %v34, 4
  %v272 = vsel %vm267, %v269, %v271
  %v273 = vrot.slane %v35, 4
  %v274 = vsel %vm267, %v271, %v273
  %v275 = vrot.slane %v36, 4
  %v276 = vrot.slane %v37, 4
  %v277 = vsel %vm267, %v275, %v276
  %v278 = vrot.slane %v38, 4
  %v279 = vsel %vm267, %v276, %v278
  %v280 = vrot.slane %v39, 4
  %v281 = vsel %vm267, %v278, %v280
  %v282 = vrot.slane %v40, 4
  %v283 = vrot.slane %v41, 4
  %v284 = vsel %vm267, %v282, %v283
  %v285 = vrot.slane %v42, 4
  %v286 = vsel %vm267, %v283, %v285
  %v287 = vrot.slane %v43, 4
  %v288 = vsel %vm267, %v285, %v287
  %v289 = vrot.slane %v44, 4
  %v290 = vrot.slane %v45, 4
  %v291 = vsel %vm267, %v289, %v290
  %v292 = vrot.slane %v46, 4
  %v293 = vsel %vm267, %v290, %v292
  %v294 = vrot.slane %v47, 4
  %v295 = vsel %vm267, %v292, %v294
  %v296 = vrot.slane %v48, 4
  %v297 = vrot.slane %v49, 4
  %v298 = vsel %vm267, %v296, %v297
  %v299 = vrot.slane %v50, 4
  %v300 = vsel %vm267, %v297, %v299
  %v301 = vrot.slane %v51, 4
  %v302 = vsel %vm267, %v299, %v301
  %v303 = vrot.slane %v52, 4
  %v304 = vrot.slane %v53, 4
  %v305 = vsel %vm267, %v303, %v304
  %v306 = vrot.slane %v54, 4
  %v307 = vsel %vm267, %v304, %v306
  %v308 = vrot.slane %v55, 4
  %v309 = vsel %vm267, %v306, %v308
  %v310 = vrot.slane %v56, 4
  %v311 = vrot.slane %v57, 4
  %v312 = vsel %vm267, %v310, %v311
  %v313 = vrot.slane %v58, 4
  %v314 = vsel %vm267, %v311, %v313
  %v315 = vrot.slane %v59, 4
  %v316 = vsel %vm267, %v313, %v315
  %v317 = vrot.slane %v60, 4
  %v318 = vrot.slane %v61, 4
  %v319 = vsel %vm267, %v317, %v318
  %v320 = vrot.slane %v62, 4
  %v321 = vsel %vm267, %v318, %v320
  %v322 = vrot.slane %v63, 4
  %v323 = vsel %vm267, %v320, %v322
  %324 = vrot.lane.b32.xlu0 %v99, 28
  %v325 = vpop.permute.xlu0 %324
  %326 = vrot.lane.b32.xlu0 %v101, 28
  %v327 = vpop.permute.xlu0 %326
  %328 = vrot.lane.b32.xlu0 %v103, 28
  %v329 = vpop.permute.xlu0 %328
  %330 = vrot.lane.b32.xlu0 %v106, 28
  %v331 = vpop.permute.xlu0 %330
  %332 = vrot.lane.b32.xlu0 %v108, 28
  %v333 = vpop.permute.xlu0 %332
  %334 = vrot.lane.b32.xlu0 %v110, 28
  %v335 = vpop.permute.xlu0 %334
  %336 = vrot.lane.b32.xlu0 %v113, 28
  %v337 = vpop.permute.xlu0 %336
  %338 = vrot.lane.b32.xlu0 %v115, 28
  %v339 = vpop.permute.xlu0 %338
  %340 = vrot.lane.b32.xlu0 %v117, 28
  %v341 = vpop.permute.xlu0 %340
  %342 = vrot.lane.b32.xlu0 %v120, 28
  %v343 = vpop.permute.xlu0 %342
  %344 = vrot.lane.b32.xlu0 %v122, 28
  %v345 = vpop.permute.xlu0 %344
  %346 = vrot.lane.b32.xlu0 %v124, 28
  %v347 = vpop.permute.xlu0 %346
  %348 = vrot.lane.b32.xlu0 %v127, 28
  %v349 = vpop.permute.xlu0 %348
  %350 = vrot.lane.b32.xlu0 %v129, 28
  %v351 = vpop.permute.xlu0 %350
  %352 = vrot.lane.b32.xlu0 %v131, 28
  %v353 = vpop.permute.xlu0 %352
  %354 = vrot.lane.b32.xlu0 %v134, 28
  %v355 = vpop.permute.xlu0 %354
  %356 = vrot.lane.b32.xlu0 %v136, 28
  %v357 = vpop.permute.xlu0 %356
  %358 = vrot.lane.b32.xlu0 %v138, 28
  %v359 = vpop.permute.xlu0 %358
  %360 = vrot.lane.b32.xlu0 %v141, 28
  %v361 = vpop.permute.xlu0 %360
  %362 = vrot.lane.b32.xlu0 %v143, 28
  %v363 = vpop.permute.xlu0 %362
  %364 = vrot.lane.b32.xlu0 %v145, 28
  %v365 = vpop.permute.xlu0 %364
  %366 = vrot.lane.b32.xlu0 %v148, 28
  %v367 = vpop.permute.xlu0 %366
  %368 = vrot.lane.b32.xlu0 %v150, 28
  %v369 = vpop.permute.xlu0 %368
  %370 = vrot.lane.b32.xlu0 %v152, 28
  %v371 = vpop.permute.xlu0 %370
  %396 = vrot.lane.b32.xlu0 %v156, 56
  %v397 = vpop.permute.xlu0 %396
  %398 = vrot.lane.b32.xlu0 %v158, 56
  %v399 = vpop.permute.xlu0 %398
  %400 = vrot.lane.b32.xlu0 %v160, 56
  %v401 = vpop.permute.xlu0 %400
  %402 = vrot.lane.b32.xlu0 %v163, 56
  %v403 = vpop.permute.xlu0 %402
  %404 = vrot.lane.b32.xlu0 %v165, 56
  %v405 = vpop.permute.xlu0 %404
  %406 = vrot.lane.b32.xlu0 %v167, 56
  %v407 = vpop.permute.xlu0 %406
  %408 = vrot.lane.b32.xlu0 %v170, 56
  %v409 = vpop.permute.xlu0 %408
  %410 = vrot.lane.b32.xlu0 %v172, 56
  %v411 = vpop.permute.xlu0 %410
  %412 = vrot.lane.b32.xlu0 %v174, 56
  %v413 = vpop.permute.xlu0 %412
  %414 = vrot.lane.b32.xlu0 %v177, 56
  %v415 = vpop.permute.xlu0 %414
  %416 = vrot.lane.b32.xlu0 %v179, 56
  %v417 = vpop.permute.xlu0 %416
  %418 = vrot.lane.b32.xlu0 %v181, 56
  %v419 = vpop.permute.xlu0 %418
  %420 = vrot.lane.b32.xlu0 %v184, 56
  %v421 = vpop.permute.xlu0 %420
  %422 = vrot.lane.b32.xlu0 %v186, 56
  %v423 = vpop.permute.xlu0 %422
  %424 = vrot.lane.b32.xlu0 %v188, 56
  %v425 = vpop.permute.xlu0 %424
  %426 = vrot.lane.b32.xlu0 %v191, 56
  %v427 = vpop.permute.xlu0 %426
  %428 = vrot.lane.b32.xlu0 %v193, 56
  %v429 = vpop.permute.xlu0 %428
  %430 = vrot.lane.b32.xlu0 %v195, 56
  %v431 = vpop.permute.xlu0 %430
  %432 = vrot.lane.b32.xlu0 %v198, 56
  %v433 = vpop.permute.xlu0 %432
  %434 = vrot.lane.b32.xlu0 %v200, 56
  %v435 = vpop.permute.xlu0 %434
  %436 = vrot.lane.b32.xlu0 %v202, 56
  %v437 = vpop.permute.xlu0 %436
  %438 = vrot.lane.b32.xlu0 %v205, 56
  %v439 = vpop.permute.xlu0 %438
  %440 = vrot.lane.b32.xlu0 %v207, 56
  %v441 = vpop.permute.xlu0 %440
  %442 = vrot.lane.b32.xlu0 %v209, 56
  %v443 = vpop.permute.xlu0 %442
  %468 = vrot.lane.b32.xlu0 %v213, 84
  %v469 = vpop.permute.xlu0 %468
  %470 = vrot.lane.b32.xlu0 %v215, 84
  %v471 = vpop.permute.xlu0 %470
  %472 = vrot.lane.b32.xlu0 %v217, 84
  %v473 = vpop.permute.xlu0 %472
  %474 = vrot.lane.b32.xlu0 %v220, 84
  %v475 = vpop.permute.xlu0 %474
  %476 = vrot.lane.b32.xlu0 %v222, 84
  %v477 = vpop.permute.xlu0 %476
  %478 = vrot.lane.b32.xlu0 %v224, 84
  %v479 = vpop.permute.xlu0 %478
  %480 = vrot.lane.b32.xlu0 %v227, 84
  %v481 = vpop.permute.xlu0 %480
  %482 = vrot.lane.b32.xlu0 %v229, 84
  %v483 = vpop.permute.xlu0 %482
  %484 = vrot.lane.b32.xlu0 %v231, 84
  %v485 = vpop.permute.xlu0 %484
  %486 = vrot.lane.b32.xlu0 %v234, 84
  %v487 = vpop.permute.xlu0 %486
  %488 = vrot.lane.b32.xlu0 %v236, 84
  %v489 = vpop.permute.xlu0 %488
  %490 = vrot.lane.b32.xlu0 %v238, 84
  %v491 = vpop.permute.xlu0 %490
  %492 = vrot.lane.b32.xlu0 %v241, 84
  %v493 = vpop.permute.xlu0 %492
  %494 = vrot.lane.b32.xlu0 %v243, 84
  %v495 = vpop.permute.xlu0 %494
  %496 = vrot.lane.b32.xlu0 %v245, 84
  %v497 = vpop.permute.xlu0 %496
  %498 = vrot.lane.b32.xlu0 %v248, 84
  %v499 = vpop.permute.xlu0 %498
  %500 = vrot.lane.b32.xlu0 %v250, 84
  %v501 = vpop.permute.xlu0 %500
  %502 = vrot.lane.b32.xlu0 %v252, 84
  %v503 = vpop.permute.xlu0 %502
  %504 = vrot.lane.b32.xlu0 %v255, 84
  %v505 = vpop.permute.xlu0 %504
  %506 = vrot.lane.b32.xlu0 %v257, 84
  %v507 = vpop.permute.xlu0 %506
  %508 = vrot.lane.b32.xlu0 %v259, 84
  %v509 = vpop.permute.xlu0 %508
  %510 = vrot.lane.b32.xlu0 %v262, 84
  %v511 = vpop.permute.xlu0 %510
  %512 = vrot.lane.b32.xlu0 %v264, 84
  %v513 = vpop.permute.xlu0 %512
  %514 = vrot.lane.b32.xlu0 %v266, 84
  %v515 = vpop.permute.xlu0 %514
  %540 = vrot.lane.b32.xlu0 %v270, 112
  %v541 = vpop.permute.xlu0 %540
  %542 = vrot.lane.b32.xlu0 %v272, 112
  %v543 = vpop.permute.xlu0 %542
  %544 = vrot.lane.b32.xlu0 %v274, 112
  %v545 = vpop.permute.xlu0 %544
  %546 = vrot.lane.b32.xlu0 %v277, 112
  %v547 = vpop.permute.xlu0 %546
  %548 = vrot.lane.b32.xlu0 %v279, 112
  %v549 = vpop.permute.xlu0 %548
  %550 = vrot.lane.b32.xlu0 %v281, 112
  %v551 = vpop.permute.xlu0 %550
  %552 = vrot.lane.b32.xlu0 %v284, 112
  %v553 = vpop.permute.xlu0 %552
  %554 = vrot.lane.b32.xlu0 %v286, 112
  %v555 = vpop.permute.xlu0 %554
  %556 = vrot.lane.b32.xlu0 %v288, 112
  %v557 = vpop.permute.xlu0 %556
  %558 = vrot.lane.b32.xlu0 %v291, 112
  %v559 = vpop.permute.xlu0 %558
  %560 = vrot.lane.b32.xlu0 %v293, 112
  %v561 = vpop.permute.xlu0 %560
  %562 = vrot.lane.b32.xlu0 %v295, 112
  %v563 = vpop.permute.xlu0 %562
  %564 = vrot.lane.b32.xlu0 %v298, 112
  %v565 = vpop.permute.xlu0 %564
  %566 = vrot.lane.b32.xlu0 %v300, 112
  %v567 = vpop.permute.xlu0 %566
  %568 = vrot.lane.b32.xlu0 %v302, 112
  %v569 = vpop.permute.xlu0 %568
  %570 = vrot.lane.b32.xlu0 %v305, 112
  %v571 = vpop.permute.xlu0 %570
  %572 = vrot.lane.b32.xlu0 %v307, 112
  %v573 = vpop.permute.xlu0 %572
  %574 = vrot.lane.b32.xlu0 %v309, 112
  %v575 = vpop.permute.xlu0 %574
  %576 = vrot.lane.b32.xlu0 %v312, 112
  %v577 = vpop.permute.xlu0 %576
  %578 = vrot.lane.b32.xlu0 %v314, 112
  %v579 = vpop.permute.xlu0 %578
  %580 = vrot.lane.b32.xlu0 %v316, 112
  %v581 = vpop.permute.xlu0 %580
  %582 = vrot.lane.b32.xlu0 %v319, 112
  %v583 = vpop.permute.xlu0 %582
  %584 = vrot.lane.b32.xlu0 %v321, 112
  %v585 = vpop.permute.xlu0 %584
  %586 = vrot.lane.b32.xlu0 %v323, 112
  %v587 = vpop.permute.xlu0 %586
  %vm612 = vcmask 228352
  %v613 = vsel %vm612, %v32, %v325
  %v614 = vsel %vm612, %v33, %v327
  %v615 = vsel %vm612, %v34, %v329
  %v616 = vsel %vm612, %v36, %v331
  %v617 = vsel %vm612, %v37, %v333
  %v618 = vsel %vm612, %v38, %v335
  %v619 = vsel %vm612, %v40, %v337
  %v620 = vsel %vm612, %v41, %v339
  %v621 = vsel %vm612, %v42, %v341
  %v622 = vsel %vm612, %v44, %v343
  %v623 = vsel %vm612, %v45, %v345
  %v624 = vsel %vm612, %v46, %v347
  %v625 = vsel %vm612, %v48, %v349
  %v626 = vsel %vm612, %v49, %v351
  %v627 = vsel %vm612, %v50, %v353
  %v628 = vsel %vm612, %v52, %v355
  %v629 = vsel %vm612, %v53, %v357
  %v630 = vsel %vm612, %v54, %v359
  %v631 = vsel %vm612, %v56, %v361
  %v632 = vsel %vm612, %v57, %v363
  %v633 = vsel %vm612, %v58, %v365
  %v634 = vsel %vm612, %v60, %v367
  %v635 = vsel %vm612, %v61, %v369
  %v636 = vsel %vm612, %v62, %v371
  %vm637 = vcmask 457728
  %v638 = vsel %vm637, %v613, %v397
  %v639 = vsel %vm637, %v614, %v399
  %v640 = vsel %vm637, %v615, %v401
  %v641 = vsel %vm637, %v616, %v403
  %v642 = vsel %vm637, %v617, %v405
  %v643 = vsel %vm637, %v618, %v407
  %v644 = vsel %vm637, %v619, %v409
  %v645 = vsel %vm637, %v620, %v411
  %v646 = vsel %vm637, %v621, %v413
  %v647 = vsel %vm637, %v622, %v415
  %v648 = vsel %vm637, %v623, %v417
  %v649 = vsel %vm637, %v624, %v419
  %v650 = vsel %vm637, %v625, %v421
  %v651 = vsel %vm637, %v626, %v423
  %v652 = vsel %vm637, %v627, %v425
  %v653 = vsel %vm637, %v628, %v427
  %v654 = vsel %vm637, %v629, %v429
  %v655 = vsel %vm637, %v630, %v431
  %v656 = vsel %vm637, %v631, %v433
  %v657 = vsel %vm637, %v632, %v435
  %v658 = vsel %vm637, %v633, %v437
  %v659 = vsel %vm637, %v634, %v439
  %v660 = vsel %vm637, %v635, %v441
  %v661 = vsel %vm637, %v636, %v443
  %vm662 = vcmask 687104
  %v663 = vsel %vm662, %v638, %v469
  %v664 = vsel %vm662, %v639, %v471
  %v665 = vsel %vm662, %v640, %v473
  %v666 = vsel %vm662, %v641, %v475
  %v667 = vsel %vm662, %v642, %v477
  %v668 = vsel %vm662, %v643, %v479
  %v669 = vsel %vm662, %v644, %v481
  %v670 = vsel %vm662, %v645, %v483
  %v671 = vsel %vm662, %v646, %v485
  %v672 = vsel %vm662, %v647, %v487
  %v673 = vsel %vm662, %v648, %v489
  %v674 = vsel %vm662, %v649, %v491
  %v675 = vsel %vm662, %v650, %v493
  %v676 = vsel %vm662, %v651, %v495
  %v677 = vsel %vm662, %v652, %v497
  %v678 = vsel %vm662, %v653, %v499
  %v679 = vsel %vm662, %v654, %v501
  %v680 = vsel %vm662, %v655, %v503
  %v681 = vsel %vm662, %v656, %v505
  %v682 = vsel %vm662, %v657, %v507
  %v683 = vsel %vm662, %v658, %v509
  %v684 = vsel %vm662, %v659, %v511
  %v685 = vsel %vm662, %v660, %v513
  %v686 = vsel %vm662, %v661, %v515
  %vm687 = vcmask 916480
  %v688 = vsel %vm687, %v663, %v541
  %v689 = vsel %vm687, %v664, %v543
  %v690 = vsel %vm687, %v665, %v545
  %v691 = vsel %vm687, %v666, %v547
  %v692 = vsel %vm687, %v667, %v549
  %v693 = vsel %vm687, %v668, %v551
  %v694 = vsel %vm687, %v669, %v553
  %v695 = vsel %vm687, %v670, %v555
  %v696 = vsel %vm687, %v671, %v557
  %v697 = vsel %vm687, %v672, %v559
  %v698 = vsel %vm687, %v673, %v561
  %v699 = vsel %vm687, %v674, %v563
  %v700 = vsel %vm687, %v675, %v565
  %v701 = vsel %vm687, %v676, %v567
  %v702 = vsel %vm687, %v677, %v569
  %v703 = vsel %vm687, %v678, %v571
  %v704 = vsel %vm687, %v679, %v573
  %v705 = vsel %vm687, %v680, %v575
  %v706 = vsel %vm687, %v681, %v577
  %v707 = vsel %vm687, %v682, %v579
  %v708 = vsel %vm687, %v683, %v581
  %v709 = vsel %vm687, %v684, %v583
  %v710 = vsel %vm687, %v685, %v585
  %v711 = vsel %vm687, %v686, %v587
  %v712 = vld [vmem:[%s1] sm:$0xff]
  %v713 = vld [vmem:[%s1 + $0x8] sm:$0xff]
  %v714 = vld [vmem:[%s1 + $0x10] sm:$0xff]
  %v715 = vld [vmem:[%s1 + $0x18] sm:$0xff]
  %v716 = vld [vmem:[%s1 + $0x20] sm:$0xff]
  %v717 = vld [vmem:[%s1 + $0x28] sm:$0xff]
  %v718 = vld [vmem:[%s1 + $0x30] sm:$0xff]
  %v719 = vld [vmem:[%s1 + $0x38] sm:$0xff]
  %v720 = vld [vmem:[%s1 + $0x40] sm:$0xff]
  %v721 = vld [vmem:[%s1 + $0x48] sm:$0xff]
  %v722 = vld [vmem:[%s1 + $0x50] sm:$0xff]
  %v723 = vld [vmem:[%s1 + $0x58] sm:$0xff]
  %v724 = vld [vmem:[%s1 + $0x60] sm:$0xff]
  %v725 = vld [vmem:[%s1 + $0x68] sm:$0xff]
  %v726 = vld [vmem:[%s1 + $0x70] sm:$0xff]
  %v727 = vld [vmem:[%s1 + $0x78] sm:$0xff]
  %v728 = vld [vmem:[%s1 + $0x80] sm:$0xff]
  %v729 = vld [vmem:[%s1 + $0x88] sm:$0xff]
  %v730 = vld [vmem:[%s1 + $0x90] sm:$0xff]
  %v731 = vld [vmem:[%s1 + $0x98] sm:$0xff]
  %v732 = vld [vmem:[%s1 + $0xa0] sm:$0xff]
  %v733 = vld [vmem:[%s1 + $0xa8] sm:$0xff]
  %v734 = vld [vmem:[%s1 + $0xb0] sm:$0xff]
  %v735 = vld [vmem:[%s1 + $0xb8] sm:$0xff]
  %v736 = vld [vmem:[%s1 + $0xc0] sm:$0xff]
  %v737 = vld [vmem:[%s1 + $0xc8] sm:$0xff]
  %v738 = vld [vmem:[%s1 + $0xd0] sm:$0xff]
  %v739 = vld [vmem:[%s1 + $0xd8] sm:$0xff]
  %v740 = vld [vmem:[%s1 + $0xe0] sm:$0xff]
  %v741 = vld [vmem:[%s1 + $0xe8] sm:$0xff]
  %v742 = vld [vmem:[%s1 + $0xf0] sm:$0xff]
  %v743 = vld [vmem:[%s1 + $0xf8] sm:$0xff]
  %v744 = vld [vmem:[%s1 + $0x100] sm:$0xff]
  %v745 = vld [vmem:[%s1 + $0x108] sm:$0xff]
  %v746 = vld [vmem:[%s1 + $0x110] sm:$0xf]
  %v747 = vld [vmem:[%s1 + $0x118] sm:$0xf]
  %v748 = vld [vmem:[%s2] sm:$0x3]
  %v750 = vlaneseq
  %v751 = vshrl.u32 %v750, 7
  %v752 = vsub.s32 0, %v751
  %v753 = vrot.slane %v748, %v752
  %v754 = vlaneseq
  %v755 = vshrl.u32 %v754, 7
  %v756 = vsub.s32 1, %v755
  %v757 = vrot.slane %v748, %v756
  %vm760 = vcmask 97280
  %v761 = vsel %vm760, %v541, 0
  %v763 = vsel %vm760, %v543, 0
  %v765 = vsel %vm760, %v545, 0
  %v767 = vsel %vm760, %v547, 0
  %v769 = vsel %vm760, %v549, 0
  %v771 = vsel %vm760, %v551, 0
  %v773 = vsel %vm760, %v553, 0
  %v775 = vsel %vm760, %v555, 0
  %v777 = vsel %vm760, %v557, 0
  %v779 = vsel %vm760, %v559, 0
  %v781 = vsel %vm760, %v561, 0
  %v783 = vsel %vm760, %v563, 0
  %v785 = vsel %vm760, %v565, 0
  %v787 = vsel %vm760, %v567, 0
  %v789 = vsel %vm760, %v569, 0
  %v791 = vsel %vm760, %v571, 0
  %v793 = vsel %vm760, %v573, 0
  %v795 = vsel %vm760, %v575, 0
  %v797 = vsel %vm760, %v577, 0
  %v799 = vsel %vm760, %v579, 0
  %v801 = vsel %vm760, %v581, 0
  %v803 = vsel %vm760, %v583, 0
  %v805 = vsel %vm760, %v585, 0
  %v807 = vsel %vm760, %v587, 0
  %v810 = vsel %vm267, %v746, 0
  %v813 = vsel %vm267, %v747, 0
  %815 = vmatprep.subr.mxu0 %v713
  %816 = vmatpush1.msra.mxu0 %v712
  %817 = vmatprep.subr.mxu0 %v715
  %818 = vmatpush1.msra.mxu0 %v714
  %819 = vmatprep.subr.mxu0 %v717
  %820 = vmatpush1.msra.mxu0 %v716
  %821 = vmatprep.subr.mxu0 %v719
  %822 = vmatpush1.msra.mxu0 %v718
  %823 = vmatprep.subr.mxu0 %v721
  %824 = vmatpush1.msra.mxu0 %v720
  %825 = vmatprep.subr.mxu0 %v723
  %826 = vmatpush1.msra.mxu0 %v722
  %827 = vmatprep.subr.mxu0 %v725
  %828 = vmatpush1.msra.mxu0 %v724
  %829 = vmatprep.subr.mxu0 %v727
  %830 = vmatpush1.msra.mxu0 %v726
  %831 = vmatprep.subr.mxu0 %v729
  %832 = vmatpush1.msra.mxu0 %v728
  %833 = vmatprep.subr.mxu0 %v731
  %834 = vmatpush1.msra.mxu0 %v730
  %835 = vmatprep.subr.mxu0 %v733
  %836 = vmatpush1.msra.mxu0 %v732
  %837 = vmatprep.subr.mxu0 %v735
  %838 = vmatpush1.msra.mxu0 %v734
  %839 = vmatprep.subr.mxu0 %v737
  %840 = vmatpush1.msra.mxu0 %v736
  %841 = vmatprep.subr.mxu0 %v739
  %842 = vmatpush1.msra.mxu0 %v738
  %843 = vmatprep.subr.mxu0 %v741
  %844 = vmatpush1.msra.mxu0 %v740
  %845 = vmatprep.subr.mxu0 %v743
  %846 = vmatpush1.msra.mxu0 %v742
  %847 = vmatprep.subr.mxu0 %v745
  %848 = vmatpush1.msra.mxu0 %v744
  %849 = vmatprep.subr.mxu0 %v813
  %850 = vmatpush1.msra.mxu0 %v810
  %851 = vmatprep.subr.mxu0 0.0
  %852 = vmatpush1.msra.mxu0 0.0
  %853 = vmatprep.subr.mxu0 0.0
  %854 = vmatpush1.msra.mxu0 0.0
  %855 = vmatprep.subr.mxu0 0.0
  %856 = vmatpush1.msra.mxu0 0.0
  %857 = vmatprep.subr.mxu0 0.0
  %858 = vmatpush1.msra.mxu0 0.0
  %859 = vmatprep.subr.mxu0 0.0
  %860 = vmatpush1.msra.mxu0 0.0
  %861 = vmatprep.subr.mxu0 0.0
  %862 = vmatpush1.msra.mxu0 0.0
  %863 = vmatprep.subr.mxu0 0.0
  %864 = vmatpush1.msra.mxu0 0.0
  %865 = vmatprep.subr.mxu0 0.0
  %866 = vmatpush1.msra.mxu0 0.0
  %867 = vmatprep.subr.mxu0 0.0
  %868 = vmatpush1.msra.mxu0 0.0
  %869 = vmatprep.subr.mxu0 0.0
  %870 = vmatpush1.msra.mxu0 0.0
  %871 = vmatprep.subr.mxu0 0.0
  %872 = vmatpush1.msra.mxu0 0.0
  %873 = vmatprep.subr.mxu0 0.0
  %874 = vmatpush1.msra.mxu0 0.0
  %875 = vmatprep.subr.mxu0 0.0
  %876 = vmatpush1.msra.mxu0 0.0
  %877 = vmatprep.subr.mxu0 0.0
  %878 = vmatpush1.msra.mxu0 0.0
  %879 = vmatprep.mubr.f32.mxu0 %v761
  %880 = vmatmul.mubr.f32.gmra.mrb[0].mxu0 %v688
  %v881 = vpop.f32.mrb[0].mxu0
  %v882 = vadd.f32 %v753, %v881
  %v883 = vpop.f32.mrb[0].mxu0
  %v884 = vadd.f32 %v757, %v883
  %885 = vmatprep.mubr.f32.mxu0 %v763
  %886 = vmatmul.mubr.f32.gmra.mrb[0].mxu0 %v689
  %v887 = vpop.f32.mrb[0].mxu0
  %v888 = vadd.f32 %v753, %v887
  %v889 = vpop.f32.mrb[0].mxu0
  %v890 = vadd.f32 %v757, %v889
  %891 = vmatprep.mubr.f32.mxu0 %v765
  %892 = vmatmul.mubr.f32.gmra.mrb[0].mxu0 %v690
  %v893 = vpop.f32.mrb[0].mxu0
  %v894 = vadd.f32 %v753, %v893
  %v895 = vpop.f32.mrb[0].mxu0
  %v896 = vadd.f32 %v757, %v895
  %897 = vmatprep.mubr.f32.mxu0 %v767
  %898 = vmatmul.mubr.f32.gmra.mrb[0].mxu0 %v691
  %v899 = vpop.f32.mrb[0].mxu0
  %v900 = vadd.f32 %v753, %v899
  %v901 = vpop.f32.mrb[0].mxu0
  %v902 = vadd.f32 %v757, %v901
  %903 = vmatprep.mubr.f32.mxu0 %v769
  %904 = vmatmul.mubr.f32.gmra.mrb[0].mxu0 %v692
  %v905 = vpop.f32.mrb[0].mxu0
  %v906 = vadd.f32 %v753, %v905
  %v907 = vpop.f32.mrb[0].mxu0
  %v908 = vadd.f32 %v757, %v907
  %909 = vmatprep.mubr.f32.mxu0 %v771
  %910 = vmatmul.mubr.f32.gmra.mrb[0].mxu0 %v693
  %v911 = vpop.f32.mrb[0].mxu0
  %v912 = vadd.f32 %v753, %v911
  %v913 = vpop.f32.mrb[0].mxu0
  %v914 = vadd.f32 %v757, %v913
  %915 = vmatprep.mubr.f32.mxu0 %v773
  %916 = vmatmul.mubr.f32.gmra.mrb[0].mxu0 %v694
  %v917 = vpop.f32.mrb[0].mxu0
  %v918 = vadd.f32 %v753, %v917
  %v919 = vpop.f32.mrb[0].mxu0
  %v920 = vadd.f32 %v757, %v919
  %921 = vmatprep.mubr.f32.mxu0 %v775
  %922 = vmatmul.mubr.f32.gmra.mrb[0].mxu0 %v695
  %v923 = vpop.f32.mrb[0].mxu0
  %v924 = vadd.f32 %v753, %v923
  %v925 = vpop.f32.mrb[0].mxu0
  %v926 = vadd.f32 %v757, %v925
  %927 = vmatprep.mubr.f32.mxu0 %v777
  %928 = vmatmul.mubr.f32.gmra.mrb[0].mxu0 %v696
  %v929 = vpop.f32.mrb[0].mxu0
  %v930 = vadd.f32 %v753, %v929
  %v931 = vpop.f32.mrb[0].mxu0
  %v932 = vadd.f32 %v757, %v931
  %933 = vmatprep.mubr.f32.mxu0 %v779
  %934 = vmatmul.mubr.f32.gmra.mrb[0].mxu0 %v697
  %v935 = vpop.f32.mrb[0].mxu0
  %v936 = vadd.f32 %v753, %v935
  %v937 = vpop.f32.mrb[0].mxu0
  %v938 = vadd.f32 %v757, %v937
  %939 = vmatprep.mubr.f32.mxu0 %v781
  %940 = vmatmul.mubr.f32.gmra.mrb[0].mxu0 %v698
  %v941 = vpop.f32.mrb[0].mxu0
  %v942 = vadd.f32 %v753, %v941
  %v943 = vpop.f32.mrb[0].mxu0
  %v944 = vadd.f32 %v757, %v943
  %945 = vmatprep.mubr.f32.mxu0 %v783
  %946 = vmatmul.mubr.f32.gmra.mrb[0].mxu0 %v699
  %v947 = vpop.f32.mrb[0].mxu0
  %v948 = vadd.f32 %v753, %v947
  %v949 = vpop.f32.mrb[0].mxu0
  %v950 = vadd.f32 %v757, %v949
  %951 = vmatprep.mubr.f32.mxu0 %v785
  %952 = vmatmul.mubr.f32.gmra.mrb[0].mxu0 %v700
  %v953 = vpop.f32.mrb[0].mxu0
  %v954 = vadd.f32 %v753, %v953
  %v955 = vpop.f32.mrb[0].mxu0
  %v956 = vadd.f32 %v757, %v955
  %957 = vmatprep.mubr.f32.mxu0 %v787
  %958 = vmatmul.mubr.f32.gmra.mrb[0].mxu0 %v701
  %v959 = vpop.f32.mrb[0].mxu0
  %v960 = vadd.f32 %v753, %v959
  %v961 = vpop.f32.mrb[0].mxu0
  %v962 = vadd.f32 %v757, %v961
  %963 = vmatprep.mubr.f32.mxu0 %v789
  %964 = vmatmul.mubr.f32.gmra.mrb[0].mxu0 %v702
  %v965 = vpop.f32.mrb[0].mxu0
  %v966 = vadd.f32 %v753, %v965
  %v967 = vpop.f32.mrb[0].mxu0
  %v968 = vadd.f32 %v757, %v967
  %969 = vmatprep.mubr.f32.mxu0 %v791
  %970 = vmatmul.mubr.f32.gmra.mrb[0].mxu0 %v703
  %v971 = vpop.f32.mrb[0].mxu0
  %v972 = vadd.f32 %v753, %v971
  %v973 = vpop.f32.mrb[0].mxu0
  %v974 = vadd.f32 %v757, %v973
  %975 = vmatprep.mubr.f32.mxu0 %v793
  %976 = vmatmul.mubr.f32.gmra.mrb[0].mxu0 %v704
  %v977 = vpop.f32.mrb[0].mxu0
  %v978 = vadd.f32 %v753, %v977
  %v979 = vpop.f32.mrb[0].mxu0
  %v980 = vadd.f32 %v757, %v979
  %981 = vmatprep.mubr.f32.mxu0 %v795
  %982 = vmatmul.mubr.f32.gmra.mrb[0].mxu0 %v705
  %v983 = vpop.f32.mrb[0].mxu0
  %v984 = vadd.f32 %v753, %v983
  %v985 = vpop.f32.mrb[0].mxu0
  %v986 = vadd.f32 %v757, %v985
  %987 = vmatprep.mubr.f32.mxu0 %v797
  %988 = vmatmul.mubr.f32.gmra.mrb[0].mxu0 %v706
  %v989 = vpop.f32.mrb[0].mxu0
  %v990 = vadd.f32 %v753, %v989
  %v991 = vpop.f32.mrb[0].mxu0
  %v992 = vadd.f32 %v757, %v991
  %993 = vmatprep.mubr.f32.mxu0 %v799
  %994 = vmatmul.mubr.f32.gmra.mrb[0].mxu0 %v707
  %v995 = vpop.f32.mrb[0].mxu0
  %v996 = vadd.f32 %v753, %v995
  %v997 = vpop.f32.mrb[0].mxu0
  %v998 = vadd.f32 %v757, %v997
  %999 = vmatprep.mubr.f32.mxu0 %v801
  %1000 = vmatmul.mubr.f32.gmra.mrb[0].mxu0 %v708
  %v1001 = vpop.f32.mrb[0].mxu0
  %v1002 = vadd.f32 %v753, %v1001
  %v1003 = vpop.f32.mrb[0].mxu0
  %v1004 = vadd.f32 %v757, %v1003
  %1005 = vmatprep.mubr.f32.mxu0 %v803
  %1006 = vmatmul.mubr.f32.gmra.mrb[0].mxu0 %v709
  %v1007 = vpop.f32.mrb[0].mxu0
  %v1008 = vadd.f32 %v753, %v1007
  %v1009 = vpop.f32.mrb[0].mxu0
  %v1010 = vadd.f32 %v757, %v1009
  %1011 = vmatprep.mubr.f32.mxu0 %v805
  %1012 = vmatmul.mubr.f32.gmra.mrb[0].mxu0 %v710
  %v1013 = vpop.f32.mrb[0].mxu0
  %v1014 = vadd.f32 %v753, %v1013
  %v1015 = vpop.f32.mrb[0].mxu0
  %v1016 = vadd.f32 %v757, %v1015
  %1017 = vmatprep.mubr.f32.mxu0 %v807
  %1018 = vmatmul.mubr.f32.gmra.mrb[0].mxu0 %v711
  %v1019 = vpop.f32.mrb[0].mxu0
  %v1020 = vadd.f32 %v753, %v1019
  %v1021 = vpop.f32.mrb[0].mxu0
  %v1022 = vadd.f32 %v757, %v1021
  %1023 = vdwg.mxu0
  %1072 = vrot.lane.b32.xlu0 %v882, 120
  %v1073 = vpop.permute.xlu0 %1072
  %1074 = vrot.lane.b32.xlu0 %v884, 120
  %v1075 = vpop.permute.xlu0 %1074
  %1076 = vrot.lane.b32.xlu0 %v888, 120
  %v1077 = vpop.permute.xlu0 %1076
  %1078 = vrot.lane.b32.xlu0 %v890, 120
  %v1079 = vpop.permute.xlu0 %1078
  %1080 = vrot.lane.b32.xlu0 %v894, 120
  %v1081 = vpop.permute.xlu0 %1080
  %1082 = vrot.lane.b32.xlu0 %v896, 120
  %v1083 = vpop.permute.xlu0 %1082
  %1084 = vrot.lane.b32.xlu0 %v900, 120
  %v1085 = vpop.permute.xlu0 %1084
  %1086 = vrot.lane.b32.xlu0 %v902, 120
  %v1087 = vpop.permute.xlu0 %1086
  %1088 = vrot.lane.b32.xlu0 %v906, 120
  %v1089 = vpop.permute.xlu0 %1088
  %1090 = vrot.lane.b32.xlu0 %v908, 120
  %v1091 = vpop.permute.xlu0 %1090
  %1092 = vrot.lane.b32.xlu0 %v912, 120
  %v1093 = vpop.permute.xlu0 %1092
  %1094 = vrot.lane.b32.xlu0 %v914, 120
  %v1095 = vpop.permute.xlu0 %1094
  %1096 = vrot.lane.b32.xlu0 %v918, 120
  %v1097 = vpop.permute.xlu0 %1096
  %1098 = vrot.lane.b32.xlu0 %v920, 120
  %v1099 = vpop.permute.xlu0 %1098
  %1100 = vrot.lane.b32.xlu0 %v924, 120
  %v1101 = vpop.permute.xlu0 %1100
  %1102 = vrot.lane.b32.xlu0 %v926, 120
  %v1103 = vpop.permute.xlu0 %1102
  %1104 = vrot.lane.b32.xlu0 %v930, 120
  %v1105 = vpop.permute.xlu0 %1104
  %1106 = vrot.lane.b32.xlu0 %v932, 120
  %v1107 = vpop.permute.xlu0 %1106
  %1108 = vrot.lane.b32.xlu0 %v936, 120
  %v1109 = vpop.permute.xlu0 %1108
  %1110 = vrot.lane.b32.xlu0 %v938, 120
  %v1111 = vpop.permute.xlu0 %1110
  %1112 = vrot.lane.b32.xlu0 %v942, 120
  %v1113 = vpop.permute.xlu0 %1112
  %1114 = vrot.lane.b32.xlu0 %v944, 120
  %v1115 = vpop.permute.xlu0 %1114
  %1116 = vrot.lane.b32.xlu0 %v948, 120
  %v1117 = vpop.permute.xlu0 %1116
  %1118 = vrot.lane.b32.xlu0 %v950, 120
  %v1119 = vpop.permute.xlu0 %1118
  %1120 = vrot.lane.b32.xlu0 %v954, 120
  %v1121 = vpop.permute.xlu0 %1120
  %1122 = vrot.lane.b32.xlu0 %v956, 120
  %v1123 = vpop.permute.xlu0 %1122
  %1124 = vrot.lane.b32.xlu0 %v960, 120
  %v1125 = vpop.permute.xlu0 %1124
  %1126 = vrot.lane.b32.xlu0 %v962, 120
  %v1127 = vpop.permute.xlu0 %1126
  %1128 = vrot.lane.b32.xlu0 %v966, 120
  %v1129 = vpop.permute.xlu0 %1128
  %1130 = vrot.lane.b32.xlu0 %v968, 120
  %v1131 = vpop.permute.xlu0 %1130
  %1132 = vrot.lane.b32.xlu0 %v972, 120
  %v1133 = vpop.permute.xlu0 %1132
  %1134 = vrot.lane.b32.xlu0 %v974, 120
  %v1135 = vpop.permute.xlu0 %1134
  %1136 = vrot.lane.b32.xlu0 %v978, 120
  %v1137 = vpop.permute.xlu0 %1136
  %1138 = vrot.lane.b32.xlu0 %v980, 120
  %v1139 = vpop.permute.xlu0 %1138
  %1140 = vrot.lane.b32.xlu0 %v984, 120
  %v1141 = vpop.permute.xlu0 %1140
  %1142 = vrot.lane.b32.xlu0 %v986, 120
  %v1143 = vpop.permute.xlu0 %1142
  %1144 = vrot.lane.b32.xlu0 %v990, 120
  %v1145 = vpop.permute.xlu0 %1144
  %1146 = vrot.lane.b32.xlu0 %v992, 120
  %v1147 = vpop.permute.xlu0 %1146
  %1148 = vrot.lane.b32.xlu0 %v996, 120
  %v1149 = vpop.permute.xlu0 %1148
  %1150 = vrot.lane.b32.xlu0 %v998, 120
  %v1151 = vpop.permute.xlu0 %1150
  %1152 = vrot.lane.b32.xlu0 %v1002, 120
  %v1153 = vpop.permute.xlu0 %1152
  %1154 = vrot.lane.b32.xlu0 %v1004, 120
  %v1155 = vpop.permute.xlu0 %1154
  %1156 = vrot.lane.b32.xlu0 %v1008, 120
  %v1157 = vpop.permute.xlu0 %1156
  %1158 = vrot.lane.b32.xlu0 %v1010, 120
  %v1159 = vpop.permute.xlu0 %1158
  %1160 = vrot.lane.b32.xlu0 %v1014, 120
  %v1161 = vpop.permute.xlu0 %1160
  %1162 = vrot.lane.b32.xlu0 %v1016, 120
  %v1163 = vpop.permute.xlu0 %1162
  %1164 = vrot.lane.b32.xlu0 %v1020, 120
  %v1165 = vpop.permute.xlu0 %1164
  %1166 = vrot.lane.b32.xlu0 %v1022, 120
  %v1167 = vpop.permute.xlu0 %1166
  %vm1168 = vcmask 982016
  %v1169 = vsel %vm1168, %v1073, %v1075
  %v1170 = vsel %vm1168, %v1077, %v1079
  %v1171 = vsel %vm1168, %v1081, %v1083
  %v1172 = vsel %vm1168, %v1085, %v1087
  %v1173 = vsel %vm1168, %v1089, %v1091
  %v1174 = vsel %vm1168, %v1093, %v1095
  %v1175 = vsel %vm1168, %v1097, %v1099
  %v1176 = vsel %vm1168, %v1101, %v1103
  %v1177 = vsel %vm1168, %v1105, %v1107
  %v1178 = vsel %vm1168, %v1109, %v1111
  %v1179 = vsel %vm1168, %v1113, %v1115
  %v1180 = vsel %vm1168, %v1117, %v1119
  %v1181 = vsel %vm1168, %v1121, %v1123
  %v1182 = vsel %vm1168, %v1125, %v1127
  %v1183 = vsel %vm1168, %v1129, %v1131
  %v1184 = vsel %vm1168, %v1133, %v1135
  %v1185 = vsel %vm1168, %v1137, %v1139
  %v1186 = vsel %vm1168, %v1141, %v1143
  %v1187 = vsel %vm1168, %v1145, %v1147
  %v1188 = vsel %vm1168, %v1149, %v1151
  %v1189 = vsel %vm1168, %v1153, %v1155
  %v1190 = vsel %vm1168, %v1157, %v1159
  %v1191 = vsel %vm1168, %v1161, %v1163
  %v1192 = vsel %vm1168, %v1165, %v1167
  %v1241 = vmax.f32 %v882, %v1169
  %v1242 = vmax.f32 %v884, %v1075
  %v1243 = vmax.f32 %v888, %v1170
  %v1244 = vmax.f32 %v890, %v1079
  %v1245 = vmax.f32 %v894, %v1171
  %v1246 = vmax.f32 %v896, %v1083
  %v1247 = vmax.f32 %v900, %v1172
  %v1248 = vmax.f32 %v902, %v1087
  %v1249 = vmax.f32 %v906, %v1173
  %v1250 = vmax.f32 %v908, %v1091
  %v1251 = vmax.f32 %v912, %v1174
  %v1252 = vmax.f32 %v914, %v1095
  %v1253 = vmax.f32 %v918, %v1175
  %v1254 = vmax.f32 %v920, %v1099
  %v1255 = vmax.f32 %v924, %v1176
  %v1256 = vmax.f32 %v926, %v1103
  %v1257 = vmax.f32 %v930, %v1177
  %v1258 = vmax.f32 %v932, %v1107
  %v1259 = vmax.f32 %v936, %v1178
  %v1260 = vmax.f32 %v938, %v1111
  %v1261 = vmax.f32 %v942, %v1179
  %v1262 = vmax.f32 %v944, %v1115
  %v1263 = vmax.f32 %v948, %v1180
  %v1264 = vmax.f32 %v950, %v1119
  %v1265 = vmax.f32 %v954, %v1181
  %v1266 = vmax.f32 %v956, %v1123
  %v1267 = vmax.f32 %v960, %v1182
  %v1268 = vmax.f32 %v962, %v1127
  %v1269 = vmax.f32 %v966, %v1183
  %v1270 = vmax.f32 %v968, %v1131
  %v1271 = vmax.f32 %v972, %v1184
  %v1272 = vmax.f32 %v974, %v1135
  %v1273 = vmax.f32 %v978, %v1185
  %v1274 = vmax.f32 %v980, %v1139
  %v1275 = vmax.f32 %v984, %v1186
  %v1276 = vmax.f32 %v986, %v1143
  %v1277 = vmax.f32 %v990, %v1187
  %v1278 = vmax.f32 %v992, %v1147
  %v1279 = vmax.f32 %v996, %v1188
  %v1280 = vmax.f32 %v998, %v1151
  %v1281 = vmax.f32 %v1002, %v1189
  %v1282 = vmax.f32 %v1004, %v1155
  %v1283 = vmax.f32 %v1008, %v1190
  %v1284 = vmax.f32 %v1010, %v1159
  %v1285 = vmax.f32 %v1014, %v1191
  %v1286 = vmax.f32 %v1016, %v1163
  %v1287 = vmax.f32 %v1020, %v1192
  %v1288 = vmax.f32 %v1022, %v1167
  %v1337 = vrot.slane %v1241, 1
  %v1338 = vrot.slane %v1243, 1
  %v1339 = vsel %vm96, %v1337, %v1338
  %v1340 = vrot.slane %v1242, 1
  %v1341 = vrot.slane %v1244, 1
  %v1342 = vsel %vm96, %v1340, %v1341
  %v1343 = vrot.slane %v1245, 1
  %v1344 = vsel %vm96, %v1338, %v1343
  %v1345 = vrot.slane %v1246, 1
  %v1346 = vsel %vm96, %v1341, %v1345
  %v1347 = vrot.slane %v1247, 1
  %v1348 = vsel %vm96, %v1343, %v1347
  %v1349 = vrot.slane %v1248, 1
  %v1350 = vsel %vm96, %v1345, %v1349
  %v1351 = vrot.slane %v1249, 1
  %v1352 = vsel %vm96, %v1347, %v1351
  %v1353 = vrot.slane %v1250, 1
  %v1354 = vsel %vm96, %v1349, %v1353
  %v1355 = vrot.slane %v1251, 1
  %v1356 = vsel %vm96, %v1351, %v1355
  %v1357 = vrot.slane %v1252, 1
  %v1358 = vsel %vm96, %v1353, %v1357
  %v1359 = vrot.slane %v1253, 1
  %v1360 = vsel %vm96, %v1355, %v1359
  %v1361 = vrot.slane %v1254, 1
  %v1362 = vsel %vm96, %v1357, %v1361
  %v1363 = vrot.slane %v1255, 1
  %v1364 = vsel %vm96, %v1359, %v1363
  %v1365 = vrot.slane %v1256, 1
  %v1366 = vsel %vm96, %v1361, %v1365
  %v1367 = vrot.slane %v1257, 1
  %v1368 = vsel %vm96, %v1363, %v1367
  %v1369 = vrot.slane %v1258, 1
  %v1370 = vsel %vm96, %v1365, %v1369
  %v1371 = vrot.slane %v1259, 1
  %v1372 = vsel %vm96, %v1367, %v1371
  %v1373 = vrot.slane %v1260, 1
  %v1374 = vsel %vm96, %v1369, %v1373
  %v1375 = vrot.slane %v1261, 1
  %v1376 = vsel %vm96, %v1371, %v1375
  %v1377 = vrot.slane %v1262, 1
  %v1378 = vsel %vm96, %v1373, %v1377
  %v1379 = vrot.slane %v1263, 1
  %v1380 = vsel %vm96, %v1375, %v1379
  %v1381 = vrot.slane %v1264, 1
  %v1382 = vsel %vm96, %v1377, %v1381
  %v1383 = vrot.slane %v1265, 1
  %v1384 = vsel %vm96, %v1379, %v1383
  %v1385 = vrot.slane %v1266, 1
  %v1386 = vsel %vm96, %v1381, %v1385
  %v1387 = vrot.slane %v1267, 1
  %v1388 = vsel %vm96, %v1383, %v1387
  %v1389 = vrot.slane %v1268, 1
  %v1390 = vsel %vm96, %v1385, %v1389
  %v1391 = vrot.slane %v1269, 1
  %v1392 = vsel %vm96, %v1387, %v1391
  %v1393 = vrot.slane %v1270, 1
  %v1394 = vsel %vm96, %v1389, %v1393
  %v1395 = vrot.slane %v1271, 1
  %v1396 = vsel %vm96, %v1391, %v1395
  %v1397 = vrot.slane %v1272, 1
  %v1398 = vsel %vm96, %v1393, %v1397
  %v1399 = vrot.slane %v1273, 1
  %v1400 = vsel %vm96, %v1395, %v1399
  %v1401 = vrot.slane %v1274, 1
  %v1402 = vsel %vm96, %v1397, %v1401
  %v1403 = vrot.slane %v1275, 1
  %v1404 = vsel %vm96, %v1399, %v1403
  %v1405 = vrot.slane %v1276, 1
  %v1406 = vsel %vm96, %v1401, %v1405
  %v1407 = vrot.slane %v1277, 1
  %v1408 = vsel %vm96, %v1403, %v1407
  %v1409 = vrot.slane %v1278, 1
  %v1410 = vsel %vm96, %v1405, %v1409
  %v1411 = vrot.slane %v1279, 1
  %v1412 = vsel %vm96, %v1407, %v1411
  %v1413 = vrot.slane %v1280, 1
  %v1414 = vsel %vm96, %v1409, %v1413
  %v1415 = vrot.slane %v1281, 1
  %v1416 = vsel %vm96, %v1411, %v1415
  %v1417 = vrot.slane %v1282, 1
  %v1418 = vsel %vm96, %v1413, %v1417
  %v1419 = vrot.slane %v1283, 1
  %v1420 = vsel %vm96, %v1415, %v1419
  %v1421 = vrot.slane %v1284, 1
  %v1422 = vsel %vm96, %v1417, %v1421
  %v1423 = vrot.slane %v1285, 1
  %v1424 = vsel %vm96, %v1419, %v1423
  %v1425 = vrot.slane %v1286, 1
  %v1426 = vsel %vm96, %v1421, %v1425
  %v1427 = vrot.slane %v1287, 1
  %v1428 = vsel %vm96, %v1423, %v1427
  %v1429 = vrot.slane %v1288, 1
  %v1430 = vsel %vm96, %v1425, %v1429
  %v1479 = vsel %vm96, %v1427, %v1287
  %v1480 = vsel %vm96, %v1429, %v1288
  %v1481 = vmax.f32 %v1241, %v1339
  %v1482 = vmax.f32 %v1242, %v1342
  %v1483 = vmax.f32 %v1243, %v1344
  %v1484 = vmax.f32 %v1244, %v1346
  %v1485 = vmax.f32 %v1245, %v1348
  %v1486 = vmax.f32 %v1246, %v1350
  %v1487 = vmax.f32 %v1247, %v1352
  %v1488 = vmax.f32 %v1248, %v1354
  %v1489 = vmax.f32 %v1249, %v1356
  %v1490 = vmax.f32 %v1250, %v1358
  %v1491 = vmax.f32 %v1251, %v1360
  %v1492 = vmax.f32 %v1252, %v1362
  %v1493 = vmax.f32 %v1253, %v1364
  %v1494 = vmax.f32 %v1254, %v1366
  %v1495 = vmax.f32 %v1255, %v1368
  %v1496 = vmax.f32 %v1256, %v1370
  %v1497 = vmax.f32 %v1257, %v1372
  %v1498 = vmax.f32 %v1258, %v1374
  %v1499 = vmax.f32 %v1259, %v1376
  %v1500 = vmax.f32 %v1260, %v1378
  %v1501 = vmax.f32 %v1261, %v1380
  %v1502 = vmax.f32 %v1262, %v1382
  %v1503 = vmax.f32 %v1263, %v1384
  %v1504 = vmax.f32 %v1264, %v1386
  %v1505 = vmax.f32 %v1265, %v1388
  %v1506 = vmax.f32 %v1266, %v1390
  %v1507 = vmax.f32 %v1267, %v1392
  %v1508 = vmax.f32 %v1268, %v1394
  %v1509 = vmax.f32 %v1269, %v1396
  %v1510 = vmax.f32 %v1270, %v1398
  %v1511 = vmax.f32 %v1271, %v1400
  %v1512 = vmax.f32 %v1272, %v1402
  %v1513 = vmax.f32 %v1273, %v1404
  %v1514 = vmax.f32 %v1274, %v1406
  %v1515 = vmax.f32 %v1275, %v1408
  %v1516 = vmax.f32 %v1276, %v1410
  %v1517 = vmax.f32 %v1277, %v1412
  %v1518 = vmax.f32 %v1278, %v1414
  %v1519 = vmax.f32 %v1279, %v1416
  %v1520 = vmax.f32 %v1280, %v1418
  %v1521 = vmax.f32 %v1281, %v1420
  %v1522 = vmax.f32 %v1282, %v1422
  %v1523 = vmax.f32 %v1283, %v1424
  %v1524 = vmax.f32 %v1284, %v1426
  %v1525 = vmax.f32 %v1285, %v1428
  %v1526 = vmax.f32 %v1286, %v1430
  %v1527 = vmax.f32 %v1287, %v1479
  %v1528 = vmax.f32 %v1288, %v1480
  %v1577 = vrot.slane %v1481, 2
  %v1578 = vrot.slane %v1483, 2
  %v1579 = vsel %vm153, %v1577, %v1578
  %v1580 = vrot.slane %v1482, 2
  %v1581 = vrot.slane %v1484, 2
  %v1582 = vsel %vm153, %v1580, %v1581
  %v1583 = vrot.slane %v1485, 2
  %v1584 = vsel %vm153, %v1578, %v1583
  %v1585 = vrot.slane %v1486, 2
  %v1586 = vsel %vm153, %v1581, %v1585
  %v1587 = vrot.slane %v1487, 2
  %v1588 = vrot.slane %v1489, 2
  %v1589 = vsel %vm153, %v1587, %v1588
  %v1590 = vrot.slane %v1488, 2
  %v1591 = vrot.slane %v1490, 2
  %v1592 = vsel %vm153, %v1590, %v1591
  %v1593 = vrot.slane %v1491, 2
  %v1594 = vsel %vm153, %v1588, %v1593
  %v1595 = vrot.slane %v1492, 2
  %v1596 = vsel %vm153, %v1591, %v1595
  %v1597 = vrot.slane %v1493, 2
  %v1598 = vrot.slane %v1495, 2
  %v1599 = vsel %vm153, %v1597, %v1598
  %v1600 = vrot.slane %v1494, 2
  %v1601 = vrot.slane %v1496, 2
  %v1602 = vsel %vm153, %v1600, %v1601
  %v1603 = vrot.slane %v1497, 2
  %v1604 = vsel %vm153, %v1598, %v1603
  %v1605 = vrot.slane %v1498, 2
  %v1606 = vsel %vm153, %v1601, %v1605
  %v1607 = vrot.slane %v1499, 2
  %v1608 = vrot.slane %v1501, 2
  %v1609 = vsel %vm153, %v1607, %v1608
  %v1610 = vrot.slane %v1500, 2
  %v1611 = vrot.slane %v1502, 2
  %v1612 = vsel %vm153, %v1610, %v1611
  %v1613 = vrot.slane %v1503, 2
  %v1614 = vsel %vm153, %v1608, %v1613
  %v1615 = vrot.slane %v1504, 2
  %v1616 = vsel %vm153, %v1611, %v1615
  %v1617 = vrot.slane %v1505, 2
  %v1618 = vrot.slane %v1507, 2
  %v1619 = vsel %vm153, %v1617, %v1618
  %v1620 = vrot.slane %v1506, 2
  %v1621 = vrot.slane %v1508, 2
  %v1622 = vsel %vm153, %v1620, %v1621
  %v1623 = vrot.slane %v1509, 2
  %v1624 = vsel %vm153, %v1618, %v1623
  %v1625 = vrot.slane %v1510, 2
  %v1626 = vsel %vm153, %v1621, %v1625
  %v1627 = vrot.slane %v1511, 2
  %v1628 = vrot.slane %v1513, 2
  %v1629 = vsel %vm153, %v1627, %v1628
  %v1630 = vrot.slane %v1512, 2
  %v1631 = vrot.slane %v1514, 2
  %v1632 = vsel %vm153, %v1630, %v1631
  %v1633 = vrot.slane %v1515, 2
  %v1634 = vsel %vm153, %v1628, %v1633
  %v1635 = vrot.slane %v1516, 2
  %v1636 = vsel %vm153, %v1631, %v1635
  %v1637 = vrot.slane %v1517, 2
  %v1638 = vrot.slane %v1519, 2
  %v1639 = vsel %vm153, %v1637, %v1638
  %v1640 = vrot.slane %v1518, 2
  %v1641 = vrot.slane %v1520, 2
  %v1642 = vsel %vm153, %v1640, %v1641
  %v1643 = vrot.slane %v1521, 2
  %v1644 = vsel %vm153, %v1638, %v1643
  %v1645 = vrot.slane %v1522, 2
  %v1646 = vsel %vm153, %v1641, %v1645
  %v1647 = vrot.slane %v1523, 2
  %v1648 = vrot.slane %v1525, 2
  %v1649 = vsel %vm153, %v1647, %v1648
  %v1650 = vrot.slane %v1524, 2
  %v1651 = vrot.slane %v1526, 2
  %v1652 = vsel %vm153, %v1650, %v1651
  %v1653 = vrot.slane %v1527, 2
  %v1654 = vsel %vm153, %v1648, %v1653
  %v1655 = vrot.slane %v1528, 2
  %v1656 = vsel %vm153, %v1651, %v1655
  %v1657 = vrot.slane %v1481, 4
  %v1658 = vrot.slane %v1483, 4
  %v1659 = vsel %vm267, %v1657, %v1658
  %v1660 = vrot.slane %v1482, 4
  %v1661 = vrot.slane %v1484, 4
  %v1662 = vsel %vm267, %v1660, %v1661
  %v1663 = vrot.slane %v1485, 4
  %v1664 = vsel %vm267, %v1658, %v1663
  %v1665 = vrot.slane %v1486, 4
  %v1666 = vsel %vm267, %v1661, %v1665
  %v1667 = vrot.slane %v1487, 4
  %v1668 = vrot.slane %v1489, 4
  %v1669 = vsel %vm267, %v1667, %v1668
  %v1670 = vrot.slane %v1488, 4
  %v1671 = vrot.slane %v1490, 4
  %v1672 = vsel %vm267, %v1670, %v1671
  %v1673 = vrot.slane %v1491, 4
  %v1674 = vsel %vm267, %v1668, %v1673
  %v1675 = vrot.slane %v1492, 4
  %v1676 = vsel %vm267, %v1671, %v1675
  %v1677 = vrot.slane %v1493, 4
  %v1678 = vrot.slane %v1495, 4
  %v1679 = vsel %vm267, %v1677, %v1678
  %v1680 = vrot.slane %v1494, 4
  %v1681 = vrot.slane %v1496, 4
  %v1682 = vsel %vm267, %v1680, %v1681
  %v1683 = vrot.slane %v1497, 4
  %v1684 = vsel %vm267, %v1678, %v1683
  %v1685 = vrot.slane %v1498, 4
  %v1686 = vsel %vm267, %v1681, %v1685
  %v1687 = vrot.slane %v1499, 4
  %v1688 = vrot.slane %v1501, 4
  %v1689 = vsel %vm267, %v1687, %v1688
  %v1690 = vrot.slane %v1500, 4
  %v1691 = vrot.slane %v1502, 4
  %v1692 = vsel %vm267, %v1690, %v1691
  %v1693 = vrot.slane %v1503, 4
  %v1694 = vsel %vm267, %v1688, %v1693
  %v1695 = vrot.slane %v1504, 4
  %v1696 = vsel %vm267, %v1691, %v1695
  %v1697 = vrot.slane %v1505, 4
  %v1698 = vrot.slane %v1507, 4
  %v1699 = vsel %vm267, %v1697, %v1698
  %v1700 = vrot.slane %v1506, 4
  %v1701 = vrot.slane %v1508, 4
  %v1702 = vsel %vm267, %v1700, %v1701
  %v1703 = vrot.slane %v1509, 4
  %v1704 = vsel %vm267, %v1698, %v1703
  %v1705 = vrot.slane %v1510, 4
  %v1706 = vsel %vm267, %v1701, %v1705
  %v1707 = vrot.slane %v1511, 4
  %v1708 = vrot.slane %v1513, 4
  %v1709 = vsel %vm267, %v1707, %v1708
  %v1710 = vrot.slane %v1512, 4
  %v1711 = vrot.slane %v1514, 4
  %v1712 = vsel %vm267, %v1710, %v1711
  %v1713 = vrot.slane %v1515, 4
  %v1714 = vsel %vm267, %v1708, %v1713
  %v1715 = vrot.slane %v1516, 4
  %v1716 = vsel %vm267, %v1711, %v1715
  %v1717 = vrot.slane %v1517, 4
  %v1718 = vrot.slane %v1519, 4
  %v1719 = vsel %vm267, %v1717, %v1718
  %v1720 = vrot.slane %v1518, 4
  %v1721 = vrot.slane %v1520, 4
  %v1722 = vsel %vm267, %v1720, %v1721
  %v1723 = vrot.slane %v1521, 4
  %v1724 = vsel %vm267, %v1718, %v1723
  %v1725 = vrot.slane %v1522, 4
  %v1726 = vsel %vm267, %v1721, %v1725
  %v1727 = vrot.slane %v1523, 4
  %v1728 = vrot.slane %v1525, 4
  %v1729 = vsel %vm267, %v1727, %v1728
  %v1730 = vrot.slane %v1524, 4
  %v1731 = vrot.slane %v1526, 4
  %v1732 = vsel %vm267, %v1730, %v1731
  %v1733 = vrot.slane %v1527, 4
  %v1734 = vsel %vm267, %v1728, %v1733
  %v1735 = vrot.slane %v1528, 4
  %v1736 = vsel %vm267, %v1731, %v1735
  %vm1737 = vcmask 1041408
  %v1738 = vrot.slane %v1481, 6
  %v1739 = vrot.slane %v1483, 6
  %v1740 = vsel %vm1737, %v1738, %v1739
  %v1741 = vrot.slane %v1482, 6
  %v1742 = vrot.slane %v1484, 6
  %v1743 = vsel %vm1737, %v1741, %v1742
  %v1744 = vrot.slane %v1485, 6
  %v1745 = vsel %vm1737, %v1739, %v1744
  %v1746 = vrot.slane %v1486, 6
  %v1747 = vsel %vm1737, %v1742, %v1746
  %v1748 = vrot.slane %v1487, 6
  %v1749 = vrot.slane %v1489, 6
  %v1750 = vsel %vm1737, %v1748, %v1749
  %v1751 = vrot.slane %v1488, 6
  %v1752 = vrot.slane %v1490, 6
  %v1753 = vsel %vm1737, %v1751, %v1752
  %v1754 = vrot.slane %v1491, 6
  %v1755 = vsel %vm1737, %v1749, %v1754
  %v1756 = vrot.slane %v1492, 6
  %v1757 = vsel %vm1737, %v1752, %v1756
  %v1758 = vrot.slane %v1493, 6
  %v1759 = vrot.slane %v1495, 6
  %v1760 = vsel %vm1737, %v1758, %v1759
  %v1761 = vrot.slane %v1494, 6
  %v1762 = vrot.slane %v1496, 6
  %v1763 = vsel %vm1737, %v1761, %v1762
  %v1764 = vrot.slane %v1497, 6
  %v1765 = vsel %vm1737, %v1759, %v1764
  %v1766 = vrot.slane %v1498, 6
  %v1767 = vsel %vm1737, %v1762, %v1766
  %v1768 = vrot.slane %v1499, 6
  %v1769 = vrot.slane %v1501, 6
  %v1770 = vsel %vm1737, %v1768, %v1769
  %v1771 = vrot.slane %v1500, 6
  %v1772 = vrot.slane %v1502, 6
  %v1773 = vsel %vm1737, %v1771, %v1772
  %v1774 = vrot.slane %v1503, 6
  %v1775 = vsel %vm1737, %v1769, %v1774
  %v1776 = vrot.slane %v1504, 6
  %v1777 = vsel %vm1737, %v1772, %v1776
  %v1778 = vrot.slane %v1505, 6
  %v1779 = vrot.slane %v1507, 6
  %v1780 = vsel %vm1737, %v1778, %v1779
  %v1781 = vrot.slane %v1506, 6
  %v1782 = vrot.slane %v1508, 6
  %v1783 = vsel %vm1737, %v1781, %v1782
  %v1784 = vrot.slane %v1509, 6
  %v1785 = vsel %vm1737, %v1779, %v1784
  %v1786 = vrot.slane %v1510, 6
  %v1787 = vsel %vm1737, %v1782, %v1786
  %v1788 = vrot.slane %v1511, 6
  %v1789 = vrot.slane %v1513, 6
  %v1790 = vsel %vm1737, %v1788, %v1789
  %v1791 = vrot.slane %v1512, 6
  %v1792 = vrot.slane %v1514, 6
  %v1793 = vsel %vm1737, %v1791, %v1792
  %v1794 = vrot.slane %v1515, 6
  %v1795 = vsel %vm1737, %v1789, %v1794
  %v1796 = vrot.slane %v1516, 6
  %v1797 = vsel %vm1737, %v1792, %v1796
  %v1798 = vrot.slane %v1517, 6
  %v1799 = vrot.slane %v1519, 6
  %v1800 = vsel %vm1737, %v1798, %v1799
  %v1801 = vrot.slane %v1518, 6
  %v1802 = vrot.slane %v1520, 6
  %v1803 = vsel %vm1737, %v1801, %v1802
  %v1804 = vrot.slane %v1521, 6
  %v1805 = vsel %vm1737, %v1799, %v1804
  %v1806 = vrot.slane %v1522, 6
  %v1807 = vsel %vm1737, %v1802, %v1806
  %v1808 = vrot.slane %v1523, 6
  %v1809 = vrot.slane %v1525, 6
  %v1810 = vsel %vm1737, %v1808, %v1809
  %v1811 = vrot.slane %v1524, 6
  %v1812 = vrot.slane %v1526, 6
  %v1813 = vsel %vm1737, %v1811, %v1812
  %v1814 = vrot.slane %v1527, 6
  %v1815 = vsel %vm1737, %v1809, %v1814
  %v1816 = vrot.slane %v1528, 6
  %v1817 = vsel %vm1737, %v1812, %v1816
  %1818 = vrot.lane.b32.xlu0 %v1579, 56
  %v1819 = vpop.permute.xlu0 %1818
  %1820 = vrot.lane.b32.xlu0 %v1582, 56
  %v1821 = vpop.permute.xlu0 %1820
  %1822 = vrot.lane.b32.xlu0 %v1584, 56
  %v1823 = vpop.permute.xlu0 %1822
  %1824 = vrot.lane.b32.xlu0 %v1586, 56
  %v1825 = vpop.permute.xlu0 %1824
  %1826 = vrot.lane.b32.xlu0 %v1589, 56
  %v1827 = vpop.permute.xlu0 %1826
  %1828 = vrot.lane.b32.xlu0 %v1592, 56
  %v1829 = vpop.permute.xlu0 %1828
  %1830 = vrot.lane.b32.xlu0 %v1594, 56
  %v1831 = vpop.permute.xlu0 %1830
  %1832 = vrot.lane.b32.xlu0 %v1596, 56
  %v1833 = vpop.permute.xlu0 %1832
  %1834 = vrot.lane.b32.xlu0 %v1599, 56
  %v1835 = vpop.permute.xlu0 %1834
  %1836 = vrot.lane.b32.xlu0 %v1602, 56
  %v1837 = vpop.permute.xlu0 %1836
  %1838 = vrot.lane.b32.xlu0 %v1604, 56
  %v1839 = vpop.permute.xlu0 %1838
  %1840 = vrot.lane.b32.xlu0 %v1606, 56
  %v1841 = vpop.permute.xlu0 %1840
  %1842 = vrot.lane.b32.xlu0 %v1609, 56
  %v1843 = vpop.permute.xlu0 %1842
  %1844 = vrot.lane.b32.xlu0 %v1612, 56
  %v1845 = vpop.permute.xlu0 %1844
  %1846 = vrot.lane.b32.xlu0 %v1614, 56
  %v1847 = vpop.permute.xlu0 %1846
  %1848 = vrot.lane.b32.xlu0 %v1616, 56
  %v1849 = vpop.permute.xlu0 %1848
  %1850 = vrot.lane.b32.xlu0 %v1619, 56
  %v1851 = vpop.permute.xlu0 %1850
  %1852 = vrot.lane.b32.xlu0 %v1622, 56
  %v1853 = vpop.permute.xlu0 %1852
  %1854 = vrot.lane.b32.xlu0 %v1624, 56
  %v1855 = vpop.permute.xlu0 %1854
  %1856 = vrot.lane.b32.xlu0 %v1626, 56
  %v1857 = vpop.permute.xlu0 %1856
  %1858 = vrot.lane.b32.xlu0 %v1629, 56
  %v1859 = vpop.permute.xlu0 %1858
  %1860 = vrot.lane.b32.xlu0 %v1632, 56
  %v1861 = vpop.permute.xlu0 %1860
  %1862 = vrot.lane.b32.xlu0 %v1634, 56
  %v1863 = vpop.permute.xlu0 %1862
  %1864 = vrot.lane.b32.xlu0 %v1636, 56
  %v1865 = vpop.permute.xlu0 %1864
  %1866 = vrot.lane.b32.xlu0 %v1639, 56
  %v1867 = vpop.permute.xlu0 %1866
  %1868 = vrot.lane.b32.xlu0 %v1642, 56
  %v1869 = vpop.permute.xlu0 %1868
  %1870 = vrot.lane.b32.xlu0 %v1644, 56
  %v1871 = vpop.permute.xlu0 %1870
  %1872 = vrot.lane.b32.xlu0 %v1646, 56
  %v1873 = vpop.permute.xlu0 %1872
  %1874 = vrot.lane.b32.xlu0 %v1649, 56
  %v1875 = vpop.permute.xlu0 %1874
  %1876 = vrot.lane.b32.xlu0 %v1652, 56
  %v1877 = vpop.permute.xlu0 %1876
  %1878 = vrot.lane.b32.xlu0 %v1654, 56
  %v1879 = vpop.permute.xlu0 %1878
  %1880 = vrot.lane.b32.xlu0 %v1656, 56
  %v1881 = vpop.permute.xlu0 %1880
  %v1882 = vsel %vm637, %v1819, %v1821
  %v1883 = vsel %vm637, %v1823, %v1825
  %v1884 = vsel %vm637, %v1827, %v1829
  %v1885 = vsel %vm637, %v1831, %v1833
  %v1886 = vsel %vm637, %v1835, %v1837
  %v1887 = vsel %vm637, %v1839, %v1841
  %v1888 = vsel %vm637, %v1843, %v1845
  %v1889 = vsel %vm637, %v1847, %v1849
  %v1890 = vsel %vm637, %v1851, %v1853
  %v1891 = vsel %vm637, %v1855, %v1857
  %v1892 = vsel %vm637, %v1859, %v1861
  %v1893 = vsel %vm637, %v1863, %v1865
  %v1894 = vsel %vm637, %v1867, %v1869
  %v1895 = vsel %vm637, %v1871, %v1873
  %v1896 = vsel %vm637, %v1875, %v1877
  %v1897 = vsel %vm637, %v1879, %v1881
  %1930 = vrot.lane.b32.xlu0 %v1659, 112
  %v1931 = vpop.permute.xlu0 %1930
  %1932 = vrot.lane.b32.xlu0 %v1662, 112
  %v1933 = vpop.permute.xlu0 %1932
  %1934 = vrot.lane.b32.xlu0 %v1664, 112
  %v1935 = vpop.permute.xlu0 %1934
  %1936 = vrot.lane.b32.xlu0 %v1666, 112
  %v1937 = vpop.permute.xlu0 %1936
  %1938 = vrot.lane.b32.xlu0 %v1669, 112
  %v1939 = vpop.permute.xlu0 %1938
  %1940 = vrot.lane.b32.xlu0 %v1672, 112
  %v1941 = vpop.permute.xlu0 %1940
  %1942 = vrot.lane.b32.xlu0 %v1674, 112
  %v1943 = vpop.permute.xlu0 %1942
  %1944 = vrot.lane.b32.xlu0 %v1676, 112
  %v1945 = vpop.permute.xlu0 %1944
  %1946 = vrot.lane.b32.xlu0 %v1679, 112
  %v1947 = vpop.permute.xlu0 %1946
  %1948 = vrot.lane.b32.xlu0 %v1682, 112
  %v1949 = vpop.permute.xlu0 %1948
  %1950 = vrot.lane.b32.xlu0 %v1684, 112
  %v1951 = vpop.permute.xlu0 %1950
  %1952 = vrot.lane.b32.xlu0 %v1686, 112
  %v1953 = vpop.permute.xlu0 %1952
  %1954 = vrot.lane.b32.xlu0 %v1689, 112
  %v1955 = vpop.permute.xlu0 %1954
  %1956 = vrot.lane.b32.xlu0 %v1692, 112
  %v1957 = vpop.permute.xlu0 %1956
  %1958 = vrot.lane.b32.xlu0 %v1694, 112
  %v1959 = vpop.permute.xlu0 %1958
  %1960 = vrot.lane.b32.xlu0 %v1696, 112
  %v1961 = vpop.permute.xlu0 %1960
  %1962 = vrot.lane.b32.xlu0 %v1699, 112
  %v1963 = vpop.permute.xlu0 %1962
  %1964 = vrot.lane.b32.xlu0 %v1702, 112
  %v1965 = vpop.permute.xlu0 %1964
  %1966 = vrot.lane.b32.xlu0 %v1704, 112
  %v1967 = vpop.permute.xlu0 %1966
  %1968 = vrot.lane.b32.xlu0 %v1706, 112
  %v1969 = vpop.permute.xlu0 %1968
  %1970 = vrot.lane.b32.xlu0 %v1709, 112
  %v1971 = vpop.permute.xlu0 %1970
  %1972 = vrot.lane.b32.xlu0 %v1712, 112
  %v1973 = vpop.permute.xlu0 %1972
  %1974 = vrot.lane.b32.xlu0 %v1714, 112
  %v1975 = vpop.permute.xlu0 %1974
  %1976 = vrot.lane.b32.xlu0 %v1716, 112
  %v1977 = vpop.permute.xlu0 %1976
  %1978 = vrot.lane.b32.xlu0 %v1719, 112
  %v1979 = vpop.permute.xlu0 %1978
  %1980 = vrot.lane.b32.xlu0 %v1722, 112
  %v1981 = vpop.permute.xlu0 %1980
  %1982 = vrot.lane.b32.xlu0 %v1724, 112
  %v1983 = vpop.permute.xlu0 %1982
  %1984 = vrot.lane.b32.xlu0 %v1726, 112
  %v1985 = vpop.permute.xlu0 %1984
  %1986 = vrot.lane.b32.xlu0 %v1729, 112
  %v1987 = vpop.permute.xlu0 %1986
  %1988 = vrot.lane.b32.xlu0 %v1732, 112
  %v1989 = vpop.permute.xlu0 %1988
  %1990 = vrot.lane.b32.xlu0 %v1734, 112
  %v1991 = vpop.permute.xlu0 %1990
  %1992 = vrot.lane.b32.xlu0 %v1736, 112
  %v1993 = vpop.permute.xlu0 %1992
  %v1994 = vsel %vm687, %v1931, %v1933
  %v1995 = vsel %vm687, %v1935, %v1937
  %v1996 = vsel %vm687, %v1939, %v1941
  %v1997 = vsel %vm687, %v1943, %v1945
  %v1998 = vsel %vm687, %v1947, %v1949
  %v1999 = vsel %vm687, %v1951, %v1953
  %v2000 = vsel %vm687, %v1955, %v1957
  %v2001 = vsel %vm687, %v1959, %v1961
  %v2002 = vsel %vm687, %v1963, %v1965
  %v2003 = vsel %vm687, %v1967, %v1969
  %v2004 = vsel %vm687, %v1971, %v1973
  %v2005 = vsel %vm687, %v1975, %v1977
  %v2006 = vsel %vm687, %v1979, %v1981
  %v2007 = vsel %vm687, %v1983, %v1985
  %v2008 = vsel %vm687, %v1987, %v1989
  %v2009 = vsel %vm687, %v1991, %v1993
  %2058 = vrot.lane.b32.xlu0 %v1740, 40
  %v2059 = vpop.permute.xlu0 %2058
  %2060 = vrot.lane.b32.xlu0 %v1743, 40
  %v2061 = vpop.permute.xlu0 %2060
  %2062 = vrot.lane.b32.xlu0 %v1745, 40
  %v2063 = vpop.permute.xlu0 %2062
  %2064 = vrot.lane.b32.xlu0 %v1747, 40
  %v2065 = vpop.permute.xlu0 %2064
  %2066 = vrot.lane.b32.xlu0 %v1750, 40
  %v2067 = vpop.permute.xlu0 %2066
  %2068 = vrot.lane.b32.xlu0 %v1753, 40
  %v2069 = vpop.permute.xlu0 %2068
  %2070 = vrot.lane.b32.xlu0 %v1755, 40
  %v2071 = vpop.permute.xlu0 %2070
  %2072 = vrot.lane.b32.xlu0 %v1757, 40
  %v2073 = vpop.permute.xlu0 %2072
  %2074 = vrot.lane.b32.xlu0 %v1760, 40
  %v2075 = vpop.permute.xlu0 %2074
  %2076 = vrot.lane.b32.xlu0 %v1763, 40
  %v2077 = vpop.permute.xlu0 %2076
  %2078 = vrot.lane.b32.xlu0 %v1765, 40
  %v2079 = vpop.permute.xlu0 %2078
  %2080 = vrot.lane.b32.xlu0 %v1767, 40
  %v2081 = vpop.permute.xlu0 %2080
  %2082 = vrot.lane.b32.xlu0 %v1770, 40
  %v2083 = vpop.permute.xlu0 %2082
  %2084 = vrot.lane.b32.xlu0 %v1773, 40
  %v2085 = vpop.permute.xlu0 %2084
  %2086 = vrot.lane.b32.xlu0 %v1775, 40
  %v2087 = vpop.permute.xlu0 %2086
  %2088 = vrot.lane.b32.xlu0 %v1777, 40
  %v2089 = vpop.permute.xlu0 %2088
  %2090 = vrot.lane.b32.xlu0 %v1780, 40
  %v2091 = vpop.permute.xlu0 %2090
  %2092 = vrot.lane.b32.xlu0 %v1783, 40
  %v2093 = vpop.permute.xlu0 %2092
  %2094 = vrot.lane.b32.xlu0 %v1785, 40
  %v2095 = vpop.permute.xlu0 %2094
  %2096 = vrot.lane.b32.xlu0 %v1787, 40
  %v2097 = vpop.permute.xlu0 %2096
  %2098 = vrot.lane.b32.xlu0 %v1790, 40
  %v2099 = vpop.permute.xlu0 %2098
  %2100 = vrot.lane.b32.xlu0 %v1793, 40
  %v2101 = vpop.permute.xlu0 %2100
  %2102 = vrot.lane.b32.xlu0 %v1795, 40
  %v2103 = vpop.permute.xlu0 %2102
  %2104 = vrot.lane.b32.xlu0 %v1797, 40
  %v2105 = vpop.permute.xlu0 %2104
  %2106 = vrot.lane.b32.xlu0 %v1800, 40
  %v2107 = vpop.permute.xlu0 %2106
  %2108 = vrot.lane.b32.xlu0 %v1803, 40
  %v2109 = vpop.permute.xlu0 %2108
  %2110 = vrot.lane.b32.xlu0 %v1805, 40
  %v2111 = vpop.permute.xlu0 %2110
  %2112 = vrot.lane.b32.xlu0 %v1807, 40
  %v2113 = vpop.permute.xlu0 %2112
  %2114 = vrot.lane.b32.xlu0 %v1810, 40
  %v2115 = vpop.permute.xlu0 %2114
  %2116 = vrot.lane.b32.xlu0 %v1813, 40
  %v2117 = vpop.permute.xlu0 %2116
  %2118 = vrot.lane.b32.xlu0 %v1815, 40
  %v2119 = vpop.permute.xlu0 %2118
  %2120 = vrot.lane.b32.xlu0 %v1817, 40
  %v2121 = vpop.permute.xlu0 %2120
  %vm2122 = vcmask 326656
  %v2123 = vsel %vm2122, %v2059, %v2061
  %v2124 = vsel %vm2122, %v2063, %v2065
  %v2125 = vsel %vm2122, %v2067, %v2069
  %v2126 = vsel %vm2122, %v2071, %v2073
  %v2127 = vsel %vm2122, %v2075, %v2077
  %v2128 = vsel %vm2122, %v2079, %v2081
  %v2129 = vsel %vm2122, %v2083, %v2085
  %v2130 = vsel %vm2122, %v2087, %v2089
  %v2131 = vsel %vm2122, %v2091, %v2093
  %v2132 = vsel %vm2122, %v2095, %v2097
  %v2133 = vsel %vm2122, %v2099, %v2101
  %v2134 = vsel %vm2122, %v2103, %v2105
  %v2135 = vsel %vm2122, %v2107, %v2109
  %v2136 = vsel %vm2122, %v2111, %v2113
  %v2137 = vsel %vm2122, %v2115, %v2117
  %v2138 = vsel %vm2122, %v2119, %v2121
  %2171 = vrot.lane.b32.xlu0 %v1483, 96
  %v2172 = vpop.permute.xlu0 %2171
  %2173 = vrot.lane.b32.xlu0 %v1484, 96
  %v2174 = vpop.permute.xlu0 %2173
  %2175 = vrot.lane.b32.xlu0 %v1485, 96
  %v2176 = vpop.permute.xlu0 %2175
  %2177 = vrot.lane.b32.xlu0 %v1486, 96
  %v2178 = vpop.permute.xlu0 %2177
  %2179 = vrot.lane.b32.xlu0 %v1489, 96
  %v2180 = vpop.permute.xlu0 %2179
  %2181 = vrot.lane.b32.xlu0 %v1490, 96
  %v2182 = vpop.permute.xlu0 %2181
  %2183 = vrot.lane.b32.xlu0 %v1491, 96
  %v2184 = vpop.permute.xlu0 %2183
  %2185 = vrot.lane.b32.xlu0 %v1492, 96
  %v2186 = vpop.permute.xlu0 %2185
  %2187 = vrot.lane.b32.xlu0 %v1495, 96
  %v2188 = vpop.permute.xlu0 %2187
  %2189 = vrot.lane.b32.xlu0 %v1496, 96
  %v2190 = vpop.permute.xlu0 %2189
  %2191 = vrot.lane.b32.xlu0 %v1497, 96
  %v2192 = vpop.permute.xlu0 %2191
  %2193 = vrot.lane.b32.xlu0 %v1498, 96
  %v2194 = vpop.permute.xlu0 %2193
  %2195 = vrot.lane.b32.xlu0 %v1501, 96
  %v2196 = vpop.permute.xlu0 %2195
  %2197 = vrot.lane.b32.xlu0 %v1502, 96
  %v2198 = vpop.permute.xlu0 %2197
  %2199 = vrot.lane.b32.xlu0 %v1503, 96
  %v2200 = vpop.permute.xlu0 %2199
  %2201 = vrot.lane.b32.xlu0 %v1504, 96
  %v2202 = vpop.permute.xlu0 %2201
  %2203 = vrot.lane.b32.xlu0 %v1507, 96
  %v2204 = vpop.permute.xlu0 %2203
  %2205 = vrot.lane.b32.xlu0 %v1508, 96
  %v2206 = vpop.permute.xlu0 %2205
  %2207 = vrot.lane.b32.xlu0 %v1509, 96
  %v2208 = vpop.permute.xlu0 %2207
  %2209 = vrot.lane.b32.xlu0 %v1510, 96
  %v2210 = vpop.permute.xlu0 %2209
  %2211 = vrot.lane.b32.xlu0 %v1513, 96
  %v2212 = vpop.permute.xlu0 %2211
  %2213 = vrot.lane.b32.xlu0 %v1514, 96
  %v2214 = vpop.permute.xlu0 %2213
  %2215 = vrot.lane.b32.xlu0 %v1515, 96
  %v2216 = vpop.permute.xlu0 %2215
  %2217 = vrot.lane.b32.xlu0 %v1516, 96
  %v2218 = vpop.permute.xlu0 %2217
  %2219 = vrot.lane.b32.xlu0 %v1519, 96
  %v2220 = vpop.permute.xlu0 %2219
  %2221 = vrot.lane.b32.xlu0 %v1520, 96
  %v2222 = vpop.permute.xlu0 %2221
  %2223 = vrot.lane.b32.xlu0 %v1521, 96
  %v2224 = vpop.permute.xlu0 %2223
  %2225 = vrot.lane.b32.xlu0 %v1522, 96
  %v2226 = vpop.permute.xlu0 %2225
  %2227 = vrot.lane.b32.xlu0 %v1525, 96
  %v2228 = vpop.permute.xlu0 %2227
  %2229 = vrot.lane.b32.xlu0 %v1526, 96
  %v2230 = vpop.permute.xlu0 %2229
  %2231 = vrot.lane.b32.xlu0 %v1527, 96
  %v2232 = vpop.permute.xlu0 %2231
  %2233 = vrot.lane.b32.xlu0 %v1528, 96
  %v2234 = vpop.permute.xlu0 %2233
  %vm2235 = vcmask 785408
  %v2236 = vsel %vm2235, %v2172, %v2174
  %v2237 = vsel %vm2235, %v2176, %v2178
  %v2238 = vsel %vm2235, %v2180, %v2182
  %v2239 = vsel %vm2235, %v2184, %v2186
  %v2240 = vsel %vm2235, %v2188, %v2190
  %v2241 = vsel %vm2235, %v2192, %v2194
  %v2242 = vsel %vm2235, %v2196, %v2198
  %v2243 = vsel %vm2235, %v2200, %v2202
  %v2244 = vsel %vm2235, %v2204, %v2206
  %v2245 = vsel %vm2235, %v2208, %v2210
  %v2246 = vsel %vm2235, %v2212, %v2214
  %v2247 = vsel %vm2235, %v2216, %v2218
  %v2248 = vsel %vm2235, %v2220, %v2222
  %v2249 = vsel %vm2235, %v2224, %v2226
  %v2250 = vsel %vm2235, %v2228, %v2230
  %v2251 = vsel %vm2235, %v2232, %v2234
  %v2284 = vsel %vm637, %v1482, %v1819
  %v2285 = vsel %vm637, %v1484, %v1823
  %v2286 = vsel %vm637, %v1488, %v1827
  %v2287 = vsel %vm637, %v1490, %v1831
  %v2288 = vsel %vm637, %v1494, %v1835
  %v2289 = vsel %vm637, %v1496, %v1839
  %v2290 = vsel %vm637, %v1500, %v1843
  %v2291 = vsel %vm637, %v1502, %v1847
  %v2292 = vsel %vm637, %v1506, %v1851
  %v2293 = vsel %vm637, %v1508, %v1855
  %v2294 = vsel %vm637, %v1512, %v1859
  %v2295 = vsel %vm637, %v1514, %v1863
  %v2296 = vsel %vm637, %v1518, %v1867
  %v2297 = vsel %vm637, %v1520, %v1871
  %v2298 = vsel %vm637, %v1524, %v1875
  %v2299 = vsel %vm637, %v1526, %v1879
  %v2300 = vsel %vm687, %v1882, %v1931
  %v2301 = vsel %vm687, %v1883, %v1935
  %v2302 = vsel %vm687, %v1884, %v1939
  %v2303 = vsel %vm687, %v1885, %v1943
  %v2304 = vsel %vm687, %v1886, %v1947
  %v2305 = vsel %vm687, %v1887, %v1951
  %v2306 = vsel %vm687, %v1888, %v1955
  %v2307 = vsel %vm687, %v1889, %v1959
  %v2308 = vsel %vm687, %v1890, %v1963
  %v2309 = vsel %vm687, %v1891, %v1967
  %v2310 = vsel %vm687, %v1892, %v1971
  %v2311 = vsel %vm687, %v1893, %v1975
  %v2312 = vsel %vm687, %v1894, %v1979
  %v2313 = vsel %vm687, %v1895, %v1983
  %v2314 = vsel %vm687, %v1896, %v1987
  %v2315 = vsel %vm687, %v1897, %v1991
  %v2316 = vsel %vm2122, %v1933, %v2059
  %v2317 = vsel %vm2122, %v1937, %v2063
  %v2318 = vsel %vm2122, %v1941, %v2067
  %v2319 = vsel %vm2122, %v1945, %v2071
  %v2320 = vsel %vm2122, %v1949, %v2075
  %v2321 = vsel %vm2122, %v1953, %v2079
  %v2322 = vsel %vm2122, %v1957, %v2083
  %v2323 = vsel %vm2122, %v1961, %v2087
  %v2324 = vsel %vm2122, %v1965, %v2091
  %v2325 = vsel %vm2122, %v1969, %v2095
  %v2326 = vsel %vm2122, %v1973, %v2099
  %v2327 = vsel %vm2122, %v1977, %v2103
  %v2328 = vsel %vm2122, %v1981, %v2107
  %v2329 = vsel %vm2122, %v1985, %v2111
  %v2330 = vsel %vm2122, %v1989, %v2115
  %v2331 = vsel %vm2122, %v1993, %v2119
  %v2332 = vsel %vm2235, %v2123, %v2172
  %v2333 = vsel %vm2235, %v2124, %v2176
  %v2334 = vsel %vm2235, %v2125, %v2180
  %v2335 = vsel %vm2235, %v2126, %v2184
  %v2336 = vsel %vm2235, %v2127, %v2188
  %v2337 = vsel %vm2235, %v2128, %v2192
  %v2338 = vsel %vm2235, %v2129, %v2196
  %v2339 = vsel %vm2235, %v2130, %v2200
  %v2340 = vsel %vm2235, %v2131, %v2204
  %v2341 = vsel %vm2235, %v2132, %v2208
  %v2342 = vsel %vm2235, %v2133, %v2212
  %v2343 = vsel %vm2235, %v2134, %v2216
  %v2344 = vsel %vm2235, %v2135, %v2220
  %v2345 = vsel %vm2235, %v2136, %v2224
  %v2346 = vsel %vm2235, %v2137, %v2228
  %v2347 = vsel %vm2235, %v2138, %v2232
  %v2348 = vld [vmem:[%s3] sm:$0xff]
  %v2349 = vld [vmem:[%s3 + $0x8] sm:$0xff]
  %v2350 = vld [vmem:[%s3 + $0x10] sm:$0xff]
  %v2351 = vld [vmem:[%s3 + $0x18] sm:$0xff]
  %v2352 = vld [vmem:[%s3 + $0x20] sm:$0xff]
  %v2353 = vld [vmem:[%s3 + $0x28] sm:$0xff]
  %v2354 = vld [vmem:[%s3 + $0x30] sm:$0xff]
  %v2355 = vld [vmem:[%s3 + $0x38] sm:$0xff]
  %v2356 = vld [vmem:[%s3 + $0x40] sm:$0xff]
  %v2357 = vld [vmem:[%s3 + $0x48] sm:$0xff]
  %v2358 = vld [vmem:[%s3 + $0x50] sm:$0xff]
  %v2359 = vld [vmem:[%s3 + $0x58] sm:$0xff]
  %v2360 = vld [vmem:[%s3 + $0x60] sm:$0xff]
  %v2361 = vld [vmem:[%s3 + $0x68] sm:$0xff]
  %v2362 = vld [vmem:[%s3 + $0x70] sm:$0xff]
  %v2363 = vld [vmem:[%s3 + $0x78] sm:$0xff]
  %v2364 = vld [vmem:[%s3 + $0x80] sm:$0xff]
  %v2365 = vld [vmem:[%s3 + $0x88] sm:$0xff]
  %v2366 = vld [vmem:[%s3 + $0x90] sm:$0xff]
  %v2367 = vld [vmem:[%s3 + $0x98] sm:$0xff]
  %v2368 = vld [vmem:[%s3 + $0xa0] sm:$0xff]
  %v2369 = vld [vmem:[%s3 + $0xa8] sm:$0xff]
  %v2370 = vld [vmem:[%s3 + $0xb0] sm:$0xff]
  %v2371 = vld [vmem:[%s3 + $0xb8] sm:$0xff]
  %v2372 = vld [vmem:[%s3 + $0xc0] sm:$0xff]
  %v2373 = vld [vmem:[%s3 + $0xc8] sm:$0xff]
  %v2374 = vld [vmem:[%s3 + $0xd0] sm:$0xff]
  %v2375 = vld [vmem:[%s3 + $0xd8] sm:$0xff]
  %v2376 = vld [vmem:[%s3 + $0xe0] sm:$0xff]
  %v2377 = vld [vmem:[%s3 + $0xe8] sm:$0xff]
  %v2378 = vld [vmem:[%s3 + $0xf0] sm:$0xff]
  %v2379 = vld [vmem:[%s3 + $0xf8] sm:$0xff]
  %v2380 = vld [vmem:[%s3 + $0x100] sm:$0xff]
  %v2381 = vld [vmem:[%s3 + $0x108] sm:$0xff]
  %v2382 = vld [vmem:[%s3 + $0x110] sm:$0xff]
  %v2383 = vld [vmem:[%s3 + $0x118] sm:$0xff]
  %v2384 = vld [vmem:[%s3 + $0x120] sm:$0xff]
  %v2385 = vld [vmem:[%s3 + $0x128] sm:$0xff]
  %v2386 = vld [vmem:[%s3 + $0x130] sm:$0xff]
  %v2387 = vld [vmem:[%s3 + $0x138] sm:$0xff]
  %v2388 = vld [vmem:[%s3 + $0x140] sm:$0xff]
  %v2389 = vld [vmem:[%s3 + $0x148] sm:$0xff]
  %v2390 = vld [vmem:[%s3 + $0x150] sm:$0xff]
  %v2391 = vld [vmem:[%s3 + $0x158] sm:$0xff]
  %v2392 = vld [vmem:[%s3 + $0x160] sm:$0xff]
  %v2393 = vld [vmem:[%s3 + $0x168] sm:$0xff]
  %v2394 = vld [vmem:[%s3 + $0x170] sm:$0xff]
  %v2395 = vld [vmem:[%s3 + $0x178] sm:$0xff]
  %v2396 = vld [vmem:[%s3 + $0x180] sm:$0xff]
  %v2397 = vld [vmem:[%s3 + $0x188] sm:$0xff]
  %v2398 = vld [vmem:[%s3 + $0x190] sm:$0xff]
  %v2399 = vld [vmem:[%s3 + $0x198] sm:$0xff]
  %v2400 = vld [vmem:[%s3 + $0x1a0] sm:$0xff]
  %v2401 = vld [vmem:[%s3 + $0x1a8] sm:$0xff]
  %v2402 = vld [vmem:[%s3 + $0x1b0] sm:$0xff]
  %v2403 = vld [vmem:[%s3 + $0x1b8] sm:$0xff]
  %v2404 = vld [vmem:[%s3 + $0x1c0] sm:$0xff]
  %v2405 = vld [vmem:[%s3 + $0x1c8] sm:$0xff]
  %v2406 = vld [vmem:[%s3 + $0x1d0] sm:$0xff]
  %v2407 = vld [vmem:[%s3 + $0x1d8] sm:$0xff]
  %v2408 = vld [vmem:[%s3 + $0x1e0] sm:$0xff]
  %v2409 = vld [vmem:[%s3 + $0x1e8] sm:$0xff]
  %v2410 = vld [vmem:[%s3 + $0x1f0] sm:$0xff]
  %v2411 = vld [vmem:[%s3 + $0x1f8] sm:$0xff]
  %v2412 = vld [vmem:[%s3 + $0x200] sm:$0xff]
  %v2413 = vld [vmem:[%s3 + $0x208] sm:$0xff]
  %v2414 = vld [vmem:[%s3 + $0x210] sm:$0xff]
  %v2415 = vld [vmem:[%s3 + $0x218] sm:$0xff]
  %v2416 = vld [vmem:[%s3 + $0x220] sm:$0xff]
  %v2417 = vld [vmem:[%s3 + $0x228] sm:$0xff]
  %v2418 = vld [vmem:[%s3 + $0x230] sm:$0xff]
  %v2419 = vld [vmem:[%s3 + $0x238] sm:$0xff]
  %v2420 = vld [vmem:[%s3 + $0x240] sm:$0xff]
  %v2421 = vld [vmem:[%s3 + $0x248] sm:$0xff]
  %v2422 = vld [vmem:[%s3 + $0x250] sm:$0xff]
  %v2423 = vld [vmem:[%s3 + $0x258] sm:$0xff]
  %v2424 = vld [vmem:[%s3 + $0x260] sm:$0xff]
  %v2425 = vld [vmem:[%s3 + $0x268] sm:$0xff]
  %v2426 = vld [vmem:[%s3 + $0x270] sm:$0xff]
  %v2427 = vld [vmem:[%s3 + $0x278] sm:$0xff]
  %v2428 = vld [vmem:[%s3 + $0x280] sm:$0xff]
  %v2429 = vld [vmem:[%s3 + $0x288] sm:$0xff]
  %v2430 = vld [vmem:[%s3 + $0x290] sm:$0xff]
  %v2431 = vld [vmem:[%s3 + $0x298] sm:$0xff]
  %v2432 = vld [vmem:[%s3 + $0x2a0] sm:$0xff]
  %v2433 = vld [vmem:[%s3 + $0x2a8] sm:$0xff]
  %v2434 = vld [vmem:[%s3 + $0x2b0] sm:$0xff]
  %v2435 = vld [vmem:[%s3 + $0x2b8] sm:$0xff]
  %v2436 = vld [vmem:[%s3 + $0x2c0] sm:$0xff]
  %v2437 = vld [vmem:[%s3 + $0x2c8] sm:$0xff]
  %v2438 = vld [vmem:[%s3 + $0x2d0] sm:$0xff]
  %v2439 = vld [vmem:[%s3 + $0x2d8] sm:$0xff]
  %v2440 = vld [vmem:[%s3 + $0x2e0] sm:$0xff]
  %v2441 = vld [vmem:[%s3 + $0x2e8] sm:$0xff]
  %v2442 = vld [vmem:[%s3 + $0x2f0] sm:$0xff]
  %v2443 = vld [vmem:[%s3 + $0x2f8] sm:$0xff]
  %v2444 = vld [vmem:[%s3 + $0x300] sm:$0xff]
  %v2445 = vld [vmem:[%s3 + $0x308] sm:$0xff]
  %v2446 = vld [vmem:[%s3 + $0x310] sm:$0xff]
  %v2447 = vld [vmem:[%s3 + $0x318] sm:$0xff]
  %v2448 = vld [vmem:[%s3 + $0x320] sm:$0xff]
  %v2449 = vld [vmem:[%s3 + $0x328] sm:$0xff]
  %v2450 = vld [vmem:[%s3 + $0x330] sm:$0xff]
  %v2451 = vld [vmem:[%s3 + $0x338] sm:$0xff]
  %v2452 = vld [vmem:[%s3 + $0x340] sm:$0xff]
  %v2453 = vld [vmem:[%s3 + $0x348] sm:$0xff]
  %v2454 = vld [vmem:[%s3 + $0x350] sm:$0xff]
  %v2455 = vld [vmem:[%s3 + $0x358] sm:$0xff]
  %v2456 = vld [vmem:[%s3 + $0x360] sm:$0xff]
  %v2457 = vld [vmem:[%s3 + $0x368] sm:$0xff]
  %v2458 = vld [vmem:[%s3 + $0x370] sm:$0xff]
  %v2459 = vld [vmem:[%s3 + $0x378] sm:$0xff]
  %v2460 = vld [vmem:[%s3 + $0x380] sm:$0xff]
  %v2461 = vld [vmem:[%s3 + $0x388] sm:$0xff]
  %v2462 = vld [vmem:[%s3 + $0x390] sm:$0xff]
  %v2463 = vld [vmem:[%s4] sm:$0x1]
  %v2465 = vlaneseq
  %v2466 = vshrl.u32 %v2465, 7
  %v2467 = vsub.s32 0, %v2466
  %v2468 = vrot.slane %v2463, %v2467
  %vm2470 = vcmask 195584
  %v2471 = vsel %vm2470, %v2174, 0
  %v2473 = vsel %vm2470, %v2178, 0
  %v2475 = vsel %vm2470, %v2182, 0
  %v2477 = vsel %vm2470, %v2186, 0
  %v2479 = vsel %vm2470, %v2190, 0
  %v2481 = vsel %vm2470, %v2194, 0
  %v2483 = vsel %vm2470, %v2198, 0
  %v2485 = vsel %vm2470, %v2202, 0
  %v2487 = vsel %vm2470, %v2206, 0
  %v2489 = vsel %vm2470, %v2210, 0
  %v2491 = vsel %vm2470, %v2214, 0
  %v2493 = vsel %vm2470, %v2218, 0
  %v2495 = vsel %vm2470, %v2222, 0
  %v2497 = vsel %vm2470, %v2226, 0
  %v2499 = vsel %vm2470, %v2230, 0
  %v2501 = vsel %vm2470, %v2234, 0
  %2503 = vmatprep.subr.mxu0 0.0
  %2504 = vmatpush1.msra.mxu0 %v2348
  %2505 = vmatprep.subr.mxu0 0.0
  %2506 = vmatpush1.msra.mxu0 %v2349
  %2507 = vmatprep.subr.mxu0 0.0
  %2508 = vmatpush1.msra.mxu0 %v2350
  %2509 = vmatprep.subr.mxu0 0.0
  %2510 = vmatpush1.msra.mxu0 %v2351
  %2511 = vmatprep.subr.mxu0 0.0
  %2512 = vmatpush1.msra.mxu0 %v2352
  %2513 = vmatprep.subr.mxu0 0.0
  %2514 = vmatpush1.msra.mxu0 %v2353
  %2515 = vmatprep.subr.mxu0 0.0
  %2516 = vmatpush1.msra.mxu0 %v2354
  %2517 = vmatprep.subr.mxu0 0.0
  %2518 = vmatpush1.msra.mxu0 %v2355
  %2519 = vmatprep.subr.mxu0 0.0
  %2520 = vmatpush1.msra.mxu0 %v2356
  %2521 = vmatprep.subr.mxu0 0.0
  %2522 = vmatpush1.msra.mxu0 %v2357
  %2523 = vmatprep.subr.mxu0 0.0
  %2524 = vmatpush1.msra.mxu0 %v2358
  %2525 = vmatprep.subr.mxu0 0.0
  %2526 = vmatpush1.msra.mxu0 %v2359
  %2527 = vmatprep.subr.mxu0 0.0
  %2528 = vmatpush1.msra.mxu0 %v2360
  %2529 = vmatprep.subr.mxu0 0.0
  %2530 = vmatpush1.msra.mxu0 %v2361
  %2531 = vmatprep.subr.mxu0 0.0
  %2532 = vmatpush1.msra.mxu0 %v2362
  %2533 = vmatprep.subr.mxu0 0.0
  %2534 = vmatpush1.msra.mxu0 %v2363
  %2535 = vmatprep.subr.mxu0 0.0
  %2536 = vmatpush1.msra.mxu0 %v2364
  %2537 = vmatprep.subr.mxu0 0.0
  %2538 = vmatpush1.msra.mxu0 %v2365
  %2539 = vmatprep.subr.mxu0 0.0
  %2540 = vmatpush1.msra.mxu0 %v2366
  %2541 = vmatprep.subr.mxu0 0.0
  %2542 = vmatpush1.msra.mxu0 %v2367
  %2543 = vmatprep.subr.mxu0 0.0
  %2544 = vmatpush1.msra.mxu0 %v2368
  %2545 = vmatprep.subr.mxu0 0.0
  %2546 = vmatpush1.msra.mxu0 %v2369
  %2547 = vmatprep.subr.mxu0 0.0
  %2548 = vmatpush1.msra.mxu0 %v2370
  %2549 = vmatprep.subr.mxu0 0.0
  %2550 = vmatpush1.msra.mxu0 %v2371
  %2551 = vmatprep.subr.mxu0 0.0
  %2552 = vmatpush1.msra.mxu0 %v2372
  %2553 = vmatprep.subr.mxu0 0.0
  %2554 = vmatpush1.msra.mxu0 %v2373
  %2555 = vmatprep.subr.mxu0 0.0
  %2556 = vmatpush1.msra.mxu0 %v2374
  %2557 = vmatprep.subr.mxu0 0.0
  %2558 = vmatpush1.msra.mxu0 %v2375
  %2559 = vmatprep.subr.mxu0 0.0
  %2560 = vmatpush1.msra.mxu0 %v2376
  %2561 = vmatprep.subr.mxu0 0.0
  %2562 = vmatpush1.msra.mxu0 %v2377
  %2563 = vmatprep.subr.mxu0 0.0
  %2564 = vmatpush1.msra.mxu0 %v2378
  %2565 = vmatprep.subr.mxu0 0.0
  %2566 = vmatpush1.msra.mxu0 %v2379
  %2567 = vmatprep.mubr.f32.mxu0 %v2284
  %2568 = vmatmul.mubr.f32.gmra.mrb[0].mxu0 %v1481
  %v2569 = vpop.f32.mrb[0].mxu0
  %v2570 = vadd.f32 %v2468, %v2569
  %v2571 = vpop.f32.mrb[0].mxu0
  %2572 = vmatprep.mubr.f32.mxu0 %v2285
  %2573 = vmatmul.mubr.f32.gmra.mrb[0].mxu0 %v1483
  %v2574 = vpop.f32.mrb[0].mxu0
  %v2575 = vadd.f32 %v2468, %v2574
  %v2576 = vpop.f32.mrb[0].mxu0
  %2577 = vmatprep.mubr.f32.mxu0 %v2286
  %2578 = vmatmul.mubr.f32.gmra.mrb[0].mxu0 %v1487
  %v2579 = vpop.f32.mrb[0].mxu0
  %v2580 = vadd.f32 %v2468, %v2579
  %v2581 = vpop.f32.mrb[0].mxu0
  %2582 = vmatprep.mubr.f32.mxu0 %v2287
  %2583 = vmatmul.mubr.f32.gmra.mrb[0].mxu0 %v1489
  %v2584 = vpop.f32.mrb[0].mxu0
  %v2585 = vadd.f32 %v2468, %v2584
  %v2586 = vpop.f32.mrb[0].mxu0
  %2587 = vmatprep.mubr.f32.mxu0 %v2288
  %2588 = vmatmul.mubr.f32.gmra.mrb[0].mxu0 %v1493
  %v2589 = vpop.f32.mrb[0].mxu0
  %v2590 = vadd.f32 %v2468, %v2589
  %v2591 = vpop.f32.mrb[0].mxu0
  %2592 = vmatprep.mubr.f32.mxu0 %v2289
  %2593 = vmatmul.mubr.f32.gmra.mrb[0].mxu0 %v1495
  %v2594 = vpop.f32.mrb[0].mxu0
  %v2595 = vadd.f32 %v2468, %v2594
  %v2596 = vpop.f32.mrb[0].mxu0
  %2597 = vmatprep.mubr.f32.mxu0 %v2290
  %2598 = vmatmul.mubr.f32.gmra.mrb[0].mxu0 %v1499
  %v2599 = vpop.f32.mrb[0].mxu0
  %v2600 = vadd.f32 %v2468, %v2599
  %v2601 = vpop.f32.mrb[0].mxu0
  %2602 = vmatprep.mubr.f32.mxu0 %v2291
  %2603 = vmatmul.mubr.f32.gmra.mrb[0].mxu0 %v1501
  %v2604 = vpop.f32.mrb[0].mxu0
  %v2605 = vadd.f32 %v2468, %v2604
  %v2606 = vpop.f32.mrb[0].mxu0
  %2607 = vmatprep.mubr.f32.mxu0 %v2292
  %2608 = vmatmul.mubr.f32.gmra.mrb[0].mxu0 %v1505
  %v2609 = vpop.f32.mrb[0].mxu0
  %v2610 = vadd.f32 %v2468, %v2609
  %v2611 = vpop.f32.mrb[0].mxu0
  %2612 = vmatprep.mubr.f32.mxu0 %v2293
  %2613 = vmatmul.mubr.f32.gmra.mrb[0].mxu0 %v1507
  %v2614 = vpop.f32.mrb[0].mxu0
  %v2615 = vadd.f32 %v2468, %v2614
  %v2616 = vpop.f32.mrb[0].mxu0
  %2617 = vmatprep.mubr.f32.mxu0 %v2294
  %2618 = vmatmul.mubr.f32.gmra.mrb[0].mxu0 %v1511
  %v2619 = vpop.f32.mrb[0].mxu0
  %v2620 = vadd.f32 %v2468, %v2619
  %v2621 = vpop.f32.mrb[0].mxu0
  %2622 = vmatprep.mubr.f32.mxu0 %v2295
  %2623 = vmatmul.mubr.f32.gmra.mrb[0].mxu0 %v1513
  %v2624 = vpop.f32.mrb[0].mxu0
  %v2625 = vadd.f32 %v2468, %v2624
  %v2626 = vpop.f32.mrb[0].mxu0
  %2627 = vmatprep.mubr.f32.mxu0 %v2296
  %2628 = vmatmul.mubr.f32.gmra.mrb[0].mxu0 %v1517
  %v2629 = vpop.f32.mrb[0].mxu0
  %v2630 = vadd.f32 %v2468, %v2629
  %v2631 = vpop.f32.mrb[0].mxu0
  %2632 = vmatprep.mubr.f32.mxu0 %v2297
  %2633 = vmatmul.mubr.f32.gmra.mrb[0].mxu0 %v1519
  %v2634 = vpop.f32.mrb[0].mxu0
  %v2635 = vadd.f32 %v2468, %v2634
  %v2636 = vpop.f32.mrb[0].mxu0
  %2637 = vmatprep.mubr.f32.mxu0 %v2298
  %2638 = vmatmul.mubr.f32.gmra.mrb[0].mxu0 %v1523
  %v2639 = vpop.f32.mrb[0].mxu0
  %v2640 = vadd.f32 %v2468, %v2639
  %v2641 = vpop.f32.mrb[0].mxu0
  %2642 = vmatprep.mubr.f32.mxu0 %v2299
  %2643 = vmatmul.mubr.f32.gmra.mrb[0].mxu0 %v1525
  %v2644 = vpop.f32.mrb[0].mxu0
  %v2645 = vadd.f32 %v2468, %v2644
  %v2646 = vpop.f32.mrb[0].mxu0
  %2647 = vdwg.mxu0
  %2648 = vmatprep.subr.mxu0 0.0
  %2649 = vmatpush1.msra.mxu0 %v2380
  %2650 = vmatprep.subr.mxu0 0.0
  %2651 = vmatpush1.msra.mxu0 %v2381
  %2652 = vmatprep.subr.mxu0 0.0
  %2653 = vmatpush1.msra.mxu0 %v2382
  %2654 = vmatprep.subr.mxu0 0.0
  %2655 = vmatpush1.msra.mxu0 %v2383
  %2656 = vmatprep.subr.mxu0 0.0
  %2657 = vmatpush1.msra.mxu0 %v2384
  %2658 = vmatprep.subr.mxu0 0.0
  %2659 = vmatpush1.msra.mxu0 %v2385
  %2660 = vmatprep.subr.mxu0 0.0
  %2661 = vmatpush1.msra.mxu0 %v2386
  %2662 = vmatprep.subr.mxu0 0.0
  %2663 = vmatpush1.msra.mxu0 %v2387
  %2664 = vmatprep.subr.mxu0 0.0
  %2665 = vmatpush1.msra.mxu0 %v2388
  %2666 = vmatprep.subr.mxu0 0.0
  %2667 = vmatpush1.msra.mxu0 %v2389
  %2668 = vmatprep.subr.mxu0 0.0
  %2669 = vmatpush1.msra.mxu0 %v2390
  %2670 = vmatprep.subr.mxu0 0.0
  %2671 = vmatpush1.msra.mxu0 %v2391
  %2672 = vmatprep.subr.mxu0 0.0
  %2673 = vmatpush1.msra.mxu0 %v2392
  %2674 = vmatprep.subr.mxu0 0.0
  %2675 = vmatpush1.msra.mxu0 %v2393
  %2676 = vmatprep.subr.mxu0 0.0
  %2677 = vmatpush1.msra.mxu0 %v2394
  %2678 = vmatprep.subr.mxu0 0.0
  %2679 = vmatpush1.msra.mxu0 %v2395
  %2680 = vmatprep.subr.mxu0 0.0
  %2681 = vmatpush1.msra.mxu0 %v2396
  %2682 = vmatprep.subr.mxu0 0.0
  %2683 = vmatpush1.msra.mxu0 %v2397
  %2684 = vmatprep.subr.mxu0 0.0
  %2685 = vmatpush1.msra.mxu0 %v2398
  %2686 = vmatprep.subr.mxu0 0.0
  %2687 = vmatpush1.msra.mxu0 %v2399
  %2688 = vmatprep.subr.mxu0 0.0
  %2689 = vmatpush1.msra.mxu0 %v2400
  %2690 = vmatprep.subr.mxu0 0.0
  %2691 = vmatpush1.msra.mxu0 %v2401
  %2692 = vmatprep.subr.mxu0 0.0
  %2693 = vmatpush1.msra.mxu0 %v2402
  %2694 = vmatprep.subr.mxu0 0.0
  %2695 = vmatpush1.msra.mxu0 %v2403
  %2696 = vmatprep.subr.mxu0 0.0
  %2697 = vmatpush1.msra.mxu0 %v2404
  %2698 = vmatprep.subr.mxu0 0.0
  %2699 = vmatpush1.msra.mxu0 %v2405
  %2700 = vmatprep.subr.mxu0 0.0
  %2701 = vmatpush1.msra.mxu0 %v2406
  %2702 = vmatprep.subr.mxu0 0.0
  %2703 = vmatpush1.msra.mxu0 %v2407
  %2704 = vmatprep.subr.mxu0 0.0
  %2705 = vmatpush1.msra.mxu0 %v2408
  %2706 = vmatprep.subr.mxu0 0.0
  %2707 = vmatpush1.msra.mxu0 %v2409
  %2708 = vmatprep.subr.mxu0 0.0
  %2709 = vmatpush1.msra.mxu0 %v2410
  %2710 = vmatprep.subr.mxu0 0.0
  %2711 = vmatpush1.msra.mxu0 %v2411
  %2712 = vmatprep.mubr.f32.mxu0 %v1994
  %2713 = vmatmul.mubr.f32.gmra.mrb[0].mxu0 %v2300
  %v2714 = vpop.f32.mrb[0].mxu0
  %v2715 = vadd.f32 %v2570, %v2714
  %v2716 = vpop.f32.mrb[0].mxu0
  %2717 = vmatprep.mubr.f32.mxu0 %v1995
  %2718 = vmatmul.mubr.f32.gmra.mrb[0].mxu0 %v2301
  %v2719 = vpop.f32.mrb[0].mxu0
  %v2720 = vadd.f32 %v2575, %v2719
  %v2721 = vpop.f32.mrb[0].mxu0
  %2722 = vmatprep.mubr.f32.mxu0 %v1996
  %2723 = vmatmul.mubr.f32.gmra.mrb[0].mxu0 %v2302
  %v2724 = vpop.f32.mrb[0].mxu0
  %v2725 = vadd.f32 %v2580, %v2724
  %v2726 = vpop.f32.mrb[0].mxu0
  %2727 = vmatprep.mubr.f32.mxu0 %v1997
  %2728 = vmatmul.mubr.f32.gmra.mrb[0].mxu0 %v2303
  %v2729 = vpop.f32.mrb[0].mxu0
  %v2730 = vadd.f32 %v2585, %v2729
  %v2731 = vpop.f32.mrb[0].mxu0
  %2732 = vmatprep.mubr.f32.mxu0 %v1998
  %2733 = vmatmul.mubr.f32.gmra.mrb[0].mxu0 %v2304
  %v2734 = vpop.f32.mrb[0].mxu0
  %v2735 = vadd.f32 %v2590, %v2734
  %v2736 = vpop.f32.mrb[0].mxu0
  %2737 = vmatprep.mubr.f32.mxu0 %v1999
  %2738 = vmatmul.mubr.f32.gmra.mrb[0].mxu0 %v2305
  %v2739 = vpop.f32.mrb[0].mxu0
  %v2740 = vadd.f32 %v2595, %v2739
  %v2741 = vpop.f32.mrb[0].mxu0
  %2742 = vmatprep.mubr.f32.mxu0 %v2000
  %2743 = vmatmul.mubr.f32.gmra.mrb[0].mxu0 %v2306
  %v2744 = vpop.f32.mrb[0].mxu0
  %v2745 = vadd.f32 %v2600, %v2744
  %v2746 = vpop.f32.mrb[0].mxu0
  %2747 = vmatprep.mubr.f32.mxu0 %v2001
  %2748 = vmatmul.mubr.f32.gmra.mrb[0].mxu0 %v2307
  %v2749 = vpop.f32.mrb[0].mxu0
  %v2750 = vadd.f32 %v2605, %v2749
  %v2751 = vpop.f32.mrb[0].mxu0
  %2752 = vmatprep.mubr.f32.mxu0 %v2002
  %2753 = vmatmul.mubr.f32.gmra.mrb[0].mxu0 %v2308
  %v2754 = vpop.f32.mrb[0].mxu0
  %v2755 = vadd.f32 %v2610, %v2754
  %v2756 = vpop.f32.mrb[0].mxu0
  %2757 = vmatprep.mubr.f32.mxu0 %v2003
  %2758 = vmatmul.mubr.f32.gmra.mrb[0].mxu0 %v2309
  %v2759 = vpop.f32.mrb[0].mxu0
  %v2760 = vadd.f32 %v2615, %v2759
  %v2761 = vpop.f32.mrb[0].mxu0
  %2762 = vmatprep.mubr.f32.mxu0 %v2004
  %2763 = vmatmul.mubr.f32.gmra.mrb[0].mxu0 %v2310
  %v2764 = vpop.f32.mrb[0].mxu0
  %v2765 = vadd.f32 %v2620, %v2764
  %v2766 = vpop.f32.mrb[0].mxu0
  %2767 = vmatprep.mubr.f32.mxu0 %v2005
  %2768 = vmatmul.mubr.f32.gmra.mrb[0].mxu0 %v2311
  %v2769 = vpop.f32.mrb[0].mxu0
  %v2770 = vadd.f32 %v2625, %v2769
  %v2771 = vpop.f32.mrb[0].mxu0
  %2772 = vmatprep.mubr.f32.mxu0 %v2006
  %2773 = vmatmul.mubr.f32.gmra.mrb[0].mxu0 %v2312
  %v2774 = vpop.f32.mrb[0].mxu0
  %v2775 = vadd.f32 %v2630, %v2774
  %v2776 = vpop.f32.mrb[0].mxu0
  %2777 = vmatprep.mubr.f32.mxu0 %v2007
  %2778 = vmatmul.mubr.f32.gmra.mrb[0].mxu0 %v2313
  %v2779 = vpop.f32.mrb[0].mxu0
  %v2780 = vadd.f32 %v2635, %v2779
  %v2781 = vpop.f32.mrb[0].mxu0
  %2782 = vmatprep.mubr.f32.mxu0 %v2008
  %2783 = vmatmul.mubr.f32.gmra.mrb[0].mxu0 %v2314
  %v2784 = vpop.f32.mrb[0].mxu0
  %v2785 = vadd.f32 %v2640, %v2784
  %v2786 = vpop.f32.mrb[0].mxu0
  %2787 = vmatprep.mubr.f32.mxu0 %v2009
  %2788 = vmatmul.mubr.f32.gmra.mrb[0].mxu0 %v2315
  %v2789 = vpop.f32.mrb[0].mxu0
  %v2790 = vadd.f32 %v2645, %v2789
  %v2791 = vpop.f32.mrb[0].mxu0
  %2792 = vdwg.mxu0
  %2793 = vmatprep.subr.mxu0 0.0
  %2794 = vmatpush1.msra.mxu0 %v2412
  %2795 = vmatprep.subr.mxu0 0.0
  %2796 = vmatpush1.msra.mxu0 %v2413
  %2797 = vmatprep.subr.mxu0 0.0
  %2798 = vmatpush1.msra.mxu0 %v2414
  %2799 = vmatprep.subr.mxu0 0.0
  %2800 = vmatpush1.msra.mxu0 %v2415
  %2801 = vmatprep.subr.mxu0 0.0
  %2802 = vmatpush1.msra.mxu0 %v2416
  %2803 = vmatprep.subr.mxu0 0.0
  %2804 = vmatpush1.msra.mxu0 %v2417
  %2805 = vmatprep.subr.mxu0 0.0
  %2806 = vmatpush1.msra.mxu0 %v2418
  %2807 = vmatprep.subr.mxu0 0.0
  %2808 = vmatpush1.msra.mxu0 %v2419
  %2809 = vmatprep.subr.mxu0 0.0
  %2810 = vmatpush1.msra.mxu0 %v2420
  %2811 = vmatprep.subr.mxu0 0.0
  %2812 = vmatpush1.msra.mxu0 %v2421
  %2813 = vmatprep.subr.mxu0 0.0
  %2814 = vmatpush1.msra.mxu0 %v2422
  %2815 = vmatprep.subr.mxu0 0.0
  %2816 = vmatpush1.msra.mxu0 %v2423
  %2817 = vmatprep.subr.mxu0 0.0
  %2818 = vmatpush1.msra.mxu0 %v2424
  %2819 = vmatprep.subr.mxu0 0.0
  %2820 = vmatpush1.msra.mxu0 %v2425
  %2821 = vmatprep.subr.mxu0 0.0
  %2822 = vmatpush1.msra.mxu0 %v2426
  %2823 = vmatprep.subr.mxu0 0.0
  %2824 = vmatpush1.msra.mxu0 %v2427
  %2825 = vmatprep.subr.mxu0 0.0
  %2826 = vmatpush1.msra.mxu0 %v2428
  %2827 = vmatprep.subr.mxu0 0.0
  %2828 = vmatpush1.msra.mxu0 %v2429
  %2829 = vmatprep.subr.mxu0 0.0
  %2830 = vmatpush1.msra.mxu0 %v2430
  %2831 = vmatprep.subr.mxu0 0.0
  %2832 = vmatpush1.msra.mxu0 %v2431
  %2833 = vmatprep.subr.mxu0 0.0
  %2834 = vmatpush1.msra.mxu0 %v2432
  %2835 = vmatprep.subr.mxu0 0.0
  %2836 = vmatpush1.msra.mxu0 %v2433
  %2837 = vmatprep.subr.mxu0 0.0
  %2838 = vmatpush1.msra.mxu0 %v2434
  %2839 = vmatprep.subr.mxu0 0.0
  %2840 = vmatpush1.msra.mxu0 %v2435
  %2841 = vmatprep.subr.mxu0 0.0
  %2842 = vmatpush1.msra.mxu0 %v2436
  %2843 = vmatprep.subr.mxu0 0.0
  %2844 = vmatpush1.msra.mxu0 %v2437
  %2845 = vmatprep.subr.mxu0 0.0
  %2846 = vmatpush1.msra.mxu0 %v2438
  %2847 = vmatprep.subr.mxu0 0.0
  %2848 = vmatpush1.msra.mxu0 %v2439
  %2849 = vmatprep.subr.mxu0 0.0
  %2850 = vmatpush1.msra.mxu0 %v2440
  %2851 = vmatprep.subr.mxu0 0.0
  %2852 = vmatpush1.msra.mxu0 %v2441
  %2853 = vmatprep.subr.mxu0 0.0
  %2854 = vmatpush1.msra.mxu0 %v2442
  %2855 = vmatprep.subr.mxu0 0.0
  %2856 = vmatpush1.msra.mxu0 %v2443
  %2857 = vmatprep.mubr.f32.mxu0 %v2332
  %2858 = vmatmul.mubr.f32.gmra.mrb[0].mxu0 %v2316
  %v2859 = vpop.f32.mrb[0].mxu0
  %v2860 = vadd.f32 %v2715, %v2859
  %v2861 = vpop.f32.mrb[0].mxu0
  %2862 = vmatprep.mubr.f32.mxu0 %v2333
  %2863 = vmatmul.mubr.f32.gmra.mrb[0].mxu0 %v2317
  %v2864 = vpop.f32.mrb[0].mxu0
  %v2865 = vadd.f32 %v2720, %v2864
  %v2866 = vpop.f32.mrb[0].mxu0
  %2867 = vmatprep.mubr.f32.mxu0 %v2334
  %2868 = vmatmul.mubr.f32.gmra.mrb[0].mxu0 %v2318
  %v2869 = vpop.f32.mrb[0].mxu0
  %v2870 = vadd.f32 %v2725, %v2869
  %v2871 = vpop.f32.mrb[0].mxu0
  %2872 = vmatprep.mubr.f32.mxu0 %v2335
  %2873 = vmatmul.mubr.f32.gmra.mrb[0].mxu0 %v2319
  %v2874 = vpop.f32.mrb[0].mxu0
  %v2875 = vadd.f32 %v2730, %v2874
  %v2876 = vpop.f32.mrb[0].mxu0
  %2877 = vmatprep.mubr.f32.mxu0 %v2336
  %2878 = vmatmul.mubr.f32.gmra.mrb[0].mxu0 %v2320
  %v2879 = vpop.f32.mrb[0].mxu0
  %v2880 = vadd.f32 %v2735, %v2879
  %v2881 = vpop.f32.mrb[0].mxu0
  %2882 = vmatprep.mubr.f32.mxu0 %v2337
  %2883 = vmatmul.mubr.f32.gmra.mrb[0].mxu0 %v2321
  %v2884 = vpop.f32.mrb[0].mxu0
  %v2885 = vadd.f32 %v2740, %v2884
  %v2886 = vpop.f32.mrb[0].mxu0
  %2887 = vmatprep.mubr.f32.mxu0 %v2338
  %2888 = vmatmul.mubr.f32.gmra.mrb[0].mxu0 %v2322
  %v2889 = vpop.f32.mrb[0].mxu0
  %v2890 = vadd.f32 %v2745, %v2889
  %v2891 = vpop.f32.mrb[0].mxu0
  %2892 = vmatprep.mubr.f32.mxu0 %v2339
  %2893 = vmatmul.mubr.f32.gmra.mrb[0].mxu0 %v2323
  %v2894 = vpop.f32.mrb[0].mxu0
  %v2895 = vadd.f32 %v2750, %v2894
  %v2896 = vpop.f32.mrb[0].mxu0
  %2897 = vmatprep.mubr.f32.mxu0 %v2340
  %2898 = vmatmul.mubr.f32.gmra.mrb[0].mxu0 %v2324
  %v2899 = vpop.f32.mrb[0].mxu0
  %v2900 = vadd.f32 %v2755, %v2899
  %v2901 = vpop.f32.mrb[0].mxu0
  %2902 = vmatprep.mubr.f32.mxu0 %v2341
  %2903 = vmatmul.mubr.f32.gmra.mrb[0].mxu0 %v2325
  %v2904 = vpop.f32.mrb[0].mxu0
  %v2905 = vadd.f32 %v2760, %v2904
  %v2906 = vpop.f32.mrb[0].mxu0
  %2907 = vmatprep.mubr.f32.mxu0 %v2342
  %2908 = vmatmul.mubr.f32.gmra.mrb[0].mxu0 %v2326
  %v2909 = vpop.f32.mrb[0].mxu0
  %v2910 = vadd.f32 %v2765, %v2909
  %v2911 = vpop.f32.mrb[0].mxu0
  %2912 = vmatprep.mubr.f32.mxu0 %v2343
  %2913 = vmatmul.mubr.f32.gmra.mrb[0].mxu0 %v2327
  %v2914 = vpop.f32.mrb[0].mxu0
  %v2915 = vadd.f32 %v2770, %v2914
  %v2916 = vpop.f32.mrb[0].mxu0
  %2917 = vmatprep.mubr.f32.mxu0 %v2344
  %2918 = vmatmul.mubr.f32.gmra.mrb[0].mxu0 %v2328
  %v2919 = vpop.f32.mrb[0].mxu0
  %v2920 = vadd.f32 %v2775, %v2919
  %v2921 = vpop.f32.mrb[0].mxu0
  %2922 = vmatprep.mubr.f32.mxu0 %v2345
  %2923 = vmatmul.mubr.f32.gmra.mrb[0].mxu0 %v2329
  %v2924 = vpop.f32.mrb[0].mxu0
  %v2925 = vadd.f32 %v2780, %v2924
  %v2926 = vpop.f32.mrb[0].mxu0
  %2927 = vmatprep.mubr.f32.mxu0 %v2346
  %2928 = vmatmul.mubr.f32.gmra.mrb[0].mxu0 %v2330
  %v2929 = vpop.f32.mrb[0].mxu0
  %v2930 = vadd.f32 %v2785, %v2929
  %v2931 = vpop.f32.mrb[0].mxu0
  %2932 = vmatprep.mubr.f32.mxu0 %v2347
  %2933 = vmatmul.mubr.f32.gmra.mrb[0].mxu0 %v2331
  %v2934 = vpop.f32.mrb[0].mxu0
  %v2935 = vadd.f32 %v2790, %v2934
  %v2936 = vpop.f32.mrb[0].mxu0
  %2937 = vdwg.mxu0
  %2938 = vmatprep.subr.mxu0 0.0
  %2939 = vmatpush1.msra.mxu0 %v2444
  %2940 = vmatprep.subr.mxu0 0.0
  %2941 = vmatpush1.msra.mxu0 %v2445
  %2942 = vmatprep.subr.mxu0 0.0
  %2943 = vmatpush1.msra.mxu0 %v2446
  %2944 = vmatprep.subr.mxu0 0.0
  %2945 = vmatpush1.msra.mxu0 %v2447
  %2946 = vmatprep.subr.mxu0 0.0
  %2947 = vmatpush1.msra.mxu0 %v2448
  %2948 = vmatprep.subr.mxu0 0.0
  %2949 = vmatpush1.msra.mxu0 %v2449
  %2950 = vmatprep.subr.mxu0 0.0
  %2951 = vmatpush1.msra.mxu0 %v2450
  %2952 = vmatprep.subr.mxu0 0.0
  %2953 = vmatpush1.msra.mxu0 %v2451
  %2954 = vmatprep.subr.mxu0 0.0
  %2955 = vmatpush1.msra.mxu0 %v2452
  %2956 = vmatprep.subr.mxu0 0.0
  %2957 = vmatpush1.msra.mxu0 %v2453
  %2958 = vmatprep.subr.mxu0 0.0
  %2959 = vmatpush1.msra.mxu0 %v2454
  %2960 = vmatprep.subr.mxu0 0.0
  %2961 = vmatpush1.msra.mxu0 %v2455
  %2962 = vmatprep.subr.mxu0 0.0
  %2963 = vmatpush1.msra.mxu0 %v2456
  %2964 = vmatprep.subr.mxu0 0.0
  %2965 = vmatpush1.msra.mxu0 %v2457
  %2966 = vmatprep.subr.mxu0 0.0
  %2967 = vmatpush1.msra.mxu0 %v2458
  %2968 = vmatprep.subr.mxu0 0.0
  %2969 = vmatpush1.msra.mxu0 %v2459
  %2970 = vmatprep.subr.mxu0 0.0
  %2971 = vmatpush1.msra.mxu0 %v2460
  %2972 = vmatprep.subr.mxu0 0.0
  %2973 = vmatpush1.msra.mxu0 %v2461
  %2974 = vmatprep.subr.mxu0 0.0
  %2975 = vmatpush1.msra.mxu0 %v2462
  %2976 = vmatprep.subr.mxu0 0.0
  %2977 = vmatpush1.msra.mxu0 0.0
  %2978 = vmatprep.subr.mxu0 0.0
  %2979 = vmatpush1.msra.mxu0 0.0
  %2980 = vmatprep.subr.mxu0 0.0
  %2981 = vmatpush1.msra.mxu0 0.0
  %2982 = vmatprep.subr.mxu0 0.0
  %2983 = vmatpush1.msra.mxu0 0.0
  %2984 = vmatprep.subr.mxu0 0.0
  %2985 = vmatpush1.msra.mxu0 0.0
  %2986 = vmatprep.subr.mxu0 0.0
  %2987 = vmatpush1.msra.mxu0 0.0
  %2988 = vmatprep.subr.mxu0 0.0
  %2989 = vmatpush1.msra.mxu0 0.0
  %2990 = vmatprep.subr.mxu0 0.0
  %2991 = vmatpush1.msra.mxu0 0.0
  %2992 = vmatprep.subr.mxu0 0.0
  %2993 = vmatpush1.msra.mxu0 0.0
  %2994 = vmatprep.subr.mxu0 0.0
  %2995 = vmatpush1.msra.mxu0 0.0
  %2996 = vmatprep.subr.mxu0 0.0
  %2997 = vmatpush1.msra.mxu0 0.0
  %2998 = vmatprep.subr.mxu0 0.0
  %2999 = vmatpush1.msra.mxu0 0.0
  %3000 = vmatprep.subr.mxu0 0.0
  %3001 = vmatpush1.msra.mxu0 0.0
  %3002 = vmatprep.mubr.f32.mxu0 %v2471
  %3003 = vmatmul.mubr.f32.gmra.mrb[0].mxu0 %v2236
  %v3004 = vpop.f32.mrb[0].mxu0
  %v3005 = vadd.f32 %v2860, %v3004
  %v3006 = vpop.f32.mrb[0].mxu0
  %3007 = vmatprep.mubr.f32.mxu0 %v2473
  %3008 = vmatmul.mubr.f32.gmra.mrb[0].mxu0 %v2237
  %v3009 = vpop.f32.mrb[0].mxu0
  %v3010 = vadd.f32 %v2865, %v3009
  %v3011 = vpop.f32.mrb[0].mxu0
  %3012 = vmatprep.mubr.f32.mxu0 %v2475
  %3013 = vmatmul.mubr.f32.gmra.mrb[0].mxu0 %v2238
  %v3014 = vpop.f32.mrb[0].mxu0
  %v3015 = vadd.f32 %v2870, %v3014
  %v3016 = vpop.f32.mrb[0].mxu0
  %3017 = vmatprep.mubr.f32.mxu0 %v2477
  %3018 = vmatmul.mubr.f32.gmra.mrb[0].mxu0 %v2239
  %v3019 = vpop.f32.mrb[0].mxu0
  %v3020 = vadd.f32 %v2875, %v3019
  %v3021 = vpop.f32.mrb[0].mxu0
  %3022 = vmatprep.mubr.f32.mxu0 %v2479
  %3023 = vmatmul.mubr.f32.gmra.mrb[0].mxu0 %v2240
  %v3024 = vpop.f32.mrb[0].mxu0
  %v3025 = vadd.f32 %v2880, %v3024
  %v3026 = vpop.f32.mrb[0].mxu0
  %3027 = vmatprep.mubr.f32.mxu0 %v2481
  %3028 = vmatmul.mubr.f32.gmra.mrb[0].mxu0 %v2241
  %v3029 = vpop.f32.mrb[0].mxu0
  %v3030 = vadd.f32 %v2885, %v3029
  %v3031 = vpop.f32.mrb[0].mxu0
  %3032 = vmatprep.mubr.f32.mxu0 %v2483
  %3033 = vmatmul.mubr.f32.gmra.mrb[0].mxu0 %v2242
  %v3034 = vpop.f32.mrb[0].mxu0
  %v3035 = vadd.f32 %v2890, %v3034
  %v3036 = vpop.f32.mrb[0].mxu0
  %3037 = vmatprep.mubr.f32.mxu0 %v2485
  %3038 = vmatmul.mubr.f32.gmra.mrb[0].mxu0 %v2243
  %v3039 = vpop.f32.mrb[0].mxu0
  %v3040 = vadd.f32 %v2895, %v3039
  %v3041 = vpop.f32.mrb[0].mxu0
  %3042 = vmatprep.mubr.f32.mxu0 %v2487
  %3043 = vmatmul.mubr.f32.gmra.mrb[0].mxu0 %v2244
  %v3044 = vpop.f32.mrb[0].mxu0
  %v3045 = vadd.f32 %v2900, %v3044
  %v3046 = vpop.f32.mrb[0].mxu0
  %3047 = vmatprep.mubr.f32.mxu0 %v2489
  %3048 = vmatmul.mubr.f32.gmra.mrb[0].mxu0 %v2245
  %v3049 = vpop.f32.mrb[0].mxu0
  %v3050 = vadd.f32 %v2905, %v3049
  %v3051 = vpop.f32.mrb[0].mxu0
  %3052 = vmatprep.mubr.f32.mxu0 %v2491
  %3053 = vmatmul.mubr.f32.gmra.mrb[0].mxu0 %v2246
  %v3054 = vpop.f32.mrb[0].mxu0
  %v3055 = vadd.f32 %v2910, %v3054
  %v3056 = vpop.f32.mrb[0].mxu0
  %3057 = vmatprep.mubr.f32.mxu0 %v2493
  %3058 = vmatmul.mubr.f32.gmra.mrb[0].mxu0 %v2247
  %v3059 = vpop.f32.mrb[0].mxu0
  %v3060 = vadd.f32 %v2915, %v3059
  %v3061 = vpop.f32.mrb[0].mxu0
  %3062 = vmatprep.mubr.f32.mxu0 %v2495
  %3063 = vmatmul.mubr.f32.gmra.mrb[0].mxu0 %v2248
  %v3064 = vpop.f32.mrb[0].mxu0
  %v3065 = vadd.f32 %v2920, %v3064
  %v3066 = vpop.f32.mrb[0].mxu0
  %3067 = vmatprep.mubr.f32.mxu0 %v2497
  %3068 = vmatmul.mubr.f32.gmra.mrb[0].mxu0 %v2249
  %v3069 = vpop.f32.mrb[0].mxu0
  %v3070 = vadd.f32 %v2925, %v3069
  %v3071 = vpop.f32.mrb[0].mxu0
  %3072 = vmatprep.mubr.f32.mxu0 %v2499
  %3073 = vmatmul.mubr.f32.gmra.mrb[0].mxu0 %v2250
  %v3074 = vpop.f32.mrb[0].mxu0
  %v3075 = vadd.f32 %v2930, %v3074
  %v3076 = vpop.f32.mrb[0].mxu0
  %3077 = vmatprep.mubr.f32.mxu0 %v2501
  %3078 = vmatmul.mubr.f32.gmra.mrb[0].mxu0 %v2251
  %v3079 = vpop.f32.mrb[0].mxu0
  %v3080 = vadd.f32 %v2935, %v3079
  %v3081 = vpop.f32.mrb[0].mxu0
  %3082 = vdwg.mxu0
  %3099 = vrot.lane.b32.xlu0 %v3005, 120
  %v3100 = vpop.permute.xlu0 %3099
  %3101 = vrot.lane.b32.xlu0 %v3010, 120
  %v3102 = vpop.permute.xlu0 %3101
  %3103 = vrot.lane.b32.xlu0 %v3015, 120
  %v3104 = vpop.permute.xlu0 %3103
  %3105 = vrot.lane.b32.xlu0 %v3020, 120
  %v3106 = vpop.permute.xlu0 %3105
  %3107 = vrot.lane.b32.xlu0 %v3025, 120
  %v3108 = vpop.permute.xlu0 %3107
  %3109 = vrot.lane.b32.xlu0 %v3030, 120
  %v3110 = vpop.permute.xlu0 %3109
  %3111 = vrot.lane.b32.xlu0 %v3035, 120
  %v3112 = vpop.permute.xlu0 %3111
  %3113 = vrot.lane.b32.xlu0 %v3040, 120
  %v3114 = vpop.permute.xlu0 %3113
  %3115 = vrot.lane.b32.xlu0 %v3045, 120
  %v3116 = vpop.permute.xlu0 %3115
  %3117 = vrot.lane.b32.xlu0 %v3050, 120
  %v3118 = vpop.permute.xlu0 %3117
  %3119 = vrot.lane.b32.xlu0 %v3055, 120
  %v3120 = vpop.permute.xlu0 %3119
  %3121 = vrot.lane.b32.xlu0 %v3060, 120
  %v3122 = vpop.permute.xlu0 %3121
  %3123 = vrot.lane.b32.xlu0 %v3065, 120
  %v3124 = vpop.permute.xlu0 %3123
  %3125 = vrot.lane.b32.xlu0 %v3070, 120
  %v3126 = vpop.permute.xlu0 %3125
  %3127 = vrot.lane.b32.xlu0 %v3075, 120
  %v3128 = vpop.permute.xlu0 %3127
  %3129 = vrot.lane.b32.xlu0 %v3080, 120
  %v3130 = vpop.permute.xlu0 %3129
  %v3147 = vmax.f32 %v3005, %v3100
  %v3148 = vmax.f32 %v3010, %v3102
  %v3149 = vmax.f32 %v3015, %v3104
  %v3150 = vmax.f32 %v3020, %v3106
  %v3151 = vmax.f32 %v3025, %v3108
  %v3152 = vmax.f32 %v3030, %v3110
  %v3153 = vmax.f32 %v3035, %v3112
  %v3154 = vmax.f32 %v3040, %v3114
  %v3155 = vmax.f32 %v3045, %v3116
  %v3156 = vmax.f32 %v3050, %v3118
  %v3157 = vmax.f32 %v3055, %v3120
  %v3158 = vmax.f32 %v3060, %v3122
  %v3159 = vmax.f32 %v3065, %v3124
  %v3160 = vmax.f32 %v3070, %v3126
  %v3161 = vmax.f32 %v3075, %v3128
  %v3162 = vmax.f32 %v3080, %v3130
  %v3179 = vrot.slane %v3147, 2
  %v3180 = vrot.slane %v3148, 2
  %v3181 = vsel %vm153, %v3179, %v3180
  %v3182 = vrot.slane %v3149, 2
  %v3183 = vsel %vm153, %v3180, %v3182
  %v3184 = vrot.slane %v3150, 2
  %v3185 = vsel %vm153, %v3182, %v3184
  %v3186 = vrot.slane %v3151, 2
  %v3187 = vsel %vm153, %v3184, %v3186
  %v3188 = vrot.slane %v3152, 2
  %v3189 = vsel %vm153, %v3186, %v3188
  %v3190 = vrot.slane %v3153, 2
  %v3191 = vsel %vm153, %v3188, %v3190
  %v3192 = vrot.slane %v3154, 2
  %v3193 = vsel %vm153, %v3190, %v3192
  %v3194 = vrot.slane %v3155, 2
  %v3195 = vsel %vm153, %v3192, %v3194
  %v3196 = vrot.slane %v3156, 2
  %v3197 = vsel %vm153, %v3194, %v3196
  %v3198 = vrot.slane %v3157, 2
  %v3199 = vsel %vm153, %v3196, %v3198
  %v3200 = vrot.slane %v3158, 2
  %v3201 = vsel %vm153, %v3198, %v3200
  %v3202 = vrot.slane %v3159, 2
  %v3203 = vsel %vm153, %v3200, %v3202
  %v3204 = vrot.slane %v3160, 2
  %v3205 = vsel %vm153, %v3202, %v3204
  %v3206 = vrot.slane %v3161, 2
  %v3207 = vsel %vm153, %v3204, %v3206
  %v3208 = vrot.slane %v3162, 2
  %v3209 = vsel %vm153, %v3206, %v3208
  %v3226 = vsel %vm153, %v3208, %v3162
  %v3227 = vmax.f32 %v3147, %v3181
  %v3228 = vmax.f32 %v3148, %v3183
  %v3229 = vmax.f32 %v3149, %v3185
  %v3230 = vmax.f32 %v3150, %v3187
  %v3231 = vmax.f32 %v3151, %v3189
  %v3232 = vmax.f32 %v3152, %v3191
  %v3233 = vmax.f32 %v3153, %v3193
  %v3234 = vmax.f32 %v3154, %v3195
  %v3235 = vmax.f32 %v3155, %v3197
  %v3236 = vmax.f32 %v3156, %v3199
  %v3237 = vmax.f32 %v3157, %v3201
  %v3238 = vmax.f32 %v3158, %v3203
  %v3239 = vmax.f32 %v3159, %v3205
  %v3240 = vmax.f32 %v3160, %v3207
  %v3241 = vmax.f32 %v3161, %v3209
  %v3242 = vmax.f32 %v3162, %v3226
  %3243 = vst.msk [vmem:[#allocation2] sm:$0xff] %vm637, %v3227
  %3244 = vst.msk [vmem:[#allocation2 + $0x8] sm:$0xff] %vm637, %v3228
  %3245 = vst.msk [vmem:[#allocation2 + $0x10] sm:$0xff] %vm637, %v3229
  %3246 = vst.msk [vmem:[#allocation2 + $0x18] sm:$0xff] %vm637, %v3230
  %3247 = vst.msk [vmem:[#allocation2 + $0x20] sm:$0xff] %vm637, %v3231
  %3248 = vst.msk [vmem:[#allocation2 + $0x28] sm:$0xff] %vm637, %v3232
  %3249 = vst.msk [vmem:[#allocation2 + $0x30] sm:$0xff] %vm637, %v3233
  %3250 = vst.msk [vmem:[#allocation2 + $0x38] sm:$0xff] %vm637, %v3234
  %3251 = vst.msk [vmem:[#allocation2 + $0x40] sm:$0xff] %vm637, %v3235
  %3252 = vst.msk [vmem:[#allocation2 + $0x48] sm:$0xff] %vm637, %v3236
  %3253 = vst.msk [vmem:[#allocation2 + $0x50] sm:$0xff] %vm637, %v3237
  %3254 = vst.msk [vmem:[#allocation2 + $0x58] sm:$0xff] %vm637, %v3238
  %3255 = vst.msk [vmem:[#allocation2 + $0x60] sm:$0xff] %vm637, %v3239
  %3256 = vst.msk [vmem:[#allocation2 + $0x68] sm:$0xff] %vm637, %v3240
  %3257 = vst.msk [vmem:[#allocation2 + $0x70] sm:$0xff] %vm637, %v3241
  %3258 = vst.msk [vmem:[#allocation2 + $0x78] sm:$0xff] %vm637, %v3242
  %v3259 = vld [vmem:[#allocation2] ss:$16 sm:$0x3]
  %v3260 = vld [vmem:[#allocation2] ss:$16 sm:$0xc]
  %v3261 = vor.u32 %v3259, %v3260
  %v3262 = vld [vmem:[#allocation2] ss:$16 sm:$0x30]
  %v3263 = vor.u32 %v3261, %v3262
  %v3264 = vld [vmem:[#allocation2] ss:$16 sm:$0xc0]
  %v3265 = vor.u32 %v3263, %v3264
  %s3266 = scalar_lea.vmem [#allocation2], 4
  %v3267 = vld [vmem:[%s3266] ss:$16 sm:$0x3]
  %v3268 = vld [vmem:[%s3266] ss:$16 sm:$0xc]
  %v3269 = vor.u32 %v3267, %v3268
  %v3270 = vld [vmem:[%s3266] ss:$16 sm:$0x30]
  %v3271 = vor.u32 %v3269, %v3270
  %v3272 = vld [vmem:[%s3266] ss:$16 sm:$0xc0]
  %v3273 = vor.u32 %v3271, %v3272
  %s3274 = scalar_lea.vmem [#allocation2], 8
  %v3275 = vld [vmem:[%s3274] ss:$16 sm:$0x3]
  %v3276 = vld [vmem:[%s3274] ss:$16 sm:$0xc]
  %v3277 = vor.u32 %v3275, %v3276
  %v3278 = vld [vmem:[%s3274] ss:$16 sm:$0x30]
  %v3279 = vor.u32 %v3277, %v3278
  %v3280 = vld [vmem:[%s3274] ss:$16 sm:$0xc0]
  %v3281 = vor.u32 %v3279, %v3280
  %s3282 = scalar_lea.vmem [#allocation2], 12
  %v3283 = vld [vmem:[%s3282] ss:$16 sm:$0x3]
  %v3284 = vld [vmem:[%s3282] ss:$16 sm:$0xc]
  %v3285 = vor.u32 %v3283, %v3284
  %v3286 = vld [vmem:[%s3282] ss:$16 sm:$0x30]
  %v3287 = vor.u32 %v3285, %v3286
  %v3288 = vld [vmem:[%s3282] ss:$16 sm:$0xc0]
  %v3289 = vor.u32 %v3287, %v3288
  %3291 = vrot.lane.b32.xlu0 %v3273, 56
  %v3292 = vpop.permute.xlu0 %3291
  %3295 = vrot.lane.b32.xlu0 %v3281, 112
  %v3296 = vpop.permute.xlu0 %3295
  %3299 = vrot.lane.b32.xlu0 %v3289, 40
  %v3300 = vpop.permute.xlu0 %3299
  %v3302 = vsel %vm637, %v3265, %v3292
  %v3303 = vsel %vm687, %v3302, %v3296
  %v3304 = vsel %vm2122, %v3296, %v3300
  %v3305 = vld [vmem:[%s5] sm:$0xff]
  %v3306 = vld [vmem:[%s5 + $0x8] sm:$0xff]
  %v3307 = vld [vmem:[%s5 + $0x10] sm:$0xff]
  %v3308 = vld [vmem:[%s5 + $0x18] sm:$0xff]
  %v3309 = vld [vmem:[%s5 + $0x20] sm:$0xff]
  %v3310 = vld [vmem:[%s5 + $0x28] sm:$0xff]
  %v3311 = vld [vmem:[%s5 + $0x30] sm:$0xff]
  %v3312 = vld [vmem:[%s5 + $0x38] sm:$0xff]
  %v3313 = vld [vmem:[%s5 + $0x40] sm:$0xff]
  %v3314 = vld [vmem:[%s5 + $0x48] sm:$0xff]
  %v3315 = vld [vmem:[%s5 + $0x50] sm:$0xff]
  %v3316 = vld [vmem:[%s5 + $0x58] sm:$0xff]
  %v3317 = vld [vmem:[%s5 + $0x60] sm:$0xff]
  %v3318 = vld [vmem:[%s5 + $0x68] sm:$0xff]
  %v3319 = vld [vmem:[%s5 + $0x70] sm:$0xff]
  %v3320 = vld [vmem:[%s5 + $0x78] sm:$0xff]
  %v3321 = vld [vmem:[%s5 + $0x80] sm:$0xff]
  %v3322 = vld [vmem:[%s5 + $0x88] sm:$0xff]
  %v3323 = vld [vmem:[%s5 + $0x90] sm:$0xff]
  %v3324 = vld [vmem:[%s5 + $0x98] sm:$0xff]
  %v3325 = vld [vmem:[%s5 + $0xa0] sm:$0xff]
  %v3326 = vld [vmem:[%s5 + $0xa8] sm:$0xff]
  %v3327 = vld [vmem:[%s5 + $0xb0] sm:$0xff]
  %v3328 = vld [vmem:[%s5 + $0xb8] sm:$0xff]
  %v3329 = vld [vmem:[%s5 + $0xc0] sm:$0xff]
  %v3330 = vld [vmem:[%s5 + $0xc8] sm:$0xff]
  %v3331 = vld [vmem:[%s5 + $0xd0] sm:$0xff]
  %v3332 = vld [vmem:[%s5 + $0xd8] sm:$0xff]
  %v3333 = vld [vmem:[%s6] sm:$0x1]
  %v3335 = vlaneseq
  %v3336 = vshrl.u32 %v3335, 7
  %v3337 = vsub.s32 0, %v3336
  %v3338 = vrot.slane %v3333, %v3337
  %v3341 = vsel %vm2235, %v3304, 0
  %3343 = vmatprep.subr.mxu0 0.0
  %3344 = vmatpush1.msra.mxu0 %v3305
  %3345 = vmatprep.subr.mxu0 0.0
  %3346 = vmatpush1.msra.mxu0 %v3306
  %3347 = vmatprep.subr.mxu0 0.0
  %3348 = vmatpush1.msra.mxu0 %v3307
  %3349 = vmatprep.subr.mxu0 0.0
  %3350 = vmatpush1.msra.mxu0 %v3308
  %3351 = vmatprep.subr.mxu0 0.0
  %3352 = vmatpush1.msra.mxu0 %v3309
  %3353 = vmatprep.subr.mxu0 0.0
  %3354 = vmatpush1.msra.mxu0 %v3310
  %3355 = vmatprep.subr.mxu0 0.0
  %3356 = vmatpush1.msra.mxu0 %v3311
  %3357 = vmatprep.subr.mxu0 0.0
  %3358 = vmatpush1.msra.mxu0 %v3312
  %3359 = vmatprep.subr.mxu0 0.0
  %3360 = vmatpush1.msra.mxu0 %v3313
  %3361 = vmatprep.subr.mxu0 0.0
  %3362 = vmatpush1.msra.mxu0 %v3314
  %3363 = vmatprep.subr.mxu0 0.0
  %3364 = vmatpush1.msra.mxu0 %v3315
  %3365 = vmatprep.subr.mxu0 0.0
  %3366 = vmatpush1.msra.mxu0 %v3316
  %3367 = vmatprep.subr.mxu0 0.0
  %3368 = vmatpush1.msra.mxu0 %v3317
  %3369 = vmatprep.subr.mxu0 0.0
  %3370 = vmatpush1.msra.mxu0 %v3318
  %3371 = vmatprep.subr.mxu0 0.0
  %3372 = vmatpush1.msra.mxu0 %v3319
  %3373 = vmatprep.subr.mxu0 0.0
  %3374 = vmatpush1.msra.mxu0 %v3320
  %3375 = vmatprep.subr.mxu0 0.0
  %3376 = vmatpush1.msra.mxu0 %v3321
  %3377 = vmatprep.subr.mxu0 0.0
  %3378 = vmatpush1.msra.mxu0 %v3322
  %3379 = vmatprep.subr.mxu0 0.0
  %3380 = vmatpush1.msra.mxu0 %v3323
  %3381 = vmatprep.subr.mxu0 0.0
  %3382 = vmatpush1.msra.mxu0 %v3324
  %3383 = vmatprep.subr.mxu0 0.0
  %3384 = vmatpush1.msra.mxu0 %v3325
  %3385 = vmatprep.subr.mxu0 0.0
  %3386 = vmatpush1.msra.mxu0 %v3326
  %3387 = vmatprep.subr.mxu0 0.0
  %3388 = vmatpush1.msra.mxu0 %v3327
  %3389 = vmatprep.subr.mxu0 0.0
  %3390 = vmatpush1.msra.mxu0 %v3328
  %3391 = vmatprep.subr.mxu0 0.0
  %3392 = vmatpush1.msra.mxu0 %v3329
  %3393 = vmatprep.subr.mxu0 0.0
  %3394 = vmatpush1.msra.mxu0 %v3330
  %3395 = vmatprep.subr.mxu0 0.0
  %3396 = vmatpush1.msra.mxu0 %v3331
  %3397 = vmatprep.subr.mxu0 0.0
  %3398 = vmatpush1.msra.mxu0 %v3332
  %3399 = vmatprep.subr.mxu0 0.0
  %3400 = vmatpush1.msra.mxu0 0.0
  %3401 = vmatprep.subr.mxu0 0.0
  %3402 = vmatpush1.msra.mxu0 0.0
  %3403 = vmatprep.subr.mxu0 0.0
  %3404 = vmatpush1.msra.mxu0 0.0
  %3405 = vmatprep.subr.mxu0 0.0
  %3406 = vmatpush1.msra.mxu0 0.0
  %3407 = vmatprep.mubr.f32.mxu0 %v3341
  %3408 = vmatmul.mubr.f32.gmra.mrb[0].mxu0 %v3303
  %v3409 = vpop.f32.mrb[0].mxu0
  %v3410 = vadd.f32 %v3338, %v3409
  %v3411 = vpop.f32.mrb[0].mxu0
  %3412 = vdwg.mxu0
  %v3413 = vtanh.pop %v3410
  %v3414 = vld [vmem:[%s7] sm:$0xff]
  %v3415 = vld [vmem:[%s7 + $0x8] sm:$0xff]
  %v3416 = vld [vmem:[%s7 + $0x10] sm:$0xff]
  %v3417 = vld [vmem:[%s7 + $0x18] sm:$0xff]
  %v3418 = vld [vmem:[%s7 + $0x20] sm:$0xff]
  %v3419 = vld [vmem:[%s7 + $0x28] sm:$0xff]
  %v3420 = vld [vmem:[%s7 + $0x30] sm:$0xff]
  %v3421 = vld [vmem:[%s7 + $0x38] sm:$0xff]
  %v3422 = vld [vmem:[%s7 + $0x40] sm:$0xff]
  %v3423 = vld [vmem:[%s7 + $0x48] sm:$0xff]
  %v3424 = vld [vmem:[%s7 + $0x50] sm:$0xff]
  %v3425 = vld [vmem:[%s7 + $0x58] sm:$0xff]
  %v3426 = vld [vmem:[%s7 + $0x60] sm:$0xff]
  %v3427 = vld [vmem:[%s7 + $0x68] sm:$0xff]
  %v3428 = vld [vmem:[%s7 + $0x70] sm:$0xff]
  %v3429 = vld [vmem:[%s7 + $0x78] sm:$0xff]
  %v3430 = vld [vmem:[%s8] sm:$0x1]
  %v3432 = vlaneseq
  %v3433 = vshrl.u32 %v3432, 7
  %v3434 = vsub.s32 0, %v3433
  %v3435 = vrot.slane %v3430, %v3434
  %3437 = vmatprep.subr.mxu0 0.0
  %3438 = vmatpush1.msra.mxu0 %v3414
  %3439 = vmatprep.subr.mxu0 0.0
  %3440 = vmatpush1.msra.mxu0 %v3415
  %3441 = vmatprep.subr.mxu0 0.0
  %3442 = vmatpush1.msra.mxu0 %v3416
  %3443 = vmatprep.subr.mxu0 0.0
  %3444 = vmatpush1.msra.mxu0 %v3417
  %3445 = vmatprep.subr.mxu0 0.0
  %3446 = vmatpush1.msra.mxu0 %v3418
  %3447 = vmatprep.subr.mxu0 0.0
  %3448 = vmatpush1.msra.mxu0 %v3419
  %3449 = vmatprep.subr.mxu0 0.0
  %3450 = vmatpush1.msra.mxu0 %v3420
  %3451 = vmatprep.subr.mxu0 0.0
  %3452 = vmatpush1.msra.mxu0 %v3421
  %3453 = vmatprep.subr.mxu0 0.0
  %3454 = vmatpush1.msra.mxu0 %v3422
  %3455 = vmatprep.subr.mxu0 0.0
  %3456 = vmatpush1.msra.mxu0 %v3423
  %3457 = vmatprep.subr.mxu0 0.0
  %3458 = vmatpush1.msra.mxu0 %v3424
  %3459 = vmatprep.subr.mxu0 0.0
  %3460 = vmatpush1.msra.mxu0 %v3425
  %3461 = vmatprep.subr.mxu0 0.0
  %3462 = vmatpush1.msra.mxu0 %v3426
  %3463 = vmatprep.subr.mxu0 0.0
  %3464 = vmatpush1.msra.mxu0 %v3427
  %3465 = vmatprep.subr.mxu0 0.0
  %3466 = vmatpush1.msra.mxu0 %v3428
  %3467 = vmatprep.subr.mxu0 0.0
  %3468 = vmatpush1.msra.mxu0 %v3429
  %3469 = vmatprep.subr.mxu0 0.0
  %3470 = vmatpush1.msra.mxu0 0.0
  %3471 = vmatprep.subr.mxu0 0.0
  %3472 = vmatpush1.msra.mxu0 0.0
  %3473 = vmatprep.subr.mxu0 0.0
  %3474 = vmatpush1.msra.mxu0 0.0
  %3475 = vmatprep.subr.mxu0 0.0
  %3476 = vmatpush1.msra.mxu0 0.0
  %3477 = vmatprep.subr.mxu0 0.0
  %3478 = vmatpush1.msra.mxu0 0.0
  %3479 = vmatprep.subr.mxu0 0.0
  %3480 = vmatpush1.msra.mxu0 0.0
  %3481 = vmatprep.subr.mxu0 0.0
  %3482 = vmatpush1.msra.mxu0 0.0
  %3483 = vmatprep.subr.mxu0 0.0
  %3484 = vmatpush1.msra.mxu0 0.0
  %3485 = vmatprep.subr.mxu0 0.0
  %3486 = vmatpush1.msra.mxu0 0.0
  %3487 = vmatprep.subr.mxu0 0.0
  %3488 = vmatpush1.msra.mxu0 0.0
  %3489 = vmatprep.subr.mxu0 0.0
  %3490 = vmatpush1.msra.mxu0 0.0
  %3491 = vmatprep.subr.mxu0 0.0
  %3492 = vmatpush1.msra.mxu0 0.0
  %3493 = vmatprep.subr.mxu0 0.0
  %3494 = vmatpush1.msra.mxu0 0.0
  %3495 = vmatprep.subr.mxu0 0.0
  %3496 = vmatpush1.msra.mxu0 0.0
  %3497 = vmatprep.subr.mxu0 0.0
  %3498 = vmatpush1.msra.mxu0 0.0
  %3499 = vmatprep.subr.mxu0 0.0
  %3500 = vmatpush1.msra.mxu0 0.0
  %3501 = vmatprep.mubr.f32.mxu0 0.0
  %3502 = vmatmul.mubr.f32.gmra.mrb[0].mxu0 %v3413
  %v3503 = vpop.f32.mrb[0].mxu0
  %v3504 = vadd.f32 %v3435, %v3503
  %v3505 = vpop.f32.mrb[0].mxu0
  %3506 = vdwg.mxu0
  %3507 = vst [vmem:[%s9] sm:$0xff] %v3504
  // Predicated region
  $region38: #{mlp_forward.1} parent=0 // pred_check
    _
  $region39: #{mlp_forward.1} parent=0 // pred_check_branch
    %3509 = sbr.rel (0) target = $region41
  $region40: #{mlp_forward.1} parent=0 // pred_region
    _
  $region41: #{mlp_forward.1} parent=0 // pred_fallthru
    _
  // Predicated region
  $region42: #{mlp_forward.1} parent=0 // pred_check
    _
  $region43: #{mlp_forward.1} parent=0 // pred_check_branch
    %3511 = sbr.rel (0) target = $region45
  $region44: #{mlp_forward.1} parent=0 // pred_region
    _
  $region45: #{mlp_forward.1} parent=0 // pred_fallthru
    _

</llo_original>
